<compile_context>
chip_gen: v7x
topology: tpu7x:2x2x1
jax: 0.10.0
libtpu: 0.0.40
codegen_flags: <defaults>
</compile_context>

<pallas_src>
import jax
import jax.numpy as jnp
from jax import lax
from jax.experimental import pallas as pl
from jax.experimental.pallas import tpu as pltpu

NEURONS = 512
X_SIZE = 3
S_SIZE = 4
IN_PAD = 8             # concat(x, s) padded 7 -> 8 columns (one zero column)
OUT_SIZE = 6
OUT_PAD = 128          # lane-dense padded output width
NEG_SLOPE = 0.01       # torch.nn.LeakyReLU default
TM_DEFAULT = 1024      # batch tile (multiple of 128); sweepable {512, 1024, 2048}


def _leaky_relu(h):
    # slope < 1  =>  max(h, slope*h) == LeakyReLU(h); mul+max instead of cmp+mul+select
    return jnp.maximum(h, NEG_SLOPE * h)


def _round_up(n, m):
    return ((n + m - 1) // m) * m


def _choose_tiling(B, tm_max):
    """Pick (padded_batch, tile): tile divides padded_batch, pad waste <= 127 rows,
    and >= 2 grid steps for larger batches so both v7x TensorCores get work."""
    if B <= 128:
        pb = _round_up(B, 8)
        return pb, pb
    pb = _round_up(B, 128)
    cap = min(tm_max, max(128, pb // 2))   # guarantee >= 2 grid steps (megacore)
    tm = 128
    t = 256
    while t <= cap:
        if pb % t == 0:
            tm = t
        t += 128
    return pb, tm


def simple_mlp_kernel(xs_ref,
                      w1_ref, b1_ref,
                      w2_ref, b2_ref,
                      w3_ref, b3_ref,
                      w4_ref, b4_ref,
                      w5_ref, b5_ref,
                      wl_ref, bl_ref,
                      out_ref,
                      h_ref):
    # Layer 1: single K=8 dot on the padded concat (bf16 in, f32 acc).
    h = jnp.dot(xs_ref[...].astype(jnp.bfloat16), w1_ref[...],
                preferred_element_type=jnp.float32)
    h_ref[...] = _leaky_relu(h + b1_ref[...]).astype(jnp.bfloat16)

    # Layers 2..5: Linear(512,512) + LeakyReLU; activation stays bf16 in VMEM scratch.
    for w_ref, b_ref in ((w2_ref, b2_ref), (w3_ref, b3_ref),
                         (w4_ref, b4_ref), (w5_ref, b5_ref)):
        h = jnp.dot(h_ref[...], w_ref[...], preferred_element_type=jnp.float32)
        h_ref[...] = _leaky_relu(h + b_ref[...]).astype(jnp.bfloat16)

    # Head: Linear(512 -> 6) padded to 128 output lanes (cols 6..127 are zero).
    L = jnp.dot(h_ref[...], wl_ref[...],
                preferred_element_type=jnp.float32) + bl_ref[...]

    # L[:, :3] = exp(L[:, :3]); other columns pass through.
    col = lax.broadcasted_iota(jnp.int32, L.shape, 1)
    out_ref[...] = jnp.where(col < 3, jnp.exp(L), L).astype(out_ref.dtype)


def simple_mlp_forward(x, s, params, *, tm=TM_DEFAULT):
    """x: [B, 3] f32, s: [B, 4] f32 -> [B, 6] f32 (first 3 cols exponentiated)."""
    B = x.shape[0]
    pb, tm = _choose_tiling(B, int(tm))

    # Fused concat + pad to 8 columns + pad batch to pb (zero rows are benign).
    xs = jnp.concatenate([x, s], axis=-1)                                # [B, 7]
    xs = jnp.pad(xs, ((0, pb - B), (0, IN_PAD - X_SIZE - S_SIZE)))       # [pb, 8]

    # Parameter re-layout: bf16 weights, W1 padded to 8 rows, padded head.
    (w1, b1), (w2, b2), (w3, b3), (w4, b4), (w5, b5), (wl, bl) = params
    w1p = jnp.pad(w1, ((0, IN_PAD - X_SIZE - S_SIZE), (0, 0))).astype(jnp.bfloat16)
    w2b, w3b, w4b, w5b = (w.astype(jnp.bfloat16) for w in (w2, w3, w4, w5))
    wl_p = jnp.pad(wl, ((0, 0), (0, OUT_PAD - OUT_SIZE))).astype(jnp.bfloat16)
    bl_p = jnp.pad(bl, ((0, 0), (0, OUT_PAD - OUT_SIZE)))                # f32

    const = lambda i: (0, 0)                 # weights/biases: resident, DMA'd once
    row = lambda i: (i, 0)                   # activations: tiled over batch
    in_specs = [
        pl.BlockSpec((tm, IN_PAD), row),             # xs
        pl.BlockSpec((IN_PAD, NEURONS), const),      # w1 (padded)
        pl.BlockSpec((1, NEURONS), const),           # b1
        pl.BlockSpec((NEURONS, NEURONS), const),     # w2
        pl.BlockSpec((1, NEURONS), const),           # b2
        pl.BlockSpec((NEURONS, NEURONS), const),     # w3
        pl.BlockSpec((1, NEURONS), const),           # b3
        pl.BlockSpec((NEURONS, NEURONS), const),     # w4
        pl.BlockSpec((1, NEURONS), const),           # b4
        pl.BlockSpec((NEURONS, NEURONS), const),     # w5
        pl.BlockSpec((1, NEURONS), const),           # b5
        pl.BlockSpec((NEURONS, OUT_PAD), const),     # wl (padded)
        pl.BlockSpec((1, OUT_PAD), const),           # bl (padded)
    ]

    out = pl.pallas_call(
        simple_mlp_kernel,
        out_shape=jax.ShapeDtypeStruct((pb, OUT_PAD), jnp.float32),
        grid=(pb // tm,),
        in_specs=in_specs,
        out_specs=pl.BlockSpec((tm, OUT_PAD), row),
        scratch_shapes=[pltpu.VMEM((tm, NEURONS), jnp.bfloat16)],
        compiler_params=pltpu.CompilerParams(
            dimension_semantics=("parallel",),
            vmem_limit_bytes=32 << 20),
    )(xs, w1p, b1, w2b, b2, w3b, b3, w4b, b4, w5b, b5, wl_p, bl_p)

    return out[:B, :OUT_SIZE]


def init_params(key):
    """Deterministic synthetic parameters matching the nn.Module shapes.

    Stored as (W[in, out], b[1, out]) so the kernel computes x @ W + b,
    equivalent to torch's x @ weight.T + bias.
    """
    dims = [(X_SIZE + S_SIZE, NEURONS),
            (NEURONS, NEURONS),
            (NEURONS, NEURONS),
            (NEURONS, NEURONS),
            (NEURONS, NEURONS),
            (NEURONS, OUT_SIZE)]
    params = []
    for (fan_in, fan_out) in dims:
        key, kw, kb = jax.random.split(key, 3)
        bound = 1.0 / jnp.sqrt(fan_in)
        w = jax.random.uniform(kw, (fan_in, fan_out), jnp.float32, -bound, bound)
        b = jax.random.uniform(kb, (1, fan_out), jnp.float32, -bound, bound)
        params.append((w, b))
    return params


def reference_forward(x, s, params):
    """Pure-JAX reference with matching numerics (bf16 dot inputs, f32 acc)."""
    h = jnp.concatenate([x, s], axis=-1)
    for (w, b) in params[:-1]:
        h = jnp.dot(h.astype(jnp.bfloat16), w.astype(jnp.bfloat16),
                    preferred_element_type=jnp.float32) + b
        h = jnp.where(h > 0, h, NEG_SLOPE * h)
    wl, bl = params[-1]
    L = jnp.dot(h.astype(jnp.bfloat16), wl.astype(jnp.bfloat16),
                preferred_element_type=jnp.float32) + bl
    return jnp.concatenate([jnp.exp(L[:, :3]), L[:, 3:]], axis=-1)


if __name__ == "__main__":
    key = jax.random.PRNGKey(0)
    kx, ks, kp = jax.random.split(key, 3)

    B = 8
    x = jax.random.normal(kx, (B, X_SIZE), jnp.float32)
    s = jax.random.normal(ks, (B, S_SIZE), jnp.float32)
    params = init_params(kp)

    out = simple_mlp_forward(x, s, params)
    out = jax.block_until_ready(out)

    ref = reference_forward(x, s, params)
    assert out.shape == (B, OUT_SIZE)
    assert jnp.allclose(out, ref, rtol=2e-3, atol=2e-3), "mismatch vs JAX reference"

    print("KERNEL_OK")
</pallas_src>

<mosaic_0001>
module attributes {stable_mosaic.version = 11 : i64} {
  func.func @simple_mlp_kernel(%arg0: i32, %arg1: memref<8x8xf32, #tpu.memory_space<vmem>>, %arg2: memref<8x512xbf16, #tpu.memory_space<vmem>>, %arg3: memref<1x512xf32, #tpu.memory_space<vmem>>, %arg4: memref<512x512xbf16, #tpu.memory_space<vmem>>, %arg5: memref<1x512xf32, #tpu.memory_space<vmem>>, %arg6: memref<512x512xbf16, #tpu.memory_space<vmem>>, %arg7: memref<1x512xf32, #tpu.memory_space<vmem>>, %arg8: memref<512x512xbf16, #tpu.memory_space<vmem>>, %arg9: memref<1x512xf32, #tpu.memory_space<vmem>>, %arg10: memref<512x512xbf16, #tpu.memory_space<vmem>>, %arg11: memref<1x512xf32, #tpu.memory_space<vmem>>, %arg12: memref<512x128xbf16, #tpu.memory_space<vmem>>, %arg13: memref<1x128xf32, #tpu.memory_space<vmem>>, %arg14: memref<8x128xf32, #tpu.memory_space<vmem>>, %arg15: memref<8x512xbf16, #tpu.memory_space<vmem>>) attributes {dimension_semantics = [#tpu.dimension_semantics<parallel>], iteration_bounds = array<i64: 1>, scalar_prefetch = 0 : i64, scratch_operands = 1 : i64, tpu.core_type = #tpu.core_type<tc>, window_params = [{transform_indices = @transform_0, window_bounds = array<i64: 8, 8>}, {pipeline_mode = #tpu.pipeline_mode<synchronous>, transform_indices = @transform_1, window_bounds = array<i64: 8, 512>}, {pipeline_mode = #tpu.pipeline_mode<synchronous>, transform_indices = @transform_2, window_bounds = array<i64: 1, 512>}, {pipeline_mode = #tpu.pipeline_mode<synchronous>, transform_indices = @transform_3, window_bounds = array<i64: 512, 512>}, {pipeline_mode = #tpu.pipeline_mode<synchronous>, transform_indices = @transform_4, window_bounds = array<i64: 1, 512>}, {pipeline_mode = #tpu.pipeline_mode<synchronous>, transform_indices = @transform_5, window_bounds = array<i64: 512, 512>}, {pipeline_mode = #tpu.pipeline_mode<synchronous>, transform_indices = @transform_6, window_bounds = array<i64: 1, 512>}, {pipeline_mode = #tpu.pipeline_mode<synchronous>, transform_indices = @transform_7, window_bounds = array<i64: 512, 512>}, {pipeline_mode = #tpu.pipeline_mode<synchronous>, transform_indices = @transform_8, window_bounds = array<i64: 1, 512>}, {pipeline_mode = #tpu.pipeline_mode<synchronous>, transform_indices = @transform_9, window_bounds = array<i64: 512, 512>}, {pipeline_mode = #tpu.pipeline_mode<synchronous>, transform_indices = @transform_10, window_bounds = array<i64: 1, 512>}, {pipeline_mode = #tpu.pipeline_mode<synchronous>, transform_indices = @transform_11, window_bounds = array<i64: 512, 128>}, {pipeline_mode = #tpu.pipeline_mode<synchronous>, transform_indices = @transform_12, window_bounds = array<i64: 1, 128>}, {transform_indices = @transform_13, window_bounds = array<i64: 8, 128>}]} {
    %c0 = arith.constant 0 : index
    %c0_0 = arith.constant 0 : index
    %0 = vector.load %arg1[%c0, %c0_0] : memref<8x8xf32, #tpu.memory_space<vmem>>, vector<8x8xf32>
    %1 = arith.truncf %0 : vector<8x8xf32> to vector<8x8xbf16>
    %c0_1 = arith.constant 0 : index
    %c0_2 = arith.constant 0 : index
    %2 = vector.load %arg2[%c0_1, %c0_2] : memref<8x512xbf16, #tpu.memory_space<vmem>>, vector<8x512xbf16>
    %cst = arith.constant dense<0.000000e+00> : vector<8x512xf32>
    %3 = tpu.matmul %1, %2, %cst {dimension_numbers = #tpu.dot_dimension_numbers<[1], [0], [0], [1], [0, 0, 1, 1], [], []>} : vector<8x8xbf16>, vector<8x512xbf16>, vector<8x512xf32> -> vector<8x512xf32>
    %c0_3 = arith.constant 0 : index
    %c0_4 = arith.constant 0 : index
    %4 = vector.load %arg3[%c0_3, %c0_4] : memref<1x512xf32, #tpu.memory_space<vmem>>, vector<1x512xf32>
    %5 = vector.broadcast %4 : vector<1x512xf32> to vector<8x512xf32>
    %6 = arith.addf %3, %5 : vector<8x512xf32>
    %cst_5 = arith.constant 0.00999999977 : f32
    %7 = vector.broadcast %cst_5 : f32 to vector<8x512xf32>
    %8 = arith.mulf %7, %6 : vector<8x512xf32>
    %9 = arith.maximumf %6, %8 : vector<8x512xf32>
    %10 = arith.truncf %9 : vector<8x512xf32> to vector<8x512xbf16>
    %c0_6 = arith.constant 0 : index
    %c0_7 = arith.constant 0 : index
    %11 = vector.load %arg15[%c0_6, %c0_7] : memref<8x512xbf16, #tpu.memory_space<vmem>>, vector<8x512xbf16>
    tpu.vector_store %arg15[%c0_6, %c0_7], %10 {strides = array<i32>} : memref<8x512xbf16, #tpu.memory_space<vmem>>, vector<8x512xbf16>,
    %c0_8 = arith.constant 0 : index
    %c0_9 = arith.constant 0 : index
    %12 = vector.load %arg15[%c0_8, %c0_9] : memref<8x512xbf16, #tpu.memory_space<vmem>>, vector<8x512xbf16>
    %c0_10 = arith.constant 0 : index
    %c0_11 = arith.constant 0 : index
    %13 = vector.load %arg4[%c0_10, %c0_11] : memref<512x512xbf16, #tpu.memory_space<vmem>>, vector<512x512xbf16>
    %cst_12 = arith.constant dense<0.000000e+00> : vector<8x512xf32>
    %14 = tpu.matmul %12, %13, %cst_12 {dimension_numbers = #tpu.dot_dimension_numbers<[1], [0], [0], [1], [0, 0, 1, 1], [], []>} : vector<8x512xbf16>, vector<512x512xbf16>, vector<8x512xf32> -> vector<8x512xf32>
    %c0_13 = arith.constant 0 : index
    %c0_14 = arith.constant 0 : index
    %15 = vector.load %arg5[%c0_13, %c0_14] : memref<1x512xf32, #tpu.memory_space<vmem>>, vector<1x512xf32>
    %16 = vector.broadcast %15 : vector<1x512xf32> to vector<8x512xf32>
    %17 = arith.addf %14, %16 : vector<8x512xf32>
    %cst_15 = arith.constant 0.00999999977 : f32
    %18 = vector.broadcast %cst_15 : f32 to vector<8x512xf32>
    %19 = arith.mulf %18, %17 : vector<8x512xf32>
    %20 = arith.maximumf %17, %19 : vector<8x512xf32>
    %21 = arith.truncf %20 : vector<8x512xf32> to vector<8x512xbf16>
    %c0_16 = arith.constant 0 : index
    %c0_17 = arith.constant 0 : index
    %22 = vector.load %arg15[%c0_16, %c0_17] : memref<8x512xbf16, #tpu.memory_space<vmem>>, vector<8x512xbf16>
    tpu.vector_store %arg15[%c0_16, %c0_17], %21 {strides = array<i32>} : memref<8x512xbf16, #tpu.memory_space<vmem>>, vector<8x512xbf16>,
    %c0_18 = arith.constant 0 : index
    %c0_19 = arith.constant 0 : index
    %23 = vector.load %arg15[%c0_18, %c0_19] : memref<8x512xbf16, #tpu.memory_space<vmem>>, vector<8x512xbf16>
    %c0_20 = arith.constant 0 : index
    %c0_21 = arith.constant 0 : index
    %24 = vector.load %arg6[%c0_20, %c0_21] : memref<512x512xbf16, #tpu.memory_space<vmem>>, vector<512x512xbf16>
    %cst_22 = arith.constant dense<0.000000e+00> : vector<8x512xf32>
    %25 = tpu.matmul %23, %24, %cst_22 {dimension_numbers = #tpu.dot_dimension_numbers<[1], [0], [0], [1], [0, 0, 1, 1], [], []>} : vector<8x512xbf16>, vector<512x512xbf16>, vector<8x512xf32> -> vector<8x512xf32>
    %c0_23 = arith.constant 0 : index
    %c0_24 = arith.constant 0 : index
    %26 = vector.load %arg7[%c0_23, %c0_24] : memref<1x512xf32, #tpu.memory_space<vmem>>, vector<1x512xf32>
    %27 = vector.broadcast %26 : vector<1x512xf32> to vector<8x512xf32>
    %28 = arith.addf %25, %27 : vector<8x512xf32>
    %cst_25 = arith.constant 0.00999999977 : f32
    %29 = vector.broadcast %cst_25 : f32 to vector<8x512xf32>
    %30 = arith.mulf %29, %28 : vector<8x512xf32>
    %31 = arith.maximumf %28, %30 : vector<8x512xf32>
    %32 = arith.truncf %31 : vector<8x512xf32> to vector<8x512xbf16>
    %c0_26 = arith.constant 0 : index
    %c0_27 = arith.constant 0 : index
    %33 = vector.load %arg15[%c0_26, %c0_27] : memref<8x512xbf16, #tpu.memory_space<vmem>>, vector<8x512xbf16>
    tpu.vector_store %arg15[%c0_26, %c0_27], %32 {strides = array<i32>} : memref<8x512xbf16, #tpu.memory_space<vmem>>, vector<8x512xbf16>,
    %c0_28 = arith.constant 0 : index
    %c0_29 = arith.constant 0 : index
    %34 = vector.load %arg15[%c0_28, %c0_29] : memref<8x512xbf16, #tpu.memory_space<vmem>>, vector<8x512xbf16>
    %c0_30 = arith.constant 0 : index
    %c0_31 = arith.constant 0 : index
    %35 = vector.load %arg8[%c0_30, %c0_31] : memref<512x512xbf16, #tpu.memory_space<vmem>>, vector<512x512xbf16>
    %cst_32 = arith.constant dense<0.000000e+00> : vector<8x512xf32>
    %36 = tpu.matmul %34, %35, %cst_32 {dimension_numbers = #tpu.dot_dimension_numbers<[1], [0], [0], [1], [0, 0, 1, 1], [], []>} : vector<8x512xbf16>, vector<512x512xbf16>, vector<8x512xf32> -> vector<8x512xf32>
    %c0_33 = arith.constant 0 : index
    %c0_34 = arith.constant 0 : index
    %37 = vector.load %arg9[%c0_33, %c0_34] : memref<1x512xf32, #tpu.memory_space<vmem>>, vector<1x512xf32>
    %38 = vector.broadcast %37 : vector<1x512xf32> to vector<8x512xf32>
    %39 = arith.addf %36, %38 : vector<8x512xf32>
    %cst_35 = arith.constant 0.00999999977 : f32
    %40 = vector.broadcast %cst_35 : f32 to vector<8x512xf32>
    %41 = arith.mulf %40, %39 : vector<8x512xf32>
    %42 = arith.maximumf %39, %41 : vector<8x512xf32>
    %43 = arith.truncf %42 : vector<8x512xf32> to vector<8x512xbf16>
    %c0_36 = arith.constant 0 : index
    %c0_37 = arith.constant 0 : index
    %44 = vector.load %arg15[%c0_36, %c0_37] : memref<8x512xbf16, #tpu.memory_space<vmem>>, vector<8x512xbf16>
    tpu.vector_store %arg15[%c0_36, %c0_37], %43 {strides = array<i32>} : memref<8x512xbf16, #tpu.memory_space<vmem>>, vector<8x512xbf16>,
    %c0_38 = arith.constant 0 : index
    %c0_39 = arith.constant 0 : index
    %45 = vector.load %arg15[%c0_38, %c0_39] : memref<8x512xbf16, #tpu.memory_space<vmem>>, vector<8x512xbf16>
    %c0_40 = arith.constant 0 : index
    %c0_41 = arith.constant 0 : index
    %46 = vector.load %arg10[%c0_40, %c0_41] : memref<512x512xbf16, #tpu.memory_space<vmem>>, vector<512x512xbf16>
    %cst_42 = arith.constant dense<0.000000e+00> : vector<8x512xf32>
    %47 = tpu.matmul %45, %46, %cst_42 {dimension_numbers = #tpu.dot_dimension_numbers<[1], [0], [0], [1], [0, 0, 1, 1], [], []>} : vector<8x512xbf16>, vector<512x512xbf16>, vector<8x512xf32> -> vector<8x512xf32>
    %c0_43 = arith.constant 0 : index
    %c0_44 = arith.constant 0 : index
    %48 = vector.load %arg11[%c0_43, %c0_44] : memref<1x512xf32, #tpu.memory_space<vmem>>, vector<1x512xf32>
    %49 = vector.broadcast %48 : vector<1x512xf32> to vector<8x512xf32>
    %50 = arith.addf %47, %49 : vector<8x512xf32>
    %cst_45 = arith.constant 0.00999999977 : f32
    %51 = vector.broadcast %cst_45 : f32 to vector<8x512xf32>
    %52 = arith.mulf %51, %50 : vector<8x512xf32>
    %53 = arith.maximumf %50, %52 : vector<8x512xf32>
    %54 = arith.truncf %53 : vector<8x512xf32> to vector<8x512xbf16>
    %c0_46 = arith.constant 0 : index
    %c0_47 = arith.constant 0 : index
    %55 = vector.load %arg15[%c0_46, %c0_47] : memref<8x512xbf16, #tpu.memory_space<vmem>>, vector<8x512xbf16>
    tpu.vector_store %arg15[%c0_46, %c0_47], %54 {strides = array<i32>} : memref<8x512xbf16, #tpu.memory_space<vmem>>, vector<8x512xbf16>,
    %c0_48 = arith.constant 0 : index
    %c0_49 = arith.constant 0 : index
    %56 = vector.load %arg15[%c0_48, %c0_49] : memref<8x512xbf16, #tpu.memory_space<vmem>>, vector<8x512xbf16>
    %c0_50 = arith.constant 0 : index
    %c0_51 = arith.constant 0 : index
    %57 = vector.load %arg12[%c0_50, %c0_51] : memref<512x128xbf16, #tpu.memory_space<vmem>>, vector<512x128xbf16>
    %cst_52 = arith.constant dense<0.000000e+00> : vector<8x128xf32>
    %58 = tpu.matmul %56, %57, %cst_52 {dimension_numbers = #tpu.dot_dimension_numbers<[1], [0], [0], [1], [0, 0, 1, 1], [], []>} : vector<8x512xbf16>, vector<512x128xbf16>, vector<8x128xf32> -> vector<8x128xf32>
    %c0_53 = arith.constant 0 : index
    %c0_54 = arith.constant 0 : index
    %59 = vector.load %arg13[%c0_53, %c0_54] : memref<1x128xf32, #tpu.memory_space<vmem>>, vector<1x128xf32>
    %60 = vector.broadcast %59 : vector<1x128xf32> to vector<8x128xf32>
    %61 = arith.addf %58, %60 : vector<8x128xf32>
    %62 = tpu.iota {dimensions = array<i32: 1>} : vector<8x128xi32>
    %c3_i32 = arith.constant 3 : i32
    %63 = vector.broadcast %c3_i32 : i32 to vector<8x128xi32>
    %64 = arith.cmpi slt, %62, %63 : vector<8x128xi32>
    %65 = math.exp %61 : vector<8x128xf32>
    %66 = arith.select %64, %65, %61 : vector<8x128xi1>, vector<8x128xf32>
    %c0_55 = arith.constant 0 : index
    %c0_56 = arith.constant 0 : index
    %67 = vector.load %arg14[%c0_55, %c0_56] : memref<8x128xf32, #tpu.memory_space<vmem>>, vector<8x128xf32>
    tpu.vector_store %arg14[%c0_55, %c0_56], %66 {strides = array<i32>} : memref<8x128xf32, #tpu.memory_space<vmem>>, vector<8x128xf32>,
    return
  }
  func.func @transform_0(%arg0: i32) -> (i32, i32) {
    %c0_i32 = arith.constant 0 : i32
    %c0_i32_0 = arith.constant 0 : i32
    return %arg0, %c0_i32 : i32, i32
  }
  func.func @transform_1(%arg0: i32) -> (i32, i32) {
    %c0_i32 = arith.constant 0 : i32
    %c0_i32_0 = arith.constant 0 : i32
    %c0_i32_1 = arith.constant 0 : i32
    return %c0_i32, %c0_i32_0 : i32, i32
  }
  func.func @transform_2(%arg0: i32) -> (i32, i32) {
    %c0_i32 = arith.constant 0 : i32
    %c0_i32_0 = arith.constant 0 : i32
    %c0_i32_1 = arith.constant 0 : i32
    return %c0_i32, %c0_i32_0 : i32, i32
  }
  func.func @transform_3(%arg0: i32) -> (i32, i32) {
    %c0_i32 = arith.constant 0 : i32
    %c0_i32_0 = arith.constant 0 : i32
    %c0_i32_1 = arith.constant 0 : i32
    return %c0_i32, %c0_i32_0 : i32, i32
  }
  func.func @transform_4(%arg0: i32) -> (i32, i32) {
    %c0_i32 = arith.constant 0 : i32
    %c0_i32_0 = arith.constant 0 : i32
    %c0_i32_1 = arith.constant 0 : i32
    return %c0_i32, %c0_i32_0 : i32, i32
  }
  func.func @transform_5(%arg0: i32) -> (i32, i32) {
    %c0_i32 = arith.constant 0 : i32
    %c0_i32_0 = arith.constant 0 : i32
    %c0_i32_1 = arith.constant 0 : i32
    return %c0_i32, %c0_i32_0 : i32, i32
  }
  func.func @transform_6(%arg0: i32) -> (i32, i32) {
    %c0_i32 = arith.constant 0 : i32
    %c0_i32_0 = arith.constant 0 : i32
    %c0_i32_1 = arith.constant 0 : i32
    return %c0_i32, %c0_i32_0 : i32, i32
  }
  func.func @transform_7(%arg0: i32) -> (i32, i32) {
    %c0_i32 = arith.constant 0 : i32
    %c0_i32_0 = arith.constant 0 : i32
    %c0_i32_1 = arith.constant 0 : i32
    return %c0_i32, %c0_i32_0 : i32, i32
  }
  func.func @transform_8(%arg0: i32) -> (i32, i32) {
    %c0_i32 = arith.constant 0 : i32
    %c0_i32_0 = arith.constant 0 : i32
    %c0_i32_1 = arith.constant 0 : i32
    return %c0_i32, %c0_i32_0 : i32, i32
  }
  func.func @transform_9(%arg0: i32) -> (i32, i32) {
    %c0_i32 = arith.constant 0 : i32
    %c0_i32_0 = arith.constant 0 : i32
    %c0_i32_1 = arith.constant 0 : i32
    return %c0_i32, %c0_i32_0 : i32, i32
  }
  func.func @transform_10(%arg0: i32) -> (i32, i32) {
    %c0_i32 = arith.constant 0 : i32
    %c0_i32_0 = arith.constant 0 : i32
    %c0_i32_1 = arith.constant 0 : i32
    return %c0_i32, %c0_i32_0 : i32, i32
  }
  func.func @transform_11(%arg0: i32) -> (i32, i32) {
    %c0_i32 = arith.constant 0 : i32
    %c0_i32_0 = arith.constant 0 : i32
    %c0_i32_1 = arith.constant 0 : i32
    return %c0_i32, %c0_i32_0 : i32, i32
  }
  func.func @transform_12(%arg0: i32) -> (i32, i32) {
    %c0_i32 = arith.constant 0 : i32
    %c0_i32_0 = arith.constant 0 : i32
    %c0_i32_1 = arith.constant 0 : i32
    return %c0_i32, %c0_i32_0 : i32, i32
  }
  func.func @transform_13(%arg0: i32) -> (i32, i32) {
    %c0_i32 = arith.constant 0 : i32
    %c0_i32_0 = arith.constant 0 : i32
    return %arg0, %c0_i32 : i32, i32
  }
}

</mosaic_0001>

<llo_original>
// kernel: tpu_custom_call.1
$region0: #{tpu_custom_call.1}
  #allocation0 [shape = 'u32[]', space=smem, size = 0x4, offset = 0x4, fixed_abs, tag = 'smem constant byte address 0x4 - core index']
  #allocation1 [shape = 'u32[144,128]{1,0:T(1,128)}', space=vmem, size = 0x12000, scoped, tag = 'internal scratch']
  #allocation2 [shape = 'bf16[8,512]{1,0:T(8,128)(2,1)}', space=vmem, size = 0x2000, scoped, tag = 'scratch operand']
  %s0 = inlined_call_operand.hbm [shape: f32[8,8], index: 0, kind: input, shape index: {}]
  %s1 = inlined_call_operand.hbm [shape: bf16[8,512], index: 1, kind: input, shape index: {}]
  %s2 = inlined_call_operand.vmem [shape: f32[1,512], index: 2, kind: input, shape index: {}]
  %s3 = inlined_call_operand.hbm [shape: bf16[512,512], index: 3, kind: input, shape index: {}]
  %s4 = inlined_call_operand.vmem [shape: f32[1,512], index: 4, kind: input, shape index: {}]
  %s5 = inlined_call_operand.hbm [shape: bf16[512,512], index: 5, kind: input, shape index: {}]
  %s6 = inlined_call_operand.vmem [shape: f32[1,512], index: 6, kind: input, shape index: {}]
  %s7 = inlined_call_operand.hbm [shape: bf16[512,512], index: 7, kind: input, shape index: {}]
  %s8 = inlined_call_operand.vmem [shape: f32[1,512], index: 8, kind: input, shape index: {}]
  %s9 = inlined_call_operand.hbm [shape: bf16[512,512], index: 9, kind: input, shape index: {}]
  %s10 = inlined_call_operand.vmem [shape: f32[1,512], index: 10, kind: input, shape index: {}]
  %s11 = inlined_call_operand.hbm [shape: bf16[512,128], index: 11, kind: input, shape index: {}]
  %s12 = inlined_call_operand.vmem [shape: f32[1,128], index: 12, kind: input, shape index: {}]
  %s13 = inlined_call_operand.hbm [shape: f32[8,128], index: 13, kind: output, shape index: {}]
  %s14 = sld [smem:[#allocation0]]
  $region90: #{tpu_custom_call.1} parent=0
    _
  %s16 = ssub.s32 1, %s14
  %s17 = scalar_select 0, %s16, %s14
  $region1: #{tpu_custom_call.1} parent=0
    #allocation3 [shape = 'u8[4096]{0}', space=vmem, size = 0x1000, scoped, tag = 'input window, operand 0, single buffered']
    #allocation4 [shape = 's32[1]{0}', space=sflag, size = 0x4, scoped, tag = 'scoped memory for tpu_custom_call.1']
    #allocation5 [shape = 's32[1]{0}', space=sflag, size = 0x4, scoped, tag = 'scoped memory for tpu_custom_call.1']
    #allocation6 [shape = 'u8[8192]{0}', space=vmem, size = 0x2000, scoped, tag = 'input window, operand 1, single buffered']
    #allocation7 [shape = 's32[1]{0}', space=sflag, size = 0x4, scoped, tag = 'scoped memory for tpu_custom_call.1']
    #allocation8 [shape = 'u8[524288]{0}', space=vmem, size = 0x80000, scoped, tag = 'input window, operand 3, single buffered']
    #allocation9 [shape = 'u8[524288]{0}', space=vmem, size = 0x80000, scoped, tag = 'input window, operand 5, single buffered']
    #allocation10 [shape = 's32[1]{0}', space=sflag, size = 0x4, scoped, tag = 'scoped memory for tpu_custom_call.1']
    #allocation11 [shape = 'u8[524288]{0}', space=vmem, size = 0x80000, scoped, tag = 'input window, operand 7, single buffered']
    #allocation12 [shape = 'u8[524288]{0}', space=vmem, size = 0x80000, scoped, tag = 'input window, operand 9, single buffered']
    #allocation13 [shape = 's32[1]{0}', space=sflag, size = 0x4, scoped, tag = 'scoped memory for tpu_custom_call.1']
    #allocation14 [shape = 'u8[131072]{0}', space=vmem, size = 0x20000, scoped, tag = 'input window, operand 11, single buffered']
    #allocation15 [shape = 'u8[4096]{0}', space=vmem, size = 0x1000, scoped, tag = 'output window, operand 0, single buffered']
    %18 = vsyncpa [#allocation4], 0
    %19 = vsyncpa [#allocation7], 0
    %20 = vsyncpa [#allocation10], 0
    %21 = vsyncpa [#allocation13], 0
    %22 = vsyncpa [#allocation5], 0
    // Predicated region
    $region2: #{tpu_custom_call.1} parent=1 // pred_check
      _
    $region3: #{tpu_custom_call.1} parent=1 // pred_check_branch
      %24 = sbr.rel (0) target = $region5
    $region4: #{tpu_custom_call.1} parent=1 // pred_region
      %s26 = ssub.s32 128, 128
      %27 = vsyncadd [#allocation4], %s26
      %s29 = sshll.u32 [#allocation3], 4
      %s30 = int_to_ptr.vmem [resolvable:$true] %s29
      %32 = dma.hbm_to_vmem [thread:$0]  %s0, 128, %s30, [#allocation4]
    $region5: #{tpu_custom_call.1} parent=1 // pred_fallthru
      _
    // Predicated region
    $region6: #{tpu_custom_call.1} parent=1 // pred_check
      _
    $region7: #{tpu_custom_call.1} parent=1 // pred_check_branch
      %34 = sbr.rel (0) target = $region9
    $region8: #{tpu_custom_call.1} parent=1 // pred_region
      %s36 = ssub.s32 256, 256
      %37 = vsyncadd [#allocation7], %s36
      %s39 = sshll.u32 [#allocation6], 4
      %s40 = int_to_ptr.vmem [resolvable:$true] %s39
      %42 = dma.hbm_to_vmem [thread:$0]  %s1, 256, %s40, [#allocation7]
    $region9: #{tpu_custom_call.1} parent=1 // pred_fallthru
      _
    // Predicated region
    $region10: #{tpu_custom_call.1} parent=1 // pred_check
      _
    $region11: #{tpu_custom_call.1} parent=1 // pred_check_branch
      %44 = sbr.rel (0) target = $region13
    $region12: #{tpu_custom_call.1} parent=1 // pred_region
      _
    $region13: #{tpu_custom_call.1} parent=1 // pred_fallthru
      _
    // Predicated region
    $region14: #{tpu_custom_call.1} parent=1 // pred_check
      _
    $region15: #{tpu_custom_call.1} parent=1 // pred_check_branch
      %46 = sbr.rel (0) target = $region17
    $region16: #{tpu_custom_call.1} parent=1 // pred_region
      %s48 = ssub.s32 16384, 16384
      %49 = vsyncadd [#allocation7], %s48
      %s50 = sshll.u32 [#allocation8], 4
      %s51 = int_to_ptr.vmem [resolvable:$true] %s50
      %56 = dma.hbm_to_vmem [thread:$0]  %s3, 16384, %s51, [#allocation7], 256, 256, 16
    $region17: #{tpu_custom_call.1} parent=1 // pred_fallthru
      _
    // Predicated region
    $region18: #{tpu_custom_call.1} parent=1 // pred_check
      _
    $region19: #{tpu_custom_call.1} parent=1 // pred_check_branch
      %58 = sbr.rel (0) target = $region21
    $region20: #{tpu_custom_call.1} parent=1 // pred_region
      _
    $region21: #{tpu_custom_call.1} parent=1 // pred_fallthru
      _
    // Predicated region
    $region22: #{tpu_custom_call.1} parent=1 // pred_check
      _
    $region23: #{tpu_custom_call.1} parent=1 // pred_check_branch
      %60 = sbr.rel (0) target = $region25
    $region24: #{tpu_custom_call.1} parent=1 // pred_region
      %s62 = ssub.s32 16384, 16384
      %63 = vsyncadd [#allocation10], %s62
      %s64 = sshll.u32 [#allocation9], 4
      %s65 = int_to_ptr.vmem [resolvable:$true] %s64
      %70 = dma.hbm_to_vmem [thread:$0]  %s5, 16384, %s65, [#allocation10], 256, 256, 16
    $region25: #{tpu_custom_call.1} parent=1 // pred_fallthru
      _
    // Predicated region
    $region26: #{tpu_custom_call.1} parent=1 // pred_check
      _
    $region27: #{tpu_custom_call.1} parent=1 // pred_check_branch
      %72 = sbr.rel (0) target = $region29
    $region28: #{tpu_custom_call.1} parent=1 // pred_region
      _
    $region29: #{tpu_custom_call.1} parent=1 // pred_fallthru
      _
    // Predicated region
    $region30: #{tpu_custom_call.1} parent=1 // pred_check
      _
    $region31: #{tpu_custom_call.1} parent=1 // pred_check_branch
      %74 = sbr.rel (0) target = $region33
    $region32: #{tpu_custom_call.1} parent=1 // pred_region
      %s76 = ssub.s32 16384, 16384
      %77 = vsyncadd [#allocation10], %s76
      %s78 = sshll.u32 [#allocation11], 4
      %s79 = int_to_ptr.vmem [resolvable:$true] %s78
      %84 = dma.hbm_to_vmem [thread:$0]  %s7, 16384, %s79, [#allocation10], 256, 256, 16
    $region33: #{tpu_custom_call.1} parent=1 // pred_fallthru
      _
    // Predicated region
    $region34: #{tpu_custom_call.1} parent=1 // pred_check
      _
    $region35: #{tpu_custom_call.1} parent=1 // pred_check_branch
      %86 = sbr.rel (0) target = $region37
    $region36: #{tpu_custom_call.1} parent=1 // pred_region
      _
    $region37: #{tpu_custom_call.1} parent=1 // pred_fallthru
      _
    // Predicated region
    $region38: #{tpu_custom_call.1} parent=1 // pred_check
      _
    $region39: #{tpu_custom_call.1} parent=1 // pred_check_branch
      %88 = sbr.rel (0) target = $region41
    $region40: #{tpu_custom_call.1} parent=1 // pred_region
      %s90 = ssub.s32 16384, 16384
      %91 = vsyncadd [#allocation13], %s90
      %s92 = sshll.u32 [#allocation12], 4
      %s93 = int_to_ptr.vmem [resolvable:$true] %s92
      %98 = dma.hbm_to_vmem [thread:$0]  %s9, 16384, %s93, [#allocation13], 256, 256, 16
    $region41: #{tpu_custom_call.1} parent=1 // pred_fallthru
      _
    // Predicated region
    $region42: #{tpu_custom_call.1} parent=1 // pred_check
      _
    $region43: #{tpu_custom_call.1} parent=1 // pred_check_branch
      %100 = sbr.rel (0) target = $region45
    $region44: #{tpu_custom_call.1} parent=1 // pred_region
      _
    $region45: #{tpu_custom_call.1} parent=1 // pred_fallthru
      _
    // Predicated region
    $region46: #{tpu_custom_call.1} parent=1 // pred_check
      _
    $region47: #{tpu_custom_call.1} parent=1 // pred_check_branch
      %102 = sbr.rel (0) target = $region49
    $region48: #{tpu_custom_call.1} parent=1 // pred_region
      %s104 = ssub.s32 4096, 4096
      %105 = vsyncadd [#allocation13], %s104
      %s106 = sshll.u32 [#allocation14], 4
      %s107 = int_to_ptr.vmem [resolvable:$true] %s106
      %112 = dma.hbm_to_vmem [thread:$0]  %s11, 4096, %s107, [#allocation13], 64, 64, 4
    $region49: #{tpu_custom_call.1} parent=1 // pred_fallthru
      _
    // Predicated region
    $region50: #{tpu_custom_call.1} parent=1 // pred_check
      _
    $region51: #{tpu_custom_call.1} parent=1 // pred_check_branch
      %114 = sbr.rel (0) target = $region53
    $region52: #{tpu_custom_call.1} parent=1 // pred_region
      _
    $region53: #{tpu_custom_call.1} parent=1 // pred_fallthru
      _
    // Predicated region
    $region54: #{tpu_custom_call.1} parent=1 // pred_check
      _
    $region55: #{tpu_custom_call.1} parent=1 // pred_check_branch
      %116 = sbr.rel (0) target = $region57
    $region56: #{tpu_custom_call.1} parent=1 // pred_region
      %117 = dma.done [#allocation4], 128
    $region57: #{tpu_custom_call.1} parent=1 // pred_fallthru
      _
    // Predicated region
    $region58: #{tpu_custom_call.1} parent=1 // pred_check
      _
    $region59: #{tpu_custom_call.1} parent=1 // pred_check_branch
      %119 = sbr.rel (0) target = $region61
    $region60: #{tpu_custom_call.1} parent=1 // pred_region
      %120 = dma.done [#allocation7], 256
    $region61: #{tpu_custom_call.1} parent=1 // pred_fallthru
      _
    // Predicated region
    $region62: #{tpu_custom_call.1} parent=1 // pred_check
      _
    $region63: #{tpu_custom_call.1} parent=1 // pred_check_branch
      %122 = sbr.rel (0) target = $region65
    $region64: #{tpu_custom_call.1} parent=1 // pred_region
      %123 = dma.done [#allocation7], 16384
    $region65: #{tpu_custom_call.1} parent=1 // pred_fallthru
      _
    // Predicated region
    $region66: #{tpu_custom_call.1} parent=1 // pred_check
      _
    $region67: #{tpu_custom_call.1} parent=1 // pred_check_branch
      %125 = sbr.rel (0) target = $region69
    $region68: #{tpu_custom_call.1} parent=1 // pred_region
      %126 = dma.done [#allocation10], 16384
    $region69: #{tpu_custom_call.1} parent=1 // pred_fallthru
      _
    // Predicated region
    $region70: #{tpu_custom_call.1} parent=1 // pred_check
      _
    $region71: #{tpu_custom_call.1} parent=1 // pred_check_branch
      %128 = sbr.rel (0) target = $region73
    $region72: #{tpu_custom_call.1} parent=1 // pred_region
      %129 = dma.done [#allocation10], 16384
    $region73: #{tpu_custom_call.1} parent=1 // pred_fallthru
      _
    // Predicated region
    $region74: #{tpu_custom_call.1} parent=1 // pred_check
      _
    $region75: #{tpu_custom_call.1} parent=1 // pred_check_branch
      %131 = sbr.rel (0) target = $region77
    $region76: #{tpu_custom_call.1} parent=1 // pred_region
      %132 = dma.done [#allocation13], 16384
    $region77: #{tpu_custom_call.1} parent=1 // pred_fallthru
      _
    // Predicated region
    $region78: #{tpu_custom_call.1} parent=1 // pred_check
      _
    $region79: #{tpu_custom_call.1} parent=1 // pred_check_branch
      %134 = sbr.rel (0) target = $region81
    $region80: #{tpu_custom_call.1} parent=1 // pred_region
      %135 = dma.done [#allocation13], 4096
    $region81: #{tpu_custom_call.1} parent=1 // pred_fallthru
      _
    %v137 = vld [vmem:[#allocation3] sm:$0xff]
    %v138 = vpack.c.bf16 %v137, %v137
    %v139 = vld [vmem:[#allocation6] sm:$0xff]
    %v140 = vld [vmem:[#allocation6 + $0x8] sm:$0xff]
    %v141 = vld [vmem:[%s2] sm:$0xf]
    %v143 = vlaneseq
    %v144 = vshrl.u32 %v143, 7
    %v145 = vsub.s32 0, %v144
    %v146 = vrot.slane %v141, %v145
    %v147 = vlaneseq
    %v148 = vshrl.u32 %v147, 7
    %v149 = vsub.s32 1, %v148
    %v150 = vrot.slane %v141, %v149
    %v151 = vlaneseq
    %v152 = vshrl.u32 %v151, 7
    %v153 = vsub.s32 2, %v152
    %v154 = vrot.slane %v141, %v153
    %v155 = vlaneseq
    %v156 = vshrl.u32 %v155, 7
    %v157 = vsub.s32 3, %v156
    %v158 = vrot.slane %v141, %v157
    %v165 = vunpack.c.l.b16 %v139
    %v166 = vunpack.c.h.b16 %v139
    %v167 = vunpack.c.l.b16 %v140
    %v168 = vunpack.c.h.b16 %v140
    %v169 = vpack.c.b16 %v165, %v165
    %v170 = vpack.c.b16 %v166, %v166
    %v171 = vpack.c.b16 %v167, %v167
    %v172 = vpack.c.b16 %v168, %v168
    %vm173 = vcmask 64512
    %v175 = vsel %vm173, %v138, 0
    %vm177 = vcmask 1043456
    %v179 = vsel %vm177, %v169, 0
    %v182 = vsel %vm177, %v170, 0
    %v185 = vsel %vm177, %v171, 0
    %v188 = vsel %vm177, %v172, 0
    %190 = vmatprep.subr.bf16.mxu0 %v182
    %191 = vmatpush1.bf16.msra.mxu0 %v179
    %192 = vmatprep.subr.bf16.mxu0 0
    %193 = vmatpush1.bf16.msra.mxu0 0
    %194 = vmatprep.subr.bf16.mxu0 0
    %195 = vmatpush1.bf16.msra.mxu0 0
    %196 = vmatprep.subr.bf16.mxu0 0
    %197 = vmatpush1.bf16.msra.mxu0 0
    %198 = vmatprep.subr.bf16.mxu0 0
    %199 = vmatpush1.bf16.msra.mxu0 0
    %200 = vmatprep.subr.bf16.mxu0 0
    %201 = vmatpush1.bf16.msra.mxu0 0
    %202 = vmatprep.subr.bf16.mxu0 0
    %203 = vmatpush1.bf16.msra.mxu0 0
    %204 = vmatprep.subr.bf16.mxu0 0
    %205 = vmatpush1.bf16.msra.mxu0 0
    %206 = vmatprep.subr.bf16.mxu0 0
    %207 = vmatpush1.bf16.msra.mxu0 0
    %208 = vmatprep.subr.bf16.mxu0 0
    %209 = vmatpush1.bf16.msra.mxu0 0
    %210 = vmatprep.subr.bf16.mxu0 0
    %211 = vmatpush1.bf16.msra.mxu0 0
    %212 = vmatprep.subr.bf16.mxu0 0
    %213 = vmatpush1.bf16.msra.mxu0 0
    %214 = vmatprep.subr.bf16.mxu0 0
    %215 = vmatpush1.bf16.msra.mxu0 0
    %216 = vmatprep.subr.bf16.mxu0 0
    %217 = vmatpush1.bf16.msra.mxu0 0
    %218 = vmatprep.subr.bf16.mxu0 0
    %219 = vmatpush1.bf16.msra.mxu0 0
    %220 = vmatprep.subr.bf16.mxu0 0
    %221 = vmatpush1.bf16.msra.mxu0 0
    %222 = vmatprep.mubr.bf16.mxu0 0
    %223 = vmatmul.mubr.bf16.gmra.mrb[0].mxu0 %v175
    %v224 = vpop.f32.mrb[0].mxu0
    %v225 = vadd.f32 %v146, %v224
    %v226 = vpop.f32.mrb[0].mxu0
    %v227 = vadd.f32 %v150, %v226
    %v228 = vpop.f32.mrb[0].mxu0
    %v229 = vpop.f32.mrb[0].mxu0
    %230 = vdwg.mxu0
    %231 = vmatprep.subr.bf16.mxu0 %v188
    %232 = vmatpush1.bf16.msra.mxu0 %v185
    %233 = vmatprep.subr.bf16.mxu0 0
    %234 = vmatpush1.bf16.msra.mxu0 0
    %235 = vmatprep.subr.bf16.mxu0 0
    %236 = vmatpush1.bf16.msra.mxu0 0
    %237 = vmatprep.subr.bf16.mxu0 0
    %238 = vmatpush1.bf16.msra.mxu0 0
    %239 = vmatprep.subr.bf16.mxu0 0
    %240 = vmatpush1.bf16.msra.mxu0 0
    %241 = vmatprep.subr.bf16.mxu0 0
    %242 = vmatpush1.bf16.msra.mxu0 0
    %243 = vmatprep.subr.bf16.mxu0 0
    %244 = vmatpush1.bf16.msra.mxu0 0
    %245 = vmatprep.subr.bf16.mxu0 0
    %246 = vmatpush1.bf16.msra.mxu0 0
    %247 = vmatprep.subr.bf16.mxu0 0
    %248 = vmatpush1.bf16.msra.mxu0 0
    %249 = vmatprep.subr.bf16.mxu0 0
    %250 = vmatpush1.bf16.msra.mxu0 0
    %251 = vmatprep.subr.bf16.mxu0 0
    %252 = vmatpush1.bf16.msra.mxu0 0
    %253 = vmatprep.subr.bf16.mxu0 0
    %254 = vmatpush1.bf16.msra.mxu0 0
    %255 = vmatprep.subr.bf16.mxu0 0
    %256 = vmatpush1.bf16.msra.mxu0 0
    %257 = vmatprep.subr.bf16.mxu0 0
    %258 = vmatpush1.bf16.msra.mxu0 0
    %259 = vmatprep.subr.bf16.mxu0 0
    %260 = vmatpush1.bf16.msra.mxu0 0
    %261 = vmatprep.subr.bf16.mxu0 0
    %262 = vmatpush1.bf16.msra.mxu0 0
    %263 = vmatprep.mubr.bf16.mxu0 0
    %264 = vmatmul.mubr.bf16.gmra.mrb[0].mxu0 %v175
    %v265 = vpop.f32.mrb[0].mxu0
    %v266 = vadd.f32 %v154, %v265
    %v267 = vpop.f32.mrb[0].mxu0
    %v268 = vadd.f32 %v158, %v267
    %v269 = vpop.f32.mrb[0].mxu0
    %v270 = vpop.f32.mrb[0].mxu0
    %271 = vdwg.mxu0
    %v272 = vmul.f32 %v225, 0.01
    %v273 = vmul.f32 %v227, 0.01
    %v274 = vmul.f32 %v266, 0.01
    %v275 = vmul.f32 %v268, 0.01
    %v276 = vmax.f32 %v225, %v272
    %v277 = vmax.f32 %v227, %v273
    %v278 = vmax.f32 %v266, %v274
    %v279 = vmax.f32 %v268, %v275
    %v280 = vpack.c.bf16 %v276, %v276
    %v281 = vpack.c.bf16 %v277, %v277
    %v282 = vpack.c.bf16 %v278, %v278
    %v283 = vpack.c.bf16 %v279, %v279
    %v288 = vunpack.c.l.b16 %v280
    %v289 = vunpack.c.l.b16 %v281
    %v290 = vunpack.c.l.b16 %v282
    %v291 = vunpack.c.l.b16 %v283
    %v292 = vpack.c.b16 %v289, %v288
    %v293 = vpack.c.b16 %v291, %v290
    %296 = vst [vmem:[#allocation2] sm:$0xff] %v292
    %297 = vst [vmem:[#allocation2 + $0x8] sm:$0xff] %v293
    %v298 = vld [vmem:[#allocation2] sm:$0xff]
    %v299 = vld [vmem:[#allocation2 + $0x8] sm:$0xff]
    %v300 = vld [vmem:[#allocation8] sm:$0xff]
    %v301 = vld [vmem:[#allocation8 + $0x8] sm:$0xff]
    %v302 = vld [vmem:[#allocation8 + $0x10] sm:$0xff]
    %v303 = vld [vmem:[#allocation8 + $0x18] sm:$0xff]
    %v304 = vld [vmem:[#allocation8 + $0x20] sm:$0xff]
    %v305 = vld [vmem:[#allocation8 + $0x28] sm:$0xff]
    %v306 = vld [vmem:[#allocation8 + $0x30] sm:$0xff]
    %v307 = vld [vmem:[#allocation8 + $0x38] sm:$0xff]
    %v308 = vld [vmem:[#allocation8 + $0x40] sm:$0xff]
    %v309 = vld [vmem:[#allocation8 + $0x48] sm:$0xff]
    %v310 = vld [vmem:[#allocation8 + $0x50] sm:$0xff]
    %v311 = vld [vmem:[#allocation8 + $0x58] sm:$0xff]
    %v312 = vld [vmem:[#allocation8 + $0x60] sm:$0xff]
    %v313 = vld [vmem:[#allocation8 + $0x68] sm:$0xff]
    %v314 = vld [vmem:[#allocation8 + $0x70] sm:$0xff]
    %v315 = vld [vmem:[#allocation8 + $0x78] sm:$0xff]
    %v316 = vld [vmem:[#allocation8 + $0x80] sm:$0xff]
    %v317 = vld [vmem:[#allocation8 + $0x88] sm:$0xff]
    %v318 = vld [vmem:[#allocation8 + $0x90] sm:$0xff]
    %v319 = vld [vmem:[#allocation8 + $0x98] sm:$0xff]
    %v320 = vld [vmem:[#allocation8 + $0xa0] sm:$0xff]
    %v321 = vld [vmem:[#allocation8 + $0xa8] sm:$0xff]
    %v322 = vld [vmem:[#allocation8 + $0xb0] sm:$0xff]
    %v323 = vld [vmem:[#allocation8 + $0xb8] sm:$0xff]
    %v324 = vld [vmem:[#allocation8 + $0xc0] sm:$0xff]
    %v325 = vld [vmem:[#allocation8 + $0xc8] sm:$0xff]
    %v326 = vld [vmem:[#allocation8 + $0xd0] sm:$0xff]
    %v327 = vld [vmem:[#allocation8 + $0xd8] sm:$0xff]
    %v328 = vld [vmem:[#allocation8 + $0xe0] sm:$0xff]
    %v329 = vld [vmem:[#allocation8 + $0xe8] sm:$0xff]
    %v330 = vld [vmem:[#allocation8 + $0xf0] sm:$0xff]
    %v331 = vld [vmem:[#allocation8 + $0xf8] sm:$0xff]
    %v332 = vld [vmem:[#allocation8 + $0x100] sm:$0xff]
    %v333 = vld [vmem:[#allocation8 + $0x108] sm:$0xff]
    %v334 = vld [vmem:[#allocation8 + $0x110] sm:$0xff]
    %v335 = vld [vmem:[#allocation8 + $0x118] sm:$0xff]
    %v336 = vld [vmem:[#allocation8 + $0x120] sm:$0xff]
    %v337 = vld [vmem:[#allocation8 + $0x128] sm:$0xff]
    %v338 = vld [vmem:[#allocation8 + $0x130] sm:$0xff]
    %v339 = vld [vmem:[#allocation8 + $0x138] sm:$0xff]
    %v340 = vld [vmem:[#allocation8 + $0x140] sm:$0xff]
    %v341 = vld [vmem:[#allocation8 + $0x148] sm:$0xff]
    %v342 = vld [vmem:[#allocation8 + $0x150] sm:$0xff]
    %v343 = vld [vmem:[#allocation8 + $0x158] sm:$0xff]
    %v344 = vld [vmem:[#allocation8 + $0x160] sm:$0xff]
    %v345 = vld [vmem:[#allocation8 + $0x168] sm:$0xff]
    %v346 = vld [vmem:[#allocation8 + $0x170] sm:$0xff]
    %v347 = vld [vmem:[#allocation8 + $0x178] sm:$0xff]
    %v348 = vld [vmem:[#allocation8 + $0x180] sm:$0xff]
    %v349 = vld [vmem:[#allocation8 + $0x188] sm:$0xff]
    %v350 = vld [vmem:[#allocation8 + $0x190] sm:$0xff]
    %v351 = vld [vmem:[#allocation8 + $0x198] sm:$0xff]
    %v352 = vld [vmem:[#allocation8 + $0x1a0] sm:$0xff]
    %v353 = vld [vmem:[#allocation8 + $0x1a8] sm:$0xff]
    %v354 = vld [vmem:[#allocation8 + $0x1b0] sm:$0xff]
    %v355 = vld [vmem:[#allocation8 + $0x1b8] sm:$0xff]
    %v356 = vld [vmem:[#allocation8 + $0x1c0] sm:$0xff]
    %v357 = vld [vmem:[#allocation8 + $0x1c8] sm:$0xff]
    %v358 = vld [vmem:[#allocation8 + $0x1d0] sm:$0xff]
    %v359 = vld [vmem:[#allocation8 + $0x1d8] sm:$0xff]
    %v360 = vld [vmem:[#allocation8 + $0x1e0] sm:$0xff]
    %v361 = vld [vmem:[#allocation8 + $0x1e8] sm:$0xff]
    %v362 = vld [vmem:[#allocation8 + $0x1f0] sm:$0xff]
    %v363 = vld [vmem:[#allocation8 + $0x1f8] sm:$0xff]
    %v364 = vld [vmem:[#allocation8 + $0x200] sm:$0xff]
    %v365 = vld [vmem:[#allocation8 + $0x208] sm:$0xff]
    %v366 = vld [vmem:[#allocation8 + $0x210] sm:$0xff]
    %v367 = vld [vmem:[#allocation8 + $0x218] sm:$0xff]
    %v368 = vld [vmem:[#allocation8 + $0x220] sm:$0xff]
    %v369 = vld [vmem:[#allocation8 + $0x228] sm:$0xff]
    %v370 = vld [vmem:[#allocation8 + $0x230] sm:$0xff]
    %v371 = vld [vmem:[#allocation8 + $0x238] sm:$0xff]
    %v372 = vld [vmem:[#allocation8 + $0x240] sm:$0xff]
    %v373 = vld [vmem:[#allocation8 + $0x248] sm:$0xff]
    %v374 = vld [vmem:[#allocation8 + $0x250] sm:$0xff]
    %v375 = vld [vmem:[#allocation8 + $0x258] sm:$0xff]
    %v376 = vld [vmem:[#allocation8 + $0x260] sm:$0xff]
    %v377 = vld [vmem:[#allocation8 + $0x268] sm:$0xff]
    %v378 = vld [vmem:[#allocation8 + $0x270] sm:$0xff]
    %v379 = vld [vmem:[#allocation8 + $0x278] sm:$0xff]
    %v380 = vld [vmem:[#allocation8 + $0x280] sm:$0xff]
    %v381 = vld [vmem:[#allocation8 + $0x288] sm:$0xff]
    %v382 = vld [vmem:[#allocation8 + $0x290] sm:$0xff]
    %v383 = vld [vmem:[#allocation8 + $0x298] sm:$0xff]
    %v384 = vld [vmem:[#allocation8 + $0x2a0] sm:$0xff]
    %v385 = vld [vmem:[#allocation8 + $0x2a8] sm:$0xff]
    %v386 = vld [vmem:[#allocation8 + $0x2b0] sm:$0xff]
    %v387 = vld [vmem:[#allocation8 + $0x2b8] sm:$0xff]
    %v388 = vld [vmem:[#allocation8 + $0x2c0] sm:$0xff]
    %v389 = vld [vmem:[#allocation8 + $0x2c8] sm:$0xff]
    %v390 = vld [vmem:[#allocation8 + $0x2d0] sm:$0xff]
    %v391 = vld [vmem:[#allocation8 + $0x2d8] sm:$0xff]
    %v392 = vld [vmem:[#allocation8 + $0x2e0] sm:$0xff]
    %v393 = vld [vmem:[#allocation8 + $0x2e8] sm:$0xff]
    %v394 = vld [vmem:[#allocation8 + $0x2f0] sm:$0xff]
    %v395 = vld [vmem:[#allocation8 + $0x2f8] sm:$0xff]
    %v396 = vld [vmem:[#allocation8 + $0x300] sm:$0xff]
    %v397 = vld [vmem:[#allocation8 + $0x308] sm:$0xff]
    %v398 = vld [vmem:[#allocation8 + $0x310] sm:$0xff]
    %v399 = vld [vmem:[#allocation8 + $0x318] sm:$0xff]
    %v400 = vld [vmem:[#allocation8 + $0x320] sm:$0xff]
    %v401 = vld [vmem:[#allocation8 + $0x328] sm:$0xff]
    %v402 = vld [vmem:[#allocation8 + $0x330] sm:$0xff]
    %v403 = vld [vmem:[#allocation8 + $0x338] sm:$0xff]
    %v404 = vld [vmem:[#allocation8 + $0x340] sm:$0xff]
    %v405 = vld [vmem:[#allocation8 + $0x348] sm:$0xff]
    %v406 = vld [vmem:[#allocation8 + $0x350] sm:$0xff]
    %v407 = vld [vmem:[#allocation8 + $0x358] sm:$0xff]
    %v408 = vld [vmem:[#allocation8 + $0x360] sm:$0xff]
    %v409 = vld [vmem:[#allocation8 + $0x368] sm:$0xff]
    %v410 = vld [vmem:[#allocation8 + $0x370] sm:$0xff]
    %v411 = vld [vmem:[#allocation8 + $0x378] sm:$0xff]
    %v412 = vld [vmem:[#allocation8 + $0x380] sm:$0xff]
    %v413 = vld [vmem:[#allocation8 + $0x388] sm:$0xff]
    %v414 = vld [vmem:[#allocation8 + $0x390] sm:$0xff]
    %v415 = vld [vmem:[#allocation8 + $0x398] sm:$0xff]
    %v416 = vld [vmem:[#allocation8 + $0x3a0] sm:$0xff]
    %v417 = vld [vmem:[#allocation8 + $0x3a8] sm:$0xff]
    %v418 = vld [vmem:[#allocation8 + $0x3b0] sm:$0xff]
    %v419 = vld [vmem:[#allocation8 + $0x3b8] sm:$0xff]
    %v420 = vld [vmem:[#allocation8 + $0x3c0] sm:$0xff]
    %v421 = vld [vmem:[#allocation8 + $0x3c8] sm:$0xff]
    %v422 = vld [vmem:[#allocation8 + $0x3d0] sm:$0xff]
    %v423 = vld [vmem:[#allocation8 + $0x3d8] sm:$0xff]
    %v424 = vld [vmem:[#allocation8 + $0x3e0] sm:$0xff]
    %v425 = vld [vmem:[#allocation8 + $0x3e8] sm:$0xff]
    %v426 = vld [vmem:[#allocation8 + $0x3f0] sm:$0xff]
    %v427 = vld [vmem:[#allocation8 + $0x3f8] sm:$0xff]
    %v428 = vld [vmem:[%s4] sm:$0xf]
    %v430 = vlaneseq
    %v431 = vshrl.u32 %v430, 7
    %v432 = vsub.s32 0, %v431
    %v433 = vrot.slane %v428, %v432
    %v434 = vlaneseq
    %v435 = vshrl.u32 %v434, 7
    %v436 = vsub.s32 1, %v435
    %v437 = vrot.slane %v428, %v436
    %v438 = vlaneseq
    %v439 = vshrl.u32 %v438, 7
    %v440 = vsub.s32 2, %v439
    %v441 = vrot.slane %v428, %v440
    %v442 = vlaneseq
    %v443 = vshrl.u32 %v442, 7
    %v444 = vsub.s32 3, %v443
    %v445 = vrot.slane %v428, %v444
    %v452 = vunpack.c.l.b16 %v298
    %v453 = vunpack.c.h.b16 %v298
    %v454 = vunpack.c.l.b16 %v299
    %v455 = vunpack.c.h.b16 %v299
    %v456 = vpack.c.b16 %v452, %v452
    %v457 = vpack.c.b16 %v453, %v453
    %v458 = vpack.c.b16 %v454, %v454
    %v459 = vpack.c.b16 %v455, %v455
    %v592 = vunpack.c.l.b16 %v300
    %v593 = vunpack.c.h.b16 %v300
    %v594 = vunpack.c.l.b16 %v301
    %v595 = vunpack.c.h.b16 %v301
    %v596 = vunpack.c.l.b16 %v302
    %v597 = vunpack.c.h.b16 %v302
    %v598 = vunpack.c.l.b16 %v303
    %v599 = vunpack.c.h.b16 %v303
    %v600 = vunpack.c.l.b16 %v304
    %v601 = vunpack.c.h.b16 %v304
    %v602 = vunpack.c.l.b16 %v305
    %v603 = vunpack.c.h.b16 %v305
    %v604 = vunpack.c.l.b16 %v306
    %v605 = vunpack.c.h.b16 %v306
    %v606 = vunpack.c.l.b16 %v307
    %v607 = vunpack.c.h.b16 %v307
    %v608 = vunpack.c.l.b16 %v308
    %v609 = vunpack.c.h.b16 %v308
    %v610 = vunpack.c.l.b16 %v309
    %v611 = vunpack.c.h.b16 %v309
    %v612 = vunpack.c.l.b16 %v310
    %v613 = vunpack.c.h.b16 %v310
    %v614 = vunpack.c.l.b16 %v311
    %v615 = vunpack.c.h.b16 %v311
    %v616 = vunpack.c.l.b16 %v312
    %v617 = vunpack.c.h.b16 %v312
    %v618 = vunpack.c.l.b16 %v313
    %v619 = vunpack.c.h.b16 %v313
    %v620 = vunpack.c.l.b16 %v314
    %v621 = vunpack.c.h.b16 %v314
    %v622 = vunpack.c.l.b16 %v315
    %v623 = vunpack.c.h.b16 %v315
    %v624 = vunpack.c.l.b16 %v316
    %v625 = vunpack.c.h.b16 %v316
    %v626 = vunpack.c.l.b16 %v317
    %v627 = vunpack.c.h.b16 %v317
    %v628 = vunpack.c.l.b16 %v318
    %v629 = vunpack.c.h.b16 %v318
    %v630 = vunpack.c.l.b16 %v319
    %v631 = vunpack.c.h.b16 %v319
    %v632 = vunpack.c.l.b16 %v320
    %v633 = vunpack.c.h.b16 %v320
    %v634 = vunpack.c.l.b16 %v321
    %v635 = vunpack.c.h.b16 %v321
    %v636 = vunpack.c.l.b16 %v322
    %v637 = vunpack.c.h.b16 %v322
    %v638 = vunpack.c.l.b16 %v323
    %v639 = vunpack.c.h.b16 %v323
    %v640 = vunpack.c.l.b16 %v324
    %v641 = vunpack.c.h.b16 %v324
    %v642 = vunpack.c.l.b16 %v325
    %v643 = vunpack.c.h.b16 %v325
    %v644 = vunpack.c.l.b16 %v326
    %v645 = vunpack.c.h.b16 %v326
    %v646 = vunpack.c.l.b16 %v327
    %v647 = vunpack.c.h.b16 %v327
    %v648 = vunpack.c.l.b16 %v328
    %v649 = vunpack.c.h.b16 %v328
    %v650 = vunpack.c.l.b16 %v329
    %v651 = vunpack.c.h.b16 %v329
    %v652 = vunpack.c.l.b16 %v330
    %v653 = vunpack.c.h.b16 %v330
    %v654 = vunpack.c.l.b16 %v331
    %v655 = vunpack.c.h.b16 %v331
    %v656 = vunpack.c.l.b16 %v332
    %v657 = vunpack.c.h.b16 %v332
    %v658 = vunpack.c.l.b16 %v333
    %v659 = vunpack.c.h.b16 %v333
    %v660 = vunpack.c.l.b16 %v334
    %v661 = vunpack.c.h.b16 %v334
    %v662 = vunpack.c.l.b16 %v335
    %v663 = vunpack.c.h.b16 %v335
    %v664 = vunpack.c.l.b16 %v336
    %v665 = vunpack.c.h.b16 %v336
    %v666 = vunpack.c.l.b16 %v337
    %v667 = vunpack.c.h.b16 %v337
    %v668 = vunpack.c.l.b16 %v338
    %v669 = vunpack.c.h.b16 %v338
    %v670 = vunpack.c.l.b16 %v339
    %v671 = vunpack.c.h.b16 %v339
    %v672 = vunpack.c.l.b16 %v340
    %v673 = vunpack.c.h.b16 %v340
    %v674 = vunpack.c.l.b16 %v341
    %v675 = vunpack.c.h.b16 %v341
    %v676 = vunpack.c.l.b16 %v342
    %v677 = vunpack.c.h.b16 %v342
    %v678 = vunpack.c.l.b16 %v343
    %v679 = vunpack.c.h.b16 %v343
    %v680 = vunpack.c.l.b16 %v344
    %v681 = vunpack.c.h.b16 %v344
    %v682 = vunpack.c.l.b16 %v345
    %v683 = vunpack.c.h.b16 %v345
    %v684 = vunpack.c.l.b16 %v346
    %v685 = vunpack.c.h.b16 %v346
    %v686 = vunpack.c.l.b16 %v347
    %v687 = vunpack.c.h.b16 %v347
    %v688 = vunpack.c.l.b16 %v348
    %v689 = vunpack.c.h.b16 %v348
    %v690 = vunpack.c.l.b16 %v349
    %v691 = vunpack.c.h.b16 %v349
    %v692 = vunpack.c.l.b16 %v350
    %v693 = vunpack.c.h.b16 %v350
    %v694 = vunpack.c.l.b16 %v351
    %v695 = vunpack.c.h.b16 %v351
    %v696 = vunpack.c.l.b16 %v352
    %v697 = vunpack.c.h.b16 %v352
    %v698 = vunpack.c.l.b16 %v353
    %v699 = vunpack.c.h.b16 %v353
    %v700 = vunpack.c.l.b16 %v354
    %v701 = vunpack.c.h.b16 %v354
    %v702 = vunpack.c.l.b16 %v355
    %v703 = vunpack.c.h.b16 %v355
    %v704 = vunpack.c.l.b16 %v356
    %v705 = vunpack.c.h.b16 %v356
    %v706 = vunpack.c.l.b16 %v357
    %v707 = vunpack.c.h.b16 %v357
    %v708 = vunpack.c.l.b16 %v358
    %v709 = vunpack.c.h.b16 %v358
    %v710 = vunpack.c.l.b16 %v359
    %v711 = vunpack.c.h.b16 %v359
    %v712 = vunpack.c.l.b16 %v360
    %v713 = vunpack.c.h.b16 %v360
    %v714 = vunpack.c.l.b16 %v361
    %v715 = vunpack.c.h.b16 %v361
    %v716 = vunpack.c.l.b16 %v362
    %v717 = vunpack.c.h.b16 %v362
    %v718 = vunpack.c.l.b16 %v363
    %v719 = vunpack.c.h.b16 %v363
    %v720 = vunpack.c.l.b16 %v364
    %v721 = vunpack.c.h.b16 %v364
    %v722 = vunpack.c.l.b16 %v365
    %v723 = vunpack.c.h.b16 %v365
    %v724 = vunpack.c.l.b16 %v366
    %v725 = vunpack.c.h.b16 %v366
    %v726 = vunpack.c.l.b16 %v367
    %v727 = vunpack.c.h.b16 %v367
    %v728 = vunpack.c.l.b16 %v368
    %v729 = vunpack.c.h.b16 %v368
    %v730 = vunpack.c.l.b16 %v369
    %v731 = vunpack.c.h.b16 %v369
    %v732 = vunpack.c.l.b16 %v370
    %v733 = vunpack.c.h.b16 %v370
    %v734 = vunpack.c.l.b16 %v371
    %v735 = vunpack.c.h.b16 %v371
    %v736 = vunpack.c.l.b16 %v372
    %v737 = vunpack.c.h.b16 %v372
    %v738 = vunpack.c.l.b16 %v373
    %v739 = vunpack.c.h.b16 %v373
    %v740 = vunpack.c.l.b16 %v374
    %v741 = vunpack.c.h.b16 %v374
    %v742 = vunpack.c.l.b16 %v375
    %v743 = vunpack.c.h.b16 %v375
    %v744 = vunpack.c.l.b16 %v376
    %v745 = vunpack.c.h.b16 %v376
    %v746 = vunpack.c.l.b16 %v377
    %v747 = vunpack.c.h.b16 %v377
    %v748 = vunpack.c.l.b16 %v378
    %v749 = vunpack.c.h.b16 %v378
    %v750 = vunpack.c.l.b16 %v379
    %v751 = vunpack.c.h.b16 %v379
    %v752 = vunpack.c.l.b16 %v380
    %v753 = vunpack.c.h.b16 %v380
    %v754 = vunpack.c.l.b16 %v381
    %v755 = vunpack.c.h.b16 %v381
    %v756 = vunpack.c.l.b16 %v382
    %v757 = vunpack.c.h.b16 %v382
    %v758 = vunpack.c.l.b16 %v383
    %v759 = vunpack.c.h.b16 %v383
    %v760 = vunpack.c.l.b16 %v384
    %v761 = vunpack.c.h.b16 %v384
    %v762 = vunpack.c.l.b16 %v385
    %v763 = vunpack.c.h.b16 %v385
    %v764 = vunpack.c.l.b16 %v386
    %v765 = vunpack.c.h.b16 %v386
    %v766 = vunpack.c.l.b16 %v387
    %v767 = vunpack.c.h.b16 %v387
    %v768 = vunpack.c.l.b16 %v388
    %v769 = vunpack.c.h.b16 %v388
    %v770 = vunpack.c.l.b16 %v389
    %v771 = vunpack.c.h.b16 %v389
    %v772 = vunpack.c.l.b16 %v390
    %v773 = vunpack.c.h.b16 %v390
    %v774 = vunpack.c.l.b16 %v391
    %v775 = vunpack.c.h.b16 %v391
    %v776 = vunpack.c.l.b16 %v392
    %v777 = vunpack.c.h.b16 %v392
    %v778 = vunpack.c.l.b16 %v393
    %v779 = vunpack.c.h.b16 %v393
    %v780 = vunpack.c.l.b16 %v394
    %v781 = vunpack.c.h.b16 %v394
    %v782 = vunpack.c.l.b16 %v395
    %v783 = vunpack.c.h.b16 %v395
    %v784 = vunpack.c.l.b16 %v396
    %v785 = vunpack.c.h.b16 %v396
    %v786 = vunpack.c.l.b16 %v397
    %v787 = vunpack.c.h.b16 %v397
    %v788 = vunpack.c.l.b16 %v398
    %v789 = vunpack.c.h.b16 %v398
    %v790 = vunpack.c.l.b16 %v399
    %v791 = vunpack.c.h.b16 %v399
    %v792 = vunpack.c.l.b16 %v400
    %v793 = vunpack.c.h.b16 %v400
    %v794 = vunpack.c.l.b16 %v401
    %v795 = vunpack.c.h.b16 %v401
    %v796 = vunpack.c.l.b16 %v402
    %v797 = vunpack.c.h.b16 %v402
    %v798 = vunpack.c.l.b16 %v403
    %v799 = vunpack.c.h.b16 %v403
    %v800 = vunpack.c.l.b16 %v404
    %v801 = vunpack.c.h.b16 %v404
    %v802 = vunpack.c.l.b16 %v405
    %v803 = vunpack.c.h.b16 %v405
    %v804 = vunpack.c.l.b16 %v406
    %v805 = vunpack.c.h.b16 %v406
    %v806 = vunpack.c.l.b16 %v407
    %v807 = vunpack.c.h.b16 %v407
    %v808 = vunpack.c.l.b16 %v408
    %v809 = vunpack.c.h.b16 %v408
    %v810 = vunpack.c.l.b16 %v409
    %v811 = vunpack.c.h.b16 %v409
    %v812 = vunpack.c.l.b16 %v410
    %v813 = vunpack.c.h.b16 %v410
    %v814 = vunpack.c.l.b16 %v411
    %v815 = vunpack.c.h.b16 %v411
    %v816 = vunpack.c.l.b16 %v412
    %v817 = vunpack.c.h.b16 %v412
    %v818 = vunpack.c.l.b16 %v413
    %v819 = vunpack.c.h.b16 %v413
    %v820 = vunpack.c.l.b16 %v414
    %v821 = vunpack.c.h.b16 %v414
    %v822 = vunpack.c.l.b16 %v415
    %v823 = vunpack.c.h.b16 %v415
    %v824 = vunpack.c.l.b16 %v416
    %v825 = vunpack.c.h.b16 %v416
    %v826 = vunpack.c.l.b16 %v417
    %v827 = vunpack.c.h.b16 %v417
    %v828 = vunpack.c.l.b16 %v418
    %v829 = vunpack.c.h.b16 %v418
    %v830 = vunpack.c.l.b16 %v419
    %v831 = vunpack.c.h.b16 %v419
    %v832 = vunpack.c.l.b16 %v420
    %v833 = vunpack.c.h.b16 %v420
    %v834 = vunpack.c.l.b16 %v421
    %v835 = vunpack.c.h.b16 %v421
    %v836 = vunpack.c.l.b16 %v422
    %v837 = vunpack.c.h.b16 %v422
    %v838 = vunpack.c.l.b16 %v423
    %v839 = vunpack.c.h.b16 %v423
    %v840 = vunpack.c.l.b16 %v424
    %v841 = vunpack.c.h.b16 %v424
    %v842 = vunpack.c.l.b16 %v425
    %v843 = vunpack.c.h.b16 %v425
    %v844 = vunpack.c.l.b16 %v426
    %v845 = vunpack.c.h.b16 %v426
    %v846 = vunpack.c.l.b16 %v427
    %v847 = vunpack.c.h.b16 %v427
    %v848 = vpack.c.b16 %v596, %v592
    %v849 = vpack.c.b16 %v597, %v593
    %v850 = vpack.c.b16 %v598, %v594
    %v851 = vpack.c.b16 %v599, %v595
    %v852 = vpack.c.b16 %v604, %v600
    %v853 = vpack.c.b16 %v605, %v601
    %v854 = vpack.c.b16 %v606, %v602
    %v855 = vpack.c.b16 %v607, %v603
    %v856 = vpack.c.b16 %v612, %v608
    %v857 = vpack.c.b16 %v613, %v609
    %v858 = vpack.c.b16 %v614, %v610
    %v859 = vpack.c.b16 %v615, %v611
    %v860 = vpack.c.b16 %v620, %v616
    %v861 = vpack.c.b16 %v621, %v617
    %v862 = vpack.c.b16 %v622, %v618
    %v863 = vpack.c.b16 %v623, %v619
    %v864 = vpack.c.b16 %v628, %v624
    %v865 = vpack.c.b16 %v629, %v625
    %v866 = vpack.c.b16 %v630, %v626
    %v867 = vpack.c.b16 %v631, %v627
    %v868 = vpack.c.b16 %v636, %v632
    %v869 = vpack.c.b16 %v637, %v633
    %v870 = vpack.c.b16 %v638, %v634
    %v871 = vpack.c.b16 %v639, %v635
    %v872 = vpack.c.b16 %v644, %v640
    %v873 = vpack.c.b16 %v645, %v641
    %v874 = vpack.c.b16 %v646, %v642
    %v875 = vpack.c.b16 %v647, %v643
    %v876 = vpack.c.b16 %v652, %v648
    %v877 = vpack.c.b16 %v653, %v649
    %v878 = vpack.c.b16 %v654, %v650
    %v879 = vpack.c.b16 %v655, %v651
    %v880 = vpack.c.b16 %v660, %v656
    %v881 = vpack.c.b16 %v661, %v657
    %v882 = vpack.c.b16 %v662, %v658
    %v883 = vpack.c.b16 %v663, %v659
    %v884 = vpack.c.b16 %v668, %v664
    %v885 = vpack.c.b16 %v669, %v665
    %v886 = vpack.c.b16 %v670, %v666
    %v887 = vpack.c.b16 %v671, %v667
    %v888 = vpack.c.b16 %v676, %v672
    %v889 = vpack.c.b16 %v677, %v673
    %v890 = vpack.c.b16 %v678, %v674
    %v891 = vpack.c.b16 %v679, %v675
    %v892 = vpack.c.b16 %v684, %v680
    %v893 = vpack.c.b16 %v685, %v681
    %v894 = vpack.c.b16 %v686, %v682
    %v895 = vpack.c.b16 %v687, %v683
    %v896 = vpack.c.b16 %v692, %v688
    %v897 = vpack.c.b16 %v693, %v689
    %v898 = vpack.c.b16 %v694, %v690
    %v899 = vpack.c.b16 %v695, %v691
    %v900 = vpack.c.b16 %v700, %v696
    %v901 = vpack.c.b16 %v701, %v697
    %v902 = vpack.c.b16 %v702, %v698
    %v903 = vpack.c.b16 %v703, %v699
    %v904 = vpack.c.b16 %v708, %v704
    %v905 = vpack.c.b16 %v709, %v705
    %v906 = vpack.c.b16 %v710, %v706
    %v907 = vpack.c.b16 %v711, %v707
    %v908 = vpack.c.b16 %v716, %v712
    %v909 = vpack.c.b16 %v717, %v713
    %v910 = vpack.c.b16 %v718, %v714
    %v911 = vpack.c.b16 %v719, %v715
    %v912 = vpack.c.b16 %v724, %v720
    %v913 = vpack.c.b16 %v725, %v721
    %v914 = vpack.c.b16 %v726, %v722
    %v915 = vpack.c.b16 %v727, %v723
    %v916 = vpack.c.b16 %v732, %v728
    %v917 = vpack.c.b16 %v733, %v729
    %v918 = vpack.c.b16 %v734, %v730
    %v919 = vpack.c.b16 %v735, %v731
    %v920 = vpack.c.b16 %v740, %v736
    %v921 = vpack.c.b16 %v741, %v737
    %v922 = vpack.c.b16 %v742, %v738
    %v923 = vpack.c.b16 %v743, %v739
    %v924 = vpack.c.b16 %v748, %v744
    %v925 = vpack.c.b16 %v749, %v745
    %v926 = vpack.c.b16 %v750, %v746
    %v927 = vpack.c.b16 %v751, %v747
    %v928 = vpack.c.b16 %v756, %v752
    %v929 = vpack.c.b16 %v757, %v753
    %v930 = vpack.c.b16 %v758, %v754
    %v931 = vpack.c.b16 %v759, %v755
    %v932 = vpack.c.b16 %v764, %v760
    %v933 = vpack.c.b16 %v765, %v761
    %v934 = vpack.c.b16 %v766, %v762
    %v935 = vpack.c.b16 %v767, %v763
    %v936 = vpack.c.b16 %v772, %v768
    %v937 = vpack.c.b16 %v773, %v769
    %v938 = vpack.c.b16 %v774, %v770
    %v939 = vpack.c.b16 %v775, %v771
    %v940 = vpack.c.b16 %v780, %v776
    %v941 = vpack.c.b16 %v781, %v777
    %v942 = vpack.c.b16 %v782, %v778
    %v943 = vpack.c.b16 %v783, %v779
    %v944 = vpack.c.b16 %v788, %v784
    %v945 = vpack.c.b16 %v789, %v785
    %v946 = vpack.c.b16 %v790, %v786
    %v947 = vpack.c.b16 %v791, %v787
    %v948 = vpack.c.b16 %v796, %v792
    %v949 = vpack.c.b16 %v797, %v793
    %v950 = vpack.c.b16 %v798, %v794
    %v951 = vpack.c.b16 %v799, %v795
    %v952 = vpack.c.b16 %v804, %v800
    %v953 = vpack.c.b16 %v805, %v801
    %v954 = vpack.c.b16 %v806, %v802
    %v955 = vpack.c.b16 %v807, %v803
    %v956 = vpack.c.b16 %v812, %v808
    %v957 = vpack.c.b16 %v813, %v809
    %v958 = vpack.c.b16 %v814, %v810
    %v959 = vpack.c.b16 %v815, %v811
    %v960 = vpack.c.b16 %v820, %v816
    %v961 = vpack.c.b16 %v821, %v817
    %v962 = vpack.c.b16 %v822, %v818
    %v963 = vpack.c.b16 %v823, %v819
    %v964 = vpack.c.b16 %v828, %v824
    %v965 = vpack.c.b16 %v829, %v825
    %v966 = vpack.c.b16 %v830, %v826
    %v967 = vpack.c.b16 %v831, %v827
    %v968 = vpack.c.b16 %v836, %v832
    %v969 = vpack.c.b16 %v837, %v833
    %v970 = vpack.c.b16 %v838, %v834
    %v971 = vpack.c.b16 %v839, %v835
    %v972 = vpack.c.b16 %v844, %v840
    %v973 = vpack.c.b16 %v845, %v841
    %v974 = vpack.c.b16 %v846, %v842
    %v975 = vpack.c.b16 %v847, %v843
    %1104 = vmatprep.subr.bf16.mxu0 %v849
    %1105 = vmatpush1.bf16.msra.mxu0 %v848
    %1106 = vmatprep.subr.bf16.mxu0 %v853
    %1107 = vmatpush1.bf16.msra.mxu0 %v852
    %1108 = vmatprep.subr.bf16.mxu0 %v857
    %1109 = vmatpush1.bf16.msra.mxu0 %v856
    %1110 = vmatprep.subr.bf16.mxu0 %v861
    %1111 = vmatpush1.bf16.msra.mxu0 %v860
    %1112 = vmatprep.subr.bf16.mxu0 %v865
    %1113 = vmatpush1.bf16.msra.mxu0 %v864
    %1114 = vmatprep.subr.bf16.mxu0 %v869
    %1115 = vmatpush1.bf16.msra.mxu0 %v868
    %1116 = vmatprep.subr.bf16.mxu0 %v873
    %1117 = vmatpush1.bf16.msra.mxu0 %v872
    %1118 = vmatprep.subr.bf16.mxu0 %v877
    %1119 = vmatpush1.bf16.msra.mxu0 %v876
    %1120 = vmatprep.subr.bf16.mxu0 %v881
    %1121 = vmatpush1.bf16.msra.mxu0 %v880
    %1122 = vmatprep.subr.bf16.mxu0 %v885
    %1123 = vmatpush1.bf16.msra.mxu0 %v884
    %1124 = vmatprep.subr.bf16.mxu0 %v889
    %1125 = vmatpush1.bf16.msra.mxu0 %v888
    %1126 = vmatprep.subr.bf16.mxu0 %v893
    %1127 = vmatpush1.bf16.msra.mxu0 %v892
    %1128 = vmatprep.subr.bf16.mxu0 %v897
    %1129 = vmatpush1.bf16.msra.mxu0 %v896
    %1130 = vmatprep.subr.bf16.mxu0 %v901
    %1131 = vmatpush1.bf16.msra.mxu0 %v900
    %1132 = vmatprep.subr.bf16.mxu0 %v905
    %1133 = vmatpush1.bf16.msra.mxu0 %v904
    %1134 = vmatprep.subr.bf16.mxu0 %v909
    %1135 = vmatpush1.bf16.msra.mxu0 %v908
    %1136 = vmatprep.mubr.bf16.mxu0 %v457
    %1137 = vmatmul.mubr.bf16.gmra.mrb[0].mxu0 %v456
    %v1138 = vpop.f32.mrb[0].mxu0
    %v1139 = vadd.f32 %v433, %v1138
    %v1140 = vpop.f32.mrb[0].mxu0
    %v1141 = vadd.f32 %v437, %v1140
    %v1142 = vpop.f32.mrb[0].mxu0
    %v1143 = vpop.f32.mrb[0].mxu0
    %1144 = vdwg.mxu0
    %1145 = vmatprep.subr.bf16.mxu0 %v913
    %1146 = vmatpush1.bf16.msra.mxu0 %v912
    %1147 = vmatprep.subr.bf16.mxu0 %v917
    %1148 = vmatpush1.bf16.msra.mxu0 %v916
    %1149 = vmatprep.subr.bf16.mxu0 %v921
    %1150 = vmatpush1.bf16.msra.mxu0 %v920
    %1151 = vmatprep.subr.bf16.mxu0 %v925
    %1152 = vmatpush1.bf16.msra.mxu0 %v924
    %1153 = vmatprep.subr.bf16.mxu0 %v929
    %1154 = vmatpush1.bf16.msra.mxu0 %v928
    %1155 = vmatprep.subr.bf16.mxu0 %v933
    %1156 = vmatpush1.bf16.msra.mxu0 %v932
    %1157 = vmatprep.subr.bf16.mxu0 %v937
    %1158 = vmatpush1.bf16.msra.mxu0 %v936
    %1159 = vmatprep.subr.bf16.mxu0 %v941
    %1160 = vmatpush1.bf16.msra.mxu0 %v940
    %1161 = vmatprep.subr.bf16.mxu0 %v945
    %1162 = vmatpush1.bf16.msra.mxu0 %v944
    %1163 = vmatprep.subr.bf16.mxu0 %v949
    %1164 = vmatpush1.bf16.msra.mxu0 %v948
    %1165 = vmatprep.subr.bf16.mxu0 %v953
    %1166 = vmatpush1.bf16.msra.mxu0 %v952
    %1167 = vmatprep.subr.bf16.mxu0 %v957
    %1168 = vmatpush1.bf16.msra.mxu0 %v956
    %1169 = vmatprep.subr.bf16.mxu0 %v961
    %1170 = vmatpush1.bf16.msra.mxu0 %v960
    %1171 = vmatprep.subr.bf16.mxu0 %v965
    %1172 = vmatpush1.bf16.msra.mxu0 %v964
    %1173 = vmatprep.subr.bf16.mxu0 %v969
    %1174 = vmatpush1.bf16.msra.mxu0 %v968
    %1175 = vmatprep.subr.bf16.mxu0 %v973
    %1176 = vmatpush1.bf16.msra.mxu0 %v972
    %1177 = vmatprep.mubr.bf16.mxu0 %v459
    %1178 = vmatmul.mubr.bf16.gmra.mrb[0].mxu0 %v458
    %v1179 = vpop.f32.mrb[0].mxu0
    %v1180 = vadd.f32 %v1139, %v1179
    %v1181 = vpop.f32.mrb[0].mxu0
    %v1182 = vadd.f32 %v1141, %v1181
    %v1183 = vpop.f32.mrb[0].mxu0
    %v1184 = vpop.f32.mrb[0].mxu0
    %1185 = vdwg.mxu0
    %1186 = vmatprep.subr.bf16.mxu0 %v851
    %1187 = vmatpush1.bf16.msra.mxu0 %v850
    %1188 = vmatprep.subr.bf16.mxu0 %v855
    %1189 = vmatpush1.bf16.msra.mxu0 %v854
    %1190 = vmatprep.subr.bf16.mxu0 %v859
    %1191 = vmatpush1.bf16.msra.mxu0 %v858
    %1192 = vmatprep.subr.bf16.mxu0 %v863
    %1193 = vmatpush1.bf16.msra.mxu0 %v862
    %1194 = vmatprep.subr.bf16.mxu0 %v867
    %1195 = vmatpush1.bf16.msra.mxu0 %v866
    %1196 = vmatprep.subr.bf16.mxu0 %v871
    %1197 = vmatpush1.bf16.msra.mxu0 %v870
    %1198 = vmatprep.subr.bf16.mxu0 %v875
    %1199 = vmatpush1.bf16.msra.mxu0 %v874
    %1200 = vmatprep.subr.bf16.mxu0 %v879
    %1201 = vmatpush1.bf16.msra.mxu0 %v878
    %1202 = vmatprep.subr.bf16.mxu0 %v883
    %1203 = vmatpush1.bf16.msra.mxu0 %v882
    %1204 = vmatprep.subr.bf16.mxu0 %v887
    %1205 = vmatpush1.bf16.msra.mxu0 %v886
    %1206 = vmatprep.subr.bf16.mxu0 %v891
    %1207 = vmatpush1.bf16.msra.mxu0 %v890
    %1208 = vmatprep.subr.bf16.mxu0 %v895
    %1209 = vmatpush1.bf16.msra.mxu0 %v894
    %1210 = vmatprep.subr.bf16.mxu0 %v899
    %1211 = vmatpush1.bf16.msra.mxu0 %v898
    %1212 = vmatprep.subr.bf16.mxu0 %v903
    %1213 = vmatpush1.bf16.msra.mxu0 %v902
    %1214 = vmatprep.subr.bf16.mxu0 %v907
    %1215 = vmatpush1.bf16.msra.mxu0 %v906
    %1216 = vmatprep.subr.bf16.mxu0 %v911
    %1217 = vmatpush1.bf16.msra.mxu0 %v910
    %1218 = vmatprep.mubr.bf16.mxu0 %v457
    %1219 = vmatmul.mubr.bf16.gmra.mrb[0].mxu0 %v456
    %v1220 = vpop.f32.mrb[0].mxu0
    %v1221 = vadd.f32 %v441, %v1220
    %v1222 = vpop.f32.mrb[0].mxu0
    %v1223 = vadd.f32 %v445, %v1222
    %v1224 = vpop.f32.mrb[0].mxu0
    %v1225 = vpop.f32.mrb[0].mxu0
    %1226 = vdwg.mxu0
    %1227 = vmatprep.subr.bf16.mxu0 %v915
    %1228 = vmatpush1.bf16.msra.mxu0 %v914
    %1229 = vmatprep.subr.bf16.mxu0 %v919
    %1230 = vmatpush1.bf16.msra.mxu0 %v918
    %1231 = vmatprep.subr.bf16.mxu0 %v923
    %1232 = vmatpush1.bf16.msra.mxu0 %v922
    %1233 = vmatprep.subr.bf16.mxu0 %v927
    %1234 = vmatpush1.bf16.msra.mxu0 %v926
    %1235 = vmatprep.subr.bf16.mxu0 %v931
    %1236 = vmatpush1.bf16.msra.mxu0 %v930
    %1237 = vmatprep.subr.bf16.mxu0 %v935
    %1238 = vmatpush1.bf16.msra.mxu0 %v934
    %1239 = vmatprep.subr.bf16.mxu0 %v939
    %1240 = vmatpush1.bf16.msra.mxu0 %v938
    %1241 = vmatprep.subr.bf16.mxu0 %v943
    %1242 = vmatpush1.bf16.msra.mxu0 %v942
    %1243 = vmatprep.subr.bf16.mxu0 %v947
    %1244 = vmatpush1.bf16.msra.mxu0 %v946
    %1245 = vmatprep.subr.bf16.mxu0 %v951
    %1246 = vmatpush1.bf16.msra.mxu0 %v950
    %1247 = vmatprep.subr.bf16.mxu0 %v955
    %1248 = vmatpush1.bf16.msra.mxu0 %v954
    %1249 = vmatprep.subr.bf16.mxu0 %v959
    %1250 = vmatpush1.bf16.msra.mxu0 %v958
    %1251 = vmatprep.subr.bf16.mxu0 %v963
    %1252 = vmatpush1.bf16.msra.mxu0 %v962
    %1253 = vmatprep.subr.bf16.mxu0 %v967
    %1254 = vmatpush1.bf16.msra.mxu0 %v966
    %1255 = vmatprep.subr.bf16.mxu0 %v971
    %1256 = vmatpush1.bf16.msra.mxu0 %v970
    %1257 = vmatprep.subr.bf16.mxu0 %v975
    %1258 = vmatpush1.bf16.msra.mxu0 %v974
    %1259 = vmatprep.mubr.bf16.mxu0 %v459
    %1260 = vmatmul.mubr.bf16.gmra.mrb[0].mxu0 %v458
    %v1261 = vpop.f32.mrb[0].mxu0
    %v1262 = vadd.f32 %v1221, %v1261
    %v1263 = vpop.f32.mrb[0].mxu0
    %v1264 = vadd.f32 %v1223, %v1263
    %v1265 = vpop.f32.mrb[0].mxu0
    %v1266 = vpop.f32.mrb[0].mxu0
    %1267 = vdwg.mxu0
    %v1268 = vmul.f32 %v1180, 0.01
    %v1269 = vmul.f32 %v1182, 0.01
    %v1270 = vmul.f32 %v1262, 0.01
    %v1271 = vmul.f32 %v1264, 0.01
    %v1272 = vmax.f32 %v1180, %v1268
    %v1273 = vmax.f32 %v1182, %v1269
    %v1274 = vmax.f32 %v1262, %v1270
    %v1275 = vmax.f32 %v1264, %v1271
    %v1276 = vpack.c.bf16 %v1272, %v1272
    %v1277 = vpack.c.bf16 %v1273, %v1273
    %v1278 = vpack.c.bf16 %v1274, %v1274
    %v1279 = vpack.c.bf16 %v1275, %v1275
    %v1284 = vunpack.c.l.b16 %v1276
    %v1285 = vunpack.c.l.b16 %v1277
    %v1286 = vunpack.c.l.b16 %v1278
    %v1287 = vunpack.c.l.b16 %v1279
    %v1288 = vpack.c.b16 %v1285, %v1284
    %v1289 = vpack.c.b16 %v1287, %v1286
    %1292 = vst [vmem:[#allocation2] sm:$0xff] %v1288
    %1293 = vst [vmem:[#allocation2 + $0x8] sm:$0xff] %v1289
    %v1294 = vld [vmem:[#allocation2] sm:$0xff]
    %v1295 = vld [vmem:[#allocation2 + $0x8] sm:$0xff]
    %v1296 = vld [vmem:[#allocation9] sm:$0xff]
    %v1297 = vld [vmem:[#allocation9 + $0x8] sm:$0xff]
    %v1298 = vld [vmem:[#allocation9 + $0x10] sm:$0xff]
    %v1299 = vld [vmem:[#allocation9 + $0x18] sm:$0xff]
    %v1300 = vld [vmem:[#allocation9 + $0x20] sm:$0xff]
    %v1301 = vld [vmem:[#allocation9 + $0x28] sm:$0xff]
    %v1302 = vld [vmem:[#allocation9 + $0x30] sm:$0xff]
    %v1303 = vld [vmem:[#allocation9 + $0x38] sm:$0xff]
    %v1304 = vld [vmem:[#allocation9 + $0x40] sm:$0xff]
    %v1305 = vld [vmem:[#allocation9 + $0x48] sm:$0xff]
    %v1306 = vld [vmem:[#allocation9 + $0x50] sm:$0xff]
    %v1307 = vld [vmem:[#allocation9 + $0x58] sm:$0xff]
    %v1308 = vld [vmem:[#allocation9 + $0x60] sm:$0xff]
    %v1309 = vld [vmem:[#allocation9 + $0x68] sm:$0xff]
    %v1310 = vld [vmem:[#allocation9 + $0x70] sm:$0xff]
    %v1311 = vld [vmem:[#allocation9 + $0x78] sm:$0xff]
    %v1312 = vld [vmem:[#allocation9 + $0x80] sm:$0xff]
    %v1313 = vld [vmem:[#allocation9 + $0x88] sm:$0xff]
    %v1314 = vld [vmem:[#allocation9 + $0x90] sm:$0xff]
    %v1315 = vld [vmem:[#allocation9 + $0x98] sm:$0xff]
    %v1316 = vld [vmem:[#allocation9 + $0xa0] sm:$0xff]
    %v1317 = vld [vmem:[#allocation9 + $0xa8] sm:$0xff]
    %v1318 = vld [vmem:[#allocation9 + $0xb0] sm:$0xff]
    %v1319 = vld [vmem:[#allocation9 + $0xb8] sm:$0xff]
    %v1320 = vld [vmem:[#allocation9 + $0xc0] sm:$0xff]
    %v1321 = vld [vmem:[#allocation9 + $0xc8] sm:$0xff]
    %v1322 = vld [vmem:[#allocation9 + $0xd0] sm:$0xff]
    %v1323 = vld [vmem:[#allocation9 + $0xd8] sm:$0xff]
    %v1324 = vld [vmem:[#allocation9 + $0xe0] sm:$0xff]
    %v1325 = vld [vmem:[#allocation9 + $0xe8] sm:$0xff]
    %v1326 = vld [vmem:[#allocation9 + $0xf0] sm:$0xff]
    %v1327 = vld [vmem:[#allocation9 + $0xf8] sm:$0xff]
    %v1328 = vld [vmem:[#allocation9 + $0x100] sm:$0xff]
    %v1329 = vld [vmem:[#allocation9 + $0x108] sm:$0xff]
    %v1330 = vld [vmem:[#allocation9 + $0x110] sm:$0xff]
    %v1331 = vld [vmem:[#allocation9 + $0x118] sm:$0xff]
    %v1332 = vld [vmem:[#allocation9 + $0x120] sm:$0xff]
    %v1333 = vld [vmem:[#allocation9 + $0x128] sm:$0xff]
    %v1334 = vld [vmem:[#allocation9 + $0x130] sm:$0xff]
    %v1335 = vld [vmem:[#allocation9 + $0x138] sm:$0xff]
    %v1336 = vld [vmem:[#allocation9 + $0x140] sm:$0xff]
    %v1337 = vld [vmem:[#allocation9 + $0x148] sm:$0xff]
    %v1338 = vld [vmem:[#allocation9 + $0x150] sm:$0xff]
    %v1339 = vld [vmem:[#allocation9 + $0x158] sm:$0xff]
    %v1340 = vld [vmem:[#allocation9 + $0x160] sm:$0xff]
    %v1341 = vld [vmem:[#allocation9 + $0x168] sm:$0xff]
    %v1342 = vld [vmem:[#allocation9 + $0x170] sm:$0xff]
    %v1343 = vld [vmem:[#allocation9 + $0x178] sm:$0xff]
    %v1344 = vld [vmem:[#allocation9 + $0x180] sm:$0xff]
    %v1345 = vld [vmem:[#allocation9 + $0x188] sm:$0xff]
    %v1346 = vld [vmem:[#allocation9 + $0x190] sm:$0xff]
    %v1347 = vld [vmem:[#allocation9 + $0x198] sm:$0xff]
    %v1348 = vld [vmem:[#allocation9 + $0x1a0] sm:$0xff]
    %v1349 = vld [vmem:[#allocation9 + $0x1a8] sm:$0xff]
    %v1350 = vld [vmem:[#allocation9 + $0x1b0] sm:$0xff]
    %v1351 = vld [vmem:[#allocation9 + $0x1b8] sm:$0xff]
    %v1352 = vld [vmem:[#allocation9 + $0x1c0] sm:$0xff]
    %v1353 = vld [vmem:[#allocation9 + $0x1c8] sm:$0xff]
    %v1354 = vld [vmem:[#allocation9 + $0x1d0] sm:$0xff]
    %v1355 = vld [vmem:[#allocation9 + $0x1d8] sm:$0xff]
    %v1356 = vld [vmem:[#allocation9 + $0x1e0] sm:$0xff]
    %v1357 = vld [vmem:[#allocation9 + $0x1e8] sm:$0xff]
    %v1358 = vld [vmem:[#allocation9 + $0x1f0] sm:$0xff]
    %v1359 = vld [vmem:[#allocation9 + $0x1f8] sm:$0xff]
    %v1360 = vld [vmem:[#allocation9 + $0x200] sm:$0xff]
    %v1361 = vld [vmem:[#allocation9 + $0x208] sm:$0xff]
    %v1362 = vld [vmem:[#allocation9 + $0x210] sm:$0xff]
    %v1363 = vld [vmem:[#allocation9 + $0x218] sm:$0xff]
    %v1364 = vld [vmem:[#allocation9 + $0x220] sm:$0xff]
    %v1365 = vld [vmem:[#allocation9 + $0x228] sm:$0xff]
    %v1366 = vld [vmem:[#allocation9 + $0x230] sm:$0xff]
    %v1367 = vld [vmem:[#allocation9 + $0x238] sm:$0xff]
    %v1368 = vld [vmem:[#allocation9 + $0x240] sm:$0xff]
    %v1369 = vld [vmem:[#allocation9 + $0x248] sm:$0xff]
    %v1370 = vld [vmem:[#allocation9 + $0x250] sm:$0xff]
    %v1371 = vld [vmem:[#allocation9 + $0x258] sm:$0xff]
    %v1372 = vld [vmem:[#allocation9 + $0x260] sm:$0xff]
    %v1373 = vld [vmem:[#allocation9 + $0x268] sm:$0xff]
    %v1374 = vld [vmem:[#allocation9 + $0x270] sm:$0xff]
    %v1375 = vld [vmem:[#allocation9 + $0x278] sm:$0xff]
    %v1376 = vld [vmem:[#allocation9 + $0x280] sm:$0xff]
    %v1377 = vld [vmem:[#allocation9 + $0x288] sm:$0xff]
    %v1378 = vld [vmem:[#allocation9 + $0x290] sm:$0xff]
    %v1379 = vld [vmem:[#allocation9 + $0x298] sm:$0xff]
    %v1380 = vld [vmem:[#allocation9 + $0x2a0] sm:$0xff]
    %v1381 = vld [vmem:[#allocation9 + $0x2a8] sm:$0xff]
    %v1382 = vld [vmem:[#allocation9 + $0x2b0] sm:$0xff]
    %v1383 = vld [vmem:[#allocation9 + $0x2b8] sm:$0xff]
    %v1384 = vld [vmem:[#allocation9 + $0x2c0] sm:$0xff]
    %v1385 = vld [vmem:[#allocation9 + $0x2c8] sm:$0xff]
    %v1386 = vld [vmem:[#allocation9 + $0x2d0] sm:$0xff]
    %v1387 = vld [vmem:[#allocation9 + $0x2d8] sm:$0xff]
    %v1388 = vld [vmem:[#allocation9 + $0x2e0] sm:$0xff]
    %v1389 = vld [vmem:[#allocation9 + $0x2e8] sm:$0xff]
    %v1390 = vld [vmem:[#allocation9 + $0x2f0] sm:$0xff]
    %v1391 = vld [vmem:[#allocation9 + $0x2f8] sm:$0xff]
    %v1392 = vld [vmem:[#allocation9 + $0x300] sm:$0xff]
    %v1393 = vld [vmem:[#allocation9 + $0x308] sm:$0xff]
    %v1394 = vld [vmem:[#allocation9 + $0x310] sm:$0xff]
    %v1395 = vld [vmem:[#allocation9 + $0x318] sm:$0xff]
    %v1396 = vld [vmem:[#allocation9 + $0x320] sm:$0xff]
    %v1397 = vld [vmem:[#allocation9 + $0x328] sm:$0xff]
    %v1398 = vld [vmem:[#allocation9 + $0x330] sm:$0xff]
    %v1399 = vld [vmem:[#allocation9 + $0x338] sm:$0xff]
    %v1400 = vld [vmem:[#allocation9 + $0x340] sm:$0xff]
    %v1401 = vld [vmem:[#allocation9 + $0x348] sm:$0xff]
    %v1402 = vld [vmem:[#allocation9 + $0x350] sm:$0xff]
    %v1403 = vld [vmem:[#allocation9 + $0x358] sm:$0xff]
    %v1404 = vld [vmem:[#allocation9 + $0x360] sm:$0xff]
    %v1405 = vld [vmem:[#allocation9 + $0x368] sm:$0xff]
    %v1406 = vld [vmem:[#allocation9 + $0x370] sm:$0xff]
    %v1407 = vld [vmem:[#allocation9 + $0x378] sm:$0xff]
    %v1408 = vld [vmem:[#allocation9 + $0x380] sm:$0xff]
    %v1409 = vld [vmem:[#allocation9 + $0x388] sm:$0xff]
    %v1410 = vld [vmem:[#allocation9 + $0x390] sm:$0xff]
    %v1411 = vld [vmem:[#allocation9 + $0x398] sm:$0xff]
    %v1412 = vld [vmem:[#allocation9 + $0x3a0] sm:$0xff]
    %v1413 = vld [vmem:[#allocation9 + $0x3a8] sm:$0xff]
    %v1414 = vld [vmem:[#allocation9 + $0x3b0] sm:$0xff]
    %v1415 = vld [vmem:[#allocation9 + $0x3b8] sm:$0xff]
    %v1416 = vld [vmem:[#allocation9 + $0x3c0] sm:$0xff]
    %v1417 = vld [vmem:[#allocation9 + $0x3c8] sm:$0xff]
    %v1418 = vld [vmem:[#allocation9 + $0x3d0] sm:$0xff]
    %v1419 = vld [vmem:[#allocation9 + $0x3d8] sm:$0xff]
    %v1420 = vld [vmem:[#allocation9 + $0x3e0] sm:$0xff]
    %v1421 = vld [vmem:[#allocation9 + $0x3e8] sm:$0xff]
    %v1422 = vld [vmem:[#allocation9 + $0x3f0] sm:$0xff]
    %v1423 = vld [vmem:[#allocation9 + $0x3f8] sm:$0xff]
    %v1424 = vld [vmem:[%s6] sm:$0xf]
    %v1426 = vlaneseq
    %v1427 = vshrl.u32 %v1426, 7
    %v1428 = vsub.s32 0, %v1427
    %v1429 = vrot.slane %v1424, %v1428
    %v1430 = vlaneseq
    %v1431 = vshrl.u32 %v1430, 7
    %v1432 = vsub.s32 1, %v1431
    %v1433 = vrot.slane %v1424, %v1432
    %v1434 = vlaneseq
    %v1435 = vshrl.u32 %v1434, 7
    %v1436 = vsub.s32 2, %v1435
    %v1437 = vrot.slane %v1424, %v1436
    %v1438 = vlaneseq
    %v1439 = vshrl.u32 %v1438, 7
    %v1440 = vsub.s32 3, %v1439
    %v1441 = vrot.slane %v1424, %v1440
    %v1448 = vunpack.c.l.b16 %v1294
    %v1449 = vunpack.c.h.b16 %v1294
    %v1450 = vunpack.c.l.b16 %v1295
    %v1451 = vunpack.c.h.b16 %v1295
    %v1452 = vpack.c.b16 %v1448, %v1448
    %v1453 = vpack.c.b16 %v1449, %v1449
    %v1454 = vpack.c.b16 %v1450, %v1450
    %v1455 = vpack.c.b16 %v1451, %v1451
    %v1588 = vunpack.c.l.b16 %v1296
    %v1589 = vunpack.c.h.b16 %v1296
    %v1590 = vunpack.c.l.b16 %v1297
    %v1591 = vunpack.c.h.b16 %v1297
    %v1592 = vunpack.c.l.b16 %v1298
    %v1593 = vunpack.c.h.b16 %v1298
    %v1594 = vunpack.c.l.b16 %v1299
    %v1595 = vunpack.c.h.b16 %v1299
    %v1596 = vunpack.c.l.b16 %v1300
    %v1597 = vunpack.c.h.b16 %v1300
    %v1598 = vunpack.c.l.b16 %v1301
    %v1599 = vunpack.c.h.b16 %v1301
    %v1600 = vunpack.c.l.b16 %v1302
    %v1601 = vunpack.c.h.b16 %v1302
    %v1602 = vunpack.c.l.b16 %v1303
    %v1603 = vunpack.c.h.b16 %v1303
    %v1604 = vunpack.c.l.b16 %v1304
    %v1605 = vunpack.c.h.b16 %v1304
    %v1606 = vunpack.c.l.b16 %v1305
    %v1607 = vunpack.c.h.b16 %v1305
    %v1608 = vunpack.c.l.b16 %v1306
    %v1609 = vunpack.c.h.b16 %v1306
    %v1610 = vunpack.c.l.b16 %v1307
    %v1611 = vunpack.c.h.b16 %v1307
    %v1612 = vunpack.c.l.b16 %v1308
    %v1613 = vunpack.c.h.b16 %v1308
    %v1614 = vunpack.c.l.b16 %v1309
    %v1615 = vunpack.c.h.b16 %v1309
    %v1616 = vunpack.c.l.b16 %v1310
    %v1617 = vunpack.c.h.b16 %v1310
    %v1618 = vunpack.c.l.b16 %v1311
    %v1619 = vunpack.c.h.b16 %v1311
    %v1620 = vunpack.c.l.b16 %v1312
    %v1621 = vunpack.c.h.b16 %v1312
    %v1622 = vunpack.c.l.b16 %v1313
    %v1623 = vunpack.c.h.b16 %v1313
    %v1624 = vunpack.c.l.b16 %v1314
    %v1625 = vunpack.c.h.b16 %v1314
    %v1626 = vunpack.c.l.b16 %v1315
    %v1627 = vunpack.c.h.b16 %v1315
    %v1628 = vunpack.c.l.b16 %v1316
    %v1629 = vunpack.c.h.b16 %v1316
    %v1630 = vunpack.c.l.b16 %v1317
    %v1631 = vunpack.c.h.b16 %v1317
    %v1632 = vunpack.c.l.b16 %v1318
    %v1633 = vunpack.c.h.b16 %v1318
    %v1634 = vunpack.c.l.b16 %v1319
    %v1635 = vunpack.c.h.b16 %v1319
    %v1636 = vunpack.c.l.b16 %v1320
    %v1637 = vunpack.c.h.b16 %v1320
    %v1638 = vunpack.c.l.b16 %v1321
    %v1639 = vunpack.c.h.b16 %v1321
    %v1640 = vunpack.c.l.b16 %v1322
    %v1641 = vunpack.c.h.b16 %v1322
    %v1642 = vunpack.c.l.b16 %v1323
    %v1643 = vunpack.c.h.b16 %v1323
    %v1644 = vunpack.c.l.b16 %v1324
    %v1645 = vunpack.c.h.b16 %v1324
    %v1646 = vunpack.c.l.b16 %v1325
    %v1647 = vunpack.c.h.b16 %v1325
    %v1648 = vunpack.c.l.b16 %v1326
    %v1649 = vunpack.c.h.b16 %v1326
    %v1650 = vunpack.c.l.b16 %v1327
    %v1651 = vunpack.c.h.b16 %v1327
    %v1652 = vunpack.c.l.b16 %v1328
    %v1653 = vunpack.c.h.b16 %v1328
    %v1654 = vunpack.c.l.b16 %v1329
    %v1655 = vunpack.c.h.b16 %v1329
    %v1656 = vunpack.c.l.b16 %v1330
    %v1657 = vunpack.c.h.b16 %v1330
    %v1658 = vunpack.c.l.b16 %v1331
    %v1659 = vunpack.c.h.b16 %v1331
    %v1660 = vunpack.c.l.b16 %v1332
    %v1661 = vunpack.c.h.b16 %v1332
    %v1662 = vunpack.c.l.b16 %v1333
    %v1663 = vunpack.c.h.b16 %v1333
    %v1664 = vunpack.c.l.b16 %v1334
    %v1665 = vunpack.c.h.b16 %v1334
    %v1666 = vunpack.c.l.b16 %v1335
    %v1667 = vunpack.c.h.b16 %v1335
    %v1668 = vunpack.c.l.b16 %v1336
    %v1669 = vunpack.c.h.b16 %v1336
    %v1670 = vunpack.c.l.b16 %v1337
    %v1671 = vunpack.c.h.b16 %v1337
    %v1672 = vunpack.c.l.b16 %v1338
    %v1673 = vunpack.c.h.b16 %v1338
    %v1674 = vunpack.c.l.b16 %v1339
    %v1675 = vunpack.c.h.b16 %v1339
    %v1676 = vunpack.c.l.b16 %v1340
    %v1677 = vunpack.c.h.b16 %v1340
    %v1678 = vunpack.c.l.b16 %v1341
    %v1679 = vunpack.c.h.b16 %v1341
    %v1680 = vunpack.c.l.b16 %v1342
    %v1681 = vunpack.c.h.b16 %v1342
    %v1682 = vunpack.c.l.b16 %v1343
    %v1683 = vunpack.c.h.b16 %v1343
    %v1684 = vunpack.c.l.b16 %v1344
    %v1685 = vunpack.c.h.b16 %v1344
    %v1686 = vunpack.c.l.b16 %v1345
    %v1687 = vunpack.c.h.b16 %v1345
    %v1688 = vunpack.c.l.b16 %v1346
    %v1689 = vunpack.c.h.b16 %v1346
    %v1690 = vunpack.c.l.b16 %v1347
    %v1691 = vunpack.c.h.b16 %v1347
    %v1692 = vunpack.c.l.b16 %v1348
    %v1693 = vunpack.c.h.b16 %v1348
    %v1694 = vunpack.c.l.b16 %v1349
    %v1695 = vunpack.c.h.b16 %v1349
    %v1696 = vunpack.c.l.b16 %v1350
    %v1697 = vunpack.c.h.b16 %v1350
    %v1698 = vunpack.c.l.b16 %v1351
    %v1699 = vunpack.c.h.b16 %v1351
    %v1700 = vunpack.c.l.b16 %v1352
    %v1701 = vunpack.c.h.b16 %v1352
    %v1702 = vunpack.c.l.b16 %v1353
    %v1703 = vunpack.c.h.b16 %v1353
    %v1704 = vunpack.c.l.b16 %v1354
    %v1705 = vunpack.c.h.b16 %v1354
    %v1706 = vunpack.c.l.b16 %v1355
    %v1707 = vunpack.c.h.b16 %v1355
    %v1708 = vunpack.c.l.b16 %v1356
    %v1709 = vunpack.c.h.b16 %v1356
    %v1710 = vunpack.c.l.b16 %v1357
    %v1711 = vunpack.c.h.b16 %v1357
    %v1712 = vunpack.c.l.b16 %v1358
    %v1713 = vunpack.c.h.b16 %v1358
    %v1714 = vunpack.c.l.b16 %v1359
    %v1715 = vunpack.c.h.b16 %v1359
    %v1716 = vunpack.c.l.b16 %v1360
    %v1717 = vunpack.c.h.b16 %v1360
    %v1718 = vunpack.c.l.b16 %v1361
    %v1719 = vunpack.c.h.b16 %v1361
    %v1720 = vunpack.c.l.b16 %v1362
    %v1721 = vunpack.c.h.b16 %v1362
    %v1722 = vunpack.c.l.b16 %v1363
    %v1723 = vunpack.c.h.b16 %v1363
    %v1724 = vunpack.c.l.b16 %v1364
    %v1725 = vunpack.c.h.b16 %v1364
    %v1726 = vunpack.c.l.b16 %v1365
    %v1727 = vunpack.c.h.b16 %v1365
    %v1728 = vunpack.c.l.b16 %v1366
    %v1729 = vunpack.c.h.b16 %v1366
    %v1730 = vunpack.c.l.b16 %v1367
    %v1731 = vunpack.c.h.b16 %v1367
    %v1732 = vunpack.c.l.b16 %v1368
    %v1733 = vunpack.c.h.b16 %v1368
    %v1734 = vunpack.c.l.b16 %v1369
    %v1735 = vunpack.c.h.b16 %v1369
    %v1736 = vunpack.c.l.b16 %v1370
    %v1737 = vunpack.c.h.b16 %v1370
    %v1738 = vunpack.c.l.b16 %v1371
    %v1739 = vunpack.c.h.b16 %v1371
    %v1740 = vunpack.c.l.b16 %v1372
    %v1741 = vunpack.c.h.b16 %v1372
    %v1742 = vunpack.c.l.b16 %v1373
    %v1743 = vunpack.c.h.b16 %v1373
    %v1744 = vunpack.c.l.b16 %v1374
    %v1745 = vunpack.c.h.b16 %v1374
    %v1746 = vunpack.c.l.b16 %v1375
    %v1747 = vunpack.c.h.b16 %v1375
    %v1748 = vunpack.c.l.b16 %v1376
    %v1749 = vunpack.c.h.b16 %v1376
    %v1750 = vunpack.c.l.b16 %v1377
    %v1751 = vunpack.c.h.b16 %v1377
    %v1752 = vunpack.c.l.b16 %v1378
    %v1753 = vunpack.c.h.b16 %v1378
    %v1754 = vunpack.c.l.b16 %v1379
    %v1755 = vunpack.c.h.b16 %v1379
    %v1756 = vunpack.c.l.b16 %v1380
    %v1757 = vunpack.c.h.b16 %v1380
    %v1758 = vunpack.c.l.b16 %v1381
    %v1759 = vunpack.c.h.b16 %v1381
    %v1760 = vunpack.c.l.b16 %v1382
    %v1761 = vunpack.c.h.b16 %v1382
    %v1762 = vunpack.c.l.b16 %v1383
    %v1763 = vunpack.c.h.b16 %v1383
    %v1764 = vunpack.c.l.b16 %v1384
    %v1765 = vunpack.c.h.b16 %v1384
    %v1766 = vunpack.c.l.b16 %v1385
    %v1767 = vunpack.c.h.b16 %v1385
    %v1768 = vunpack.c.l.b16 %v1386
    %v1769 = vunpack.c.h.b16 %v1386
    %v1770 = vunpack.c.l.b16 %v1387
    %v1771 = vunpack.c.h.b16 %v1387
    %v1772 = vunpack.c.l.b16 %v1388
    %v1773 = vunpack.c.h.b16 %v1388
    %v1774 = vunpack.c.l.b16 %v1389
    %v1775 = vunpack.c.h.b16 %v1389
    %v1776 = vunpack.c.l.b16 %v1390
    %v1777 = vunpack.c.h.b16 %v1390
    %v1778 = vunpack.c.l.b16 %v1391
    %v1779 = vunpack.c.h.b16 %v1391
    %v1780 = vunpack.c.l.b16 %v1392
    %v1781 = vunpack.c.h.b16 %v1392
    %v1782 = vunpack.c.l.b16 %v1393
    %v1783 = vunpack.c.h.b16 %v1393
    %v1784 = vunpack.c.l.b16 %v1394
    %v1785 = vunpack.c.h.b16 %v1394
    %v1786 = vunpack.c.l.b16 %v1395
    %v1787 = vunpack.c.h.b16 %v1395
    %v1788 = vunpack.c.l.b16 %v1396
    %v1789 = vunpack.c.h.b16 %v1396
    %v1790 = vunpack.c.l.b16 %v1397
    %v1791 = vunpack.c.h.b16 %v1397
    %v1792 = vunpack.c.l.b16 %v1398
    %v1793 = vunpack.c.h.b16 %v1398
    %v1794 = vunpack.c.l.b16 %v1399
    %v1795 = vunpack.c.h.b16 %v1399
    %v1796 = vunpack.c.l.b16 %v1400
    %v1797 = vunpack.c.h.b16 %v1400
    %v1798 = vunpack.c.l.b16 %v1401
    %v1799 = vunpack.c.h.b16 %v1401
    %v1800 = vunpack.c.l.b16 %v1402
    %v1801 = vunpack.c.h.b16 %v1402
    %v1802 = vunpack.c.l.b16 %v1403
    %v1803 = vunpack.c.h.b16 %v1403
    %v1804 = vunpack.c.l.b16 %v1404
    %v1805 = vunpack.c.h.b16 %v1404
    %v1806 = vunpack.c.l.b16 %v1405
    %v1807 = vunpack.c.h.b16 %v1405
    %v1808 = vunpack.c.l.b16 %v1406
    %v1809 = vunpack.c.h.b16 %v1406
    %v1810 = vunpack.c.l.b16 %v1407
    %v1811 = vunpack.c.h.b16 %v1407
    %v1812 = vunpack.c.l.b16 %v1408
    %v1813 = vunpack.c.h.b16 %v1408
    %v1814 = vunpack.c.l.b16 %v1409
    %v1815 = vunpack.c.h.b16 %v1409
    %v1816 = vunpack.c.l.b16 %v1410
    %v1817 = vunpack.c.h.b16 %v1410
    %v1818 = vunpack.c.l.b16 %v1411
    %v1819 = vunpack.c.h.b16 %v1411
    %v1820 = vunpack.c.l.b16 %v1412
    %v1821 = vunpack.c.h.b16 %v1412
    %v1822 = vunpack.c.l.b16 %v1413
    %v1823 = vunpack.c.h.b16 %v1413
    %v1824 = vunpack.c.l.b16 %v1414
    %v1825 = vunpack.c.h.b16 %v1414
    %v1826 = vunpack.c.l.b16 %v1415
    %v1827 = vunpack.c.h.b16 %v1415
    %v1828 = vunpack.c.l.b16 %v1416
    %v1829 = vunpack.c.h.b16 %v1416
    %v1830 = vunpack.c.l.b16 %v1417
    %v1831 = vunpack.c.h.b16 %v1417
    %v1832 = vunpack.c.l.b16 %v1418
    %v1833 = vunpack.c.h.b16 %v1418
    %v1834 = vunpack.c.l.b16 %v1419
    %v1835 = vunpack.c.h.b16 %v1419
    %v1836 = vunpack.c.l.b16 %v1420
    %v1837 = vunpack.c.h.b16 %v1420
    %v1838 = vunpack.c.l.b16 %v1421
    %v1839 = vunpack.c.h.b16 %v1421
    %v1840 = vunpack.c.l.b16 %v1422
    %v1841 = vunpack.c.h.b16 %v1422
    %v1842 = vunpack.c.l.b16 %v1423
    %v1843 = vunpack.c.h.b16 %v1423
    %v1844 = vpack.c.b16 %v1592, %v1588
    %v1845 = vpack.c.b16 %v1593, %v1589
    %v1846 = vpack.c.b16 %v1594, %v1590
    %v1847 = vpack.c.b16 %v1595, %v1591
    %v1848 = vpack.c.b16 %v1600, %v1596
    %v1849 = vpack.c.b16 %v1601, %v1597
    %v1850 = vpack.c.b16 %v1602, %v1598
    %v1851 = vpack.c.b16 %v1603, %v1599
    %v1852 = vpack.c.b16 %v1608, %v1604
    %v1853 = vpack.c.b16 %v1609, %v1605
    %v1854 = vpack.c.b16 %v1610, %v1606
    %v1855 = vpack.c.b16 %v1611, %v1607
    %v1856 = vpack.c.b16 %v1616, %v1612
    %v1857 = vpack.c.b16 %v1617, %v1613
    %v1858 = vpack.c.b16 %v1618, %v1614
    %v1859 = vpack.c.b16 %v1619, %v1615
    %v1860 = vpack.c.b16 %v1624, %v1620
    %v1861 = vpack.c.b16 %v1625, %v1621
    %v1862 = vpack.c.b16 %v1626, %v1622
    %v1863 = vpack.c.b16 %v1627, %v1623
    %v1864 = vpack.c.b16 %v1632, %v1628
    %v1865 = vpack.c.b16 %v1633, %v1629
    %v1866 = vpack.c.b16 %v1634, %v1630
    %v1867 = vpack.c.b16 %v1635, %v1631
    %v1868 = vpack.c.b16 %v1640, %v1636
    %v1869 = vpack.c.b16 %v1641, %v1637
    %v1870 = vpack.c.b16 %v1642, %v1638
    %v1871 = vpack.c.b16 %v1643, %v1639
    %v1872 = vpack.c.b16 %v1648, %v1644
    %v1873 = vpack.c.b16 %v1649, %v1645
    %v1874 = vpack.c.b16 %v1650, %v1646
    %v1875 = vpack.c.b16 %v1651, %v1647
    %v1876 = vpack.c.b16 %v1656, %v1652
    %v1877 = vpack.c.b16 %v1657, %v1653
    %v1878 = vpack.c.b16 %v1658, %v1654
    %v1879 = vpack.c.b16 %v1659, %v1655
    %v1880 = vpack.c.b16 %v1664, %v1660
    %v1881 = vpack.c.b16 %v1665, %v1661
    %v1882 = vpack.c.b16 %v1666, %v1662
    %v1883 = vpack.c.b16 %v1667, %v1663
    %v1884 = vpack.c.b16 %v1672, %v1668
    %v1885 = vpack.c.b16 %v1673, %v1669
    %v1886 = vpack.c.b16 %v1674, %v1670
    %v1887 = vpack.c.b16 %v1675, %v1671
    %v1888 = vpack.c.b16 %v1680, %v1676
    %v1889 = vpack.c.b16 %v1681, %v1677
    %v1890 = vpack.c.b16 %v1682, %v1678
    %v1891 = vpack.c.b16 %v1683, %v1679
    %v1892 = vpack.c.b16 %v1688, %v1684
    %v1893 = vpack.c.b16 %v1689, %v1685
    %v1894 = vpack.c.b16 %v1690, %v1686
    %v1895 = vpack.c.b16 %v1691, %v1687
    %v1896 = vpack.c.b16 %v1696, %v1692
    %v1897 = vpack.c.b16 %v1697, %v1693
    %v1898 = vpack.c.b16 %v1698, %v1694
    %v1899 = vpack.c.b16 %v1699, %v1695
    %v1900 = vpack.c.b16 %v1704, %v1700
    %v1901 = vpack.c.b16 %v1705, %v1701
    %v1902 = vpack.c.b16 %v1706, %v1702
    %v1903 = vpack.c.b16 %v1707, %v1703
    %v1904 = vpack.c.b16 %v1712, %v1708
    %v1905 = vpack.c.b16 %v1713, %v1709
    %v1906 = vpack.c.b16 %v1714, %v1710
    %v1907 = vpack.c.b16 %v1715, %v1711
    %v1908 = vpack.c.b16 %v1720, %v1716
    %v1909 = vpack.c.b16 %v1721, %v1717
    %v1910 = vpack.c.b16 %v1722, %v1718
    %v1911 = vpack.c.b16 %v1723, %v1719
    %v1912 = vpack.c.b16 %v1728, %v1724
    %v1913 = vpack.c.b16 %v1729, %v1725
    %v1914 = vpack.c.b16 %v1730, %v1726
    %v1915 = vpack.c.b16 %v1731, %v1727
    %v1916 = vpack.c.b16 %v1736, %v1732
    %v1917 = vpack.c.b16 %v1737, %v1733
    %v1918 = vpack.c.b16 %v1738, %v1734
    %v1919 = vpack.c.b16 %v1739, %v1735
    %v1920 = vpack.c.b16 %v1744, %v1740
    %v1921 = vpack.c.b16 %v1745, %v1741
    %v1922 = vpack.c.b16 %v1746, %v1742
    %v1923 = vpack.c.b16 %v1747, %v1743
    %v1924 = vpack.c.b16 %v1752, %v1748
    %v1925 = vpack.c.b16 %v1753, %v1749
    %v1926 = vpack.c.b16 %v1754, %v1750
    %v1927 = vpack.c.b16 %v1755, %v1751
    %v1928 = vpack.c.b16 %v1760, %v1756
    %v1929 = vpack.c.b16 %v1761, %v1757
    %v1930 = vpack.c.b16 %v1762, %v1758
    %v1931 = vpack.c.b16 %v1763, %v1759
    %v1932 = vpack.c.b16 %v1768, %v1764
    %v1933 = vpack.c.b16 %v1769, %v1765
    %v1934 = vpack.c.b16 %v1770, %v1766
    %v1935 = vpack.c.b16 %v1771, %v1767
    %v1936 = vpack.c.b16 %v1776, %v1772
    %v1937 = vpack.c.b16 %v1777, %v1773
    %v1938 = vpack.c.b16 %v1778, %v1774
    %v1939 = vpack.c.b16 %v1779, %v1775
    %v1940 = vpack.c.b16 %v1784, %v1780
    %v1941 = vpack.c.b16 %v1785, %v1781
    %v1942 = vpack.c.b16 %v1786, %v1782
    %v1943 = vpack.c.b16 %v1787, %v1783
    %v1944 = vpack.c.b16 %v1792, %v1788
    %v1945 = vpack.c.b16 %v1793, %v1789
    %v1946 = vpack.c.b16 %v1794, %v1790
    %v1947 = vpack.c.b16 %v1795, %v1791
    %v1948 = vpack.c.b16 %v1800, %v1796
    %v1949 = vpack.c.b16 %v1801, %v1797
    %v1950 = vpack.c.b16 %v1802, %v1798
    %v1951 = vpack.c.b16 %v1803, %v1799
    %v1952 = vpack.c.b16 %v1808, %v1804
    %v1953 = vpack.c.b16 %v1809, %v1805
    %v1954 = vpack.c.b16 %v1810, %v1806
    %v1955 = vpack.c.b16 %v1811, %v1807
    %v1956 = vpack.c.b16 %v1816, %v1812
    %v1957 = vpack.c.b16 %v1817, %v1813
    %v1958 = vpack.c.b16 %v1818, %v1814
    %v1959 = vpack.c.b16 %v1819, %v1815
    %v1960 = vpack.c.b16 %v1824, %v1820
    %v1961 = vpack.c.b16 %v1825, %v1821
    %v1962 = vpack.c.b16 %v1826, %v1822
    %v1963 = vpack.c.b16 %v1827, %v1823
    %v1964 = vpack.c.b16 %v1832, %v1828
    %v1965 = vpack.c.b16 %v1833, %v1829
    %v1966 = vpack.c.b16 %v1834, %v1830
    %v1967 = vpack.c.b16 %v1835, %v1831
    %v1968 = vpack.c.b16 %v1840, %v1836
    %v1969 = vpack.c.b16 %v1841, %v1837
    %v1970 = vpack.c.b16 %v1842, %v1838
    %v1971 = vpack.c.b16 %v1843, %v1839
    %2100 = vmatprep.subr.bf16.mxu0 %v1845
    %2101 = vmatpush1.bf16.msra.mxu0 %v1844
    %2102 = vmatprep.subr.bf16.mxu0 %v1849
    %2103 = vmatpush1.bf16.msra.mxu0 %v1848
    %2104 = vmatprep.subr.bf16.mxu0 %v1853
    %2105 = vmatpush1.bf16.msra.mxu0 %v1852
    %2106 = vmatprep.subr.bf16.mxu0 %v1857
    %2107 = vmatpush1.bf16.msra.mxu0 %v1856
    %2108 = vmatprep.subr.bf16.mxu0 %v1861
    %2109 = vmatpush1.bf16.msra.mxu0 %v1860
    %2110 = vmatprep.subr.bf16.mxu0 %v1865
    %2111 = vmatpush1.bf16.msra.mxu0 %v1864
    %2112 = vmatprep.subr.bf16.mxu0 %v1869
    %2113 = vmatpush1.bf16.msra.mxu0 %v1868
    %2114 = vmatprep.subr.bf16.mxu0 %v1873
    %2115 = vmatpush1.bf16.msra.mxu0 %v1872
    %2116 = vmatprep.subr.bf16.mxu0 %v1877
    %2117 = vmatpush1.bf16.msra.mxu0 %v1876
    %2118 = vmatprep.subr.bf16.mxu0 %v1881
    %2119 = vmatpush1.bf16.msra.mxu0 %v1880
    %2120 = vmatprep.subr.bf16.mxu0 %v1885
    %2121 = vmatpush1.bf16.msra.mxu0 %v1884
    %2122 = vmatprep.subr.bf16.mxu0 %v1889
    %2123 = vmatpush1.bf16.msra.mxu0 %v1888
    %2124 = vmatprep.subr.bf16.mxu0 %v1893
    %2125 = vmatpush1.bf16.msra.mxu0 %v1892
    %2126 = vmatprep.subr.bf16.mxu0 %v1897
    %2127 = vmatpush1.bf16.msra.mxu0 %v1896
    %2128 = vmatprep.subr.bf16.mxu0 %v1901
    %2129 = vmatpush1.bf16.msra.mxu0 %v1900
    %2130 = vmatprep.subr.bf16.mxu0 %v1905
    %2131 = vmatpush1.bf16.msra.mxu0 %v1904
    %2132 = vmatprep.mubr.bf16.mxu0 %v1453
    %2133 = vmatmul.mubr.bf16.gmra.mrb[0].mxu0 %v1452
    %v2134 = vpop.f32.mrb[0].mxu0
    %v2135 = vadd.f32 %v1429, %v2134
    %v2136 = vpop.f32.mrb[0].mxu0
    %v2137 = vadd.f32 %v1433, %v2136
    %v2138 = vpop.f32.mrb[0].mxu0
    %v2139 = vpop.f32.mrb[0].mxu0
    %2140 = vdwg.mxu0
    %2141 = vmatprep.subr.bf16.mxu0 %v1909
    %2142 = vmatpush1.bf16.msra.mxu0 %v1908
    %2143 = vmatprep.subr.bf16.mxu0 %v1913
    %2144 = vmatpush1.bf16.msra.mxu0 %v1912
    %2145 = vmatprep.subr.bf16.mxu0 %v1917
    %2146 = vmatpush1.bf16.msra.mxu0 %v1916
    %2147 = vmatprep.subr.bf16.mxu0 %v1921
    %2148 = vmatpush1.bf16.msra.mxu0 %v1920
    %2149 = vmatprep.subr.bf16.mxu0 %v1925
    %2150 = vmatpush1.bf16.msra.mxu0 %v1924
    %2151 = vmatprep.subr.bf16.mxu0 %v1929
    %2152 = vmatpush1.bf16.msra.mxu0 %v1928
    %2153 = vmatprep.subr.bf16.mxu0 %v1933
    %2154 = vmatpush1.bf16.msra.mxu0 %v1932
    %2155 = vmatprep.subr.bf16.mxu0 %v1937
    %2156 = vmatpush1.bf16.msra.mxu0 %v1936
    %2157 = vmatprep.subr.bf16.mxu0 %v1941
    %2158 = vmatpush1.bf16.msra.mxu0 %v1940
    %2159 = vmatprep.subr.bf16.mxu0 %v1945
    %2160 = vmatpush1.bf16.msra.mxu0 %v1944
    %2161 = vmatprep.subr.bf16.mxu0 %v1949
    %2162 = vmatpush1.bf16.msra.mxu0 %v1948
    %2163 = vmatprep.subr.bf16.mxu0 %v1953
    %2164 = vmatpush1.bf16.msra.mxu0 %v1952
    %2165 = vmatprep.subr.bf16.mxu0 %v1957
    %2166 = vmatpush1.bf16.msra.mxu0 %v1956
    %2167 = vmatprep.subr.bf16.mxu0 %v1961
    %2168 = vmatpush1.bf16.msra.mxu0 %v1960
    %2169 = vmatprep.subr.bf16.mxu0 %v1965
    %2170 = vmatpush1.bf16.msra.mxu0 %v1964
    %2171 = vmatprep.subr.bf16.mxu0 %v1969
    %2172 = vmatpush1.bf16.msra.mxu0 %v1968
    %2173 = vmatprep.mubr.bf16.mxu0 %v1455
    %2174 = vmatmul.mubr.bf16.gmra.mrb[0].mxu0 %v1454
    %v2175 = vpop.f32.mrb[0].mxu0
    %v2176 = vadd.f32 %v2135, %v2175
    %v2177 = vpop.f32.mrb[0].mxu0
    %v2178 = vadd.f32 %v2137, %v2177
    %v2179 = vpop.f32.mrb[0].mxu0
    %v2180 = vpop.f32.mrb[0].mxu0
    %2181 = vdwg.mxu0
    %2182 = vmatprep.subr.bf16.mxu0 %v1847
    %2183 = vmatpush1.bf16.msra.mxu0 %v1846
    %2184 = vmatprep.subr.bf16.mxu0 %v1851
    %2185 = vmatpush1.bf16.msra.mxu0 %v1850
    %2186 = vmatprep.subr.bf16.mxu0 %v1855
    %2187 = vmatpush1.bf16.msra.mxu0 %v1854
    %2188 = vmatprep.subr.bf16.mxu0 %v1859
    %2189 = vmatpush1.bf16.msra.mxu0 %v1858
    %2190 = vmatprep.subr.bf16.mxu0 %v1863
    %2191 = vmatpush1.bf16.msra.mxu0 %v1862
    %2192 = vmatprep.subr.bf16.mxu0 %v1867
    %2193 = vmatpush1.bf16.msra.mxu0 %v1866
    %2194 = vmatprep.subr.bf16.mxu0 %v1871
    %2195 = vmatpush1.bf16.msra.mxu0 %v1870
    %2196 = vmatprep.subr.bf16.mxu0 %v1875
    %2197 = vmatpush1.bf16.msra.mxu0 %v1874
    %2198 = vmatprep.subr.bf16.mxu0 %v1879
    %2199 = vmatpush1.bf16.msra.mxu0 %v1878
    %2200 = vmatprep.subr.bf16.mxu0 %v1883
    %2201 = vmatpush1.bf16.msra.mxu0 %v1882
    %2202 = vmatprep.subr.bf16.mxu0 %v1887
    %2203 = vmatpush1.bf16.msra.mxu0 %v1886
    %2204 = vmatprep.subr.bf16.mxu0 %v1891
    %2205 = vmatpush1.bf16.msra.mxu0 %v1890
    %2206 = vmatprep.subr.bf16.mxu0 %v1895
    %2207 = vmatpush1.bf16.msra.mxu0 %v1894
    %2208 = vmatprep.subr.bf16.mxu0 %v1899
    %2209 = vmatpush1.bf16.msra.mxu0 %v1898
    %2210 = vmatprep.subr.bf16.mxu0 %v1903
    %2211 = vmatpush1.bf16.msra.mxu0 %v1902
    %2212 = vmatprep.subr.bf16.mxu0 %v1907
    %2213 = vmatpush1.bf16.msra.mxu0 %v1906
    %2214 = vmatprep.mubr.bf16.mxu0 %v1453
    %2215 = vmatmul.mubr.bf16.gmra.mrb[0].mxu0 %v1452
    %v2216 = vpop.f32.mrb[0].mxu0
    %v2217 = vadd.f32 %v1437, %v2216
    %v2218 = vpop.f32.mrb[0].mxu0
    %v2219 = vadd.f32 %v1441, %v2218
    %v2220 = vpop.f32.mrb[0].mxu0
    %v2221 = vpop.f32.mrb[0].mxu0
    %2222 = vdwg.mxu0
    %2223 = vmatprep.subr.bf16.mxu0 %v1911
    %2224 = vmatpush1.bf16.msra.mxu0 %v1910
    %2225 = vmatprep.subr.bf16.mxu0 %v1915
    %2226 = vmatpush1.bf16.msra.mxu0 %v1914
    %2227 = vmatprep.subr.bf16.mxu0 %v1919
    %2228 = vmatpush1.bf16.msra.mxu0 %v1918
    %2229 = vmatprep.subr.bf16.mxu0 %v1923
    %2230 = vmatpush1.bf16.msra.mxu0 %v1922
    %2231 = vmatprep.subr.bf16.mxu0 %v1927
    %2232 = vmatpush1.bf16.msra.mxu0 %v1926
    %2233 = vmatprep.subr.bf16.mxu0 %v1931
    %2234 = vmatpush1.bf16.msra.mxu0 %v1930
    %2235 = vmatprep.subr.bf16.mxu0 %v1935
    %2236 = vmatpush1.bf16.msra.mxu0 %v1934
    %2237 = vmatprep.subr.bf16.mxu0 %v1939
    %2238 = vmatpush1.bf16.msra.mxu0 %v1938
    %2239 = vmatprep.subr.bf16.mxu0 %v1943
    %2240 = vmatpush1.bf16.msra.mxu0 %v1942
    %2241 = vmatprep.subr.bf16.mxu0 %v1947
    %2242 = vmatpush1.bf16.msra.mxu0 %v1946
    %2243 = vmatprep.subr.bf16.mxu0 %v1951
    %2244 = vmatpush1.bf16.msra.mxu0 %v1950
    %2245 = vmatprep.subr.bf16.mxu0 %v1955
    %2246 = vmatpush1.bf16.msra.mxu0 %v1954
    %2247 = vmatprep.subr.bf16.mxu0 %v1959
    %2248 = vmatpush1.bf16.msra.mxu0 %v1958
    %2249 = vmatprep.subr.bf16.mxu0 %v1963
    %2250 = vmatpush1.bf16.msra.mxu0 %v1962
    %2251 = vmatprep.subr.bf16.mxu0 %v1967
    %2252 = vmatpush1.bf16.msra.mxu0 %v1966
    %2253 = vmatprep.subr.bf16.mxu0 %v1971
    %2254 = vmatpush1.bf16.msra.mxu0 %v1970
    %2255 = vmatprep.mubr.bf16.mxu0 %v1455
    %2256 = vmatmul.mubr.bf16.gmra.mrb[0].mxu0 %v1454
    %v2257 = vpop.f32.mrb[0].mxu0
    %v2258 = vadd.f32 %v2217, %v2257
    %v2259 = vpop.f32.mrb[0].mxu0
    %v2260 = vadd.f32 %v2219, %v2259
    %v2261 = vpop.f32.mrb[0].mxu0
    %v2262 = vpop.f32.mrb[0].mxu0
    %2263 = vdwg.mxu0
    %v2264 = vmul.f32 %v2176, 0.01
    %v2265 = vmul.f32 %v2178, 0.01
    %v2266 = vmul.f32 %v2258, 0.01
    %v2267 = vmul.f32 %v2260, 0.01
    %v2268 = vmax.f32 %v2176, %v2264
    %v2269 = vmax.f32 %v2178, %v2265
    %v2270 = vmax.f32 %v2258, %v2266
    %v2271 = vmax.f32 %v2260, %v2267
    %v2272 = vpack.c.bf16 %v2268, %v2268
    %v2273 = vpack.c.bf16 %v2269, %v2269
    %v2274 = vpack.c.bf16 %v2270, %v2270
    %v2275 = vpack.c.bf16 %v2271, %v2271
    %v2280 = vunpack.c.l.b16 %v2272
    %v2281 = vunpack.c.l.b16 %v2273
    %v2282 = vunpack.c.l.b16 %v2274
    %v2283 = vunpack.c.l.b16 %v2275
    %v2284 = vpack.c.b16 %v2281, %v2280
    %v2285 = vpack.c.b16 %v2283, %v2282
    %2288 = vst [vmem:[#allocation2] sm:$0xff] %v2284
    %2289 = vst [vmem:[#allocation2 + $0x8] sm:$0xff] %v2285
    %v2290 = vld [vmem:[#allocation2] sm:$0xff]
    %v2291 = vld [vmem:[#allocation2 + $0x8] sm:$0xff]
    %v2292 = vld [vmem:[#allocation11] sm:$0xff]
    %v2293 = vld [vmem:[#allocation11 + $0x8] sm:$0xff]
    %v2294 = vld [vmem:[#allocation11 + $0x10] sm:$0xff]
    %v2295 = vld [vmem:[#allocation11 + $0x18] sm:$0xff]
    %v2296 = vld [vmem:[#allocation11 + $0x20] sm:$0xff]
    %v2297 = vld [vmem:[#allocation11 + $0x28] sm:$0xff]
    %v2298 = vld [vmem:[#allocation11 + $0x30] sm:$0xff]
    %v2299 = vld [vmem:[#allocation11 + $0x38] sm:$0xff]
    %v2300 = vld [vmem:[#allocation11 + $0x40] sm:$0xff]
    %v2301 = vld [vmem:[#allocation11 + $0x48] sm:$0xff]
    %v2302 = vld [vmem:[#allocation11 + $0x50] sm:$0xff]
    %v2303 = vld [vmem:[#allocation11 + $0x58] sm:$0xff]
    %v2304 = vld [vmem:[#allocation11 + $0x60] sm:$0xff]
    %v2305 = vld [vmem:[#allocation11 + $0x68] sm:$0xff]
    %v2306 = vld [vmem:[#allocation11 + $0x70] sm:$0xff]
    %v2307 = vld [vmem:[#allocation11 + $0x78] sm:$0xff]
    %v2308 = vld [vmem:[#allocation11 + $0x80] sm:$0xff]
    %v2309 = vld [vmem:[#allocation11 + $0x88] sm:$0xff]
    %v2310 = vld [vmem:[#allocation11 + $0x90] sm:$0xff]
    %v2311 = vld [vmem:[#allocation11 + $0x98] sm:$0xff]
    %v2312 = vld [vmem:[#allocation11 + $0xa0] sm:$0xff]
    %v2313 = vld [vmem:[#allocation11 + $0xa8] sm:$0xff]
    %v2314 = vld [vmem:[#allocation11 + $0xb0] sm:$0xff]
    %v2315 = vld [vmem:[#allocation11 + $0xb8] sm:$0xff]
    %v2316 = vld [vmem:[#allocation11 + $0xc0] sm:$0xff]
    %v2317 = vld [vmem:[#allocation11 + $0xc8] sm:$0xff]
    %v2318 = vld [vmem:[#allocation11 + $0xd0] sm:$0xff]
    %v2319 = vld [vmem:[#allocation11 + $0xd8] sm:$0xff]
    %v2320 = vld [vmem:[#allocation11 + $0xe0] sm:$0xff]
    %v2321 = vld [vmem:[#allocation11 + $0xe8] sm:$0xff]
    %v2322 = vld [vmem:[#allocation11 + $0xf0] sm:$0xff]
    %v2323 = vld [vmem:[#allocation11 + $0xf8] sm:$0xff]
    %v2324 = vld [vmem:[#allocation11 + $0x100] sm:$0xff]
    %v2325 = vld [vmem:[#allocation11 + $0x108] sm:$0xff]
    %v2326 = vld [vmem:[#allocation11 + $0x110] sm:$0xff]
    %v2327 = vld [vmem:[#allocation11 + $0x118] sm:$0xff]
    %v2328 = vld [vmem:[#allocation11 + $0x120] sm:$0xff]
    %v2329 = vld [vmem:[#allocation11 + $0x128] sm:$0xff]
    %v2330 = vld [vmem:[#allocation11 + $0x130] sm:$0xff]
    %v2331 = vld [vmem:[#allocation11 + $0x138] sm:$0xff]
    %v2332 = vld [vmem:[#allocation11 + $0x140] sm:$0xff]
    %v2333 = vld [vmem:[#allocation11 + $0x148] sm:$0xff]
    %v2334 = vld [vmem:[#allocation11 + $0x150] sm:$0xff]
    %v2335 = vld [vmem:[#allocation11 + $0x158] sm:$0xff]
    %v2336 = vld [vmem:[#allocation11 + $0x160] sm:$0xff]
    %v2337 = vld [vmem:[#allocation11 + $0x168] sm:$0xff]
    %v2338 = vld [vmem:[#allocation11 + $0x170] sm:$0xff]
    %v2339 = vld [vmem:[#allocation11 + $0x178] sm:$0xff]
    %v2340 = vld [vmem:[#allocation11 + $0x180] sm:$0xff]
    %v2341 = vld [vmem:[#allocation11 + $0x188] sm:$0xff]
    %v2342 = vld [vmem:[#allocation11 + $0x190] sm:$0xff]
    %v2343 = vld [vmem:[#allocation11 + $0x198] sm:$0xff]
    %v2344 = vld [vmem:[#allocation11 + $0x1a0] sm:$0xff]
    %v2345 = vld [vmem:[#allocation11 + $0x1a8] sm:$0xff]
    %v2346 = vld [vmem:[#allocation11 + $0x1b0] sm:$0xff]
    %v2347 = vld [vmem:[#allocation11 + $0x1b8] sm:$0xff]
    %v2348 = vld [vmem:[#allocation11 + $0x1c0] sm:$0xff]
    %v2349 = vld [vmem:[#allocation11 + $0x1c8] sm:$0xff]
    %v2350 = vld [vmem:[#allocation11 + $0x1d0] sm:$0xff]
    %v2351 = vld [vmem:[#allocation11 + $0x1d8] sm:$0xff]
    %v2352 = vld [vmem:[#allocation11 + $0x1e0] sm:$0xff]
    %v2353 = vld [vmem:[#allocation11 + $0x1e8] sm:$0xff]
    %v2354 = vld [vmem:[#allocation11 + $0x1f0] sm:$0xff]
    %v2355 = vld [vmem:[#allocation11 + $0x1f8] sm:$0xff]
    %v2356 = vld [vmem:[#allocation11 + $0x200] sm:$0xff]
    %v2357 = vld [vmem:[#allocation11 + $0x208] sm:$0xff]
    %v2358 = vld [vmem:[#allocation11 + $0x210] sm:$0xff]
    %v2359 = vld [vmem:[#allocation11 + $0x218] sm:$0xff]
    %v2360 = vld [vmem:[#allocation11 + $0x220] sm:$0xff]
    %v2361 = vld [vmem:[#allocation11 + $0x228] sm:$0xff]
    %v2362 = vld [vmem:[#allocation11 + $0x230] sm:$0xff]
    %v2363 = vld [vmem:[#allocation11 + $0x238] sm:$0xff]
    %v2364 = vld [vmem:[#allocation11 + $0x240] sm:$0xff]
    %v2365 = vld [vmem:[#allocation11 + $0x248] sm:$0xff]
    %v2366 = vld [vmem:[#allocation11 + $0x250] sm:$0xff]
    %v2367 = vld [vmem:[#allocation11 + $0x258] sm:$0xff]
    %v2368 = vld [vmem:[#allocation11 + $0x260] sm:$0xff]
    %v2369 = vld [vmem:[#allocation11 + $0x268] sm:$0xff]
    %v2370 = vld [vmem:[#allocation11 + $0x270] sm:$0xff]
    %v2371 = vld [vmem:[#allocation11 + $0x278] sm:$0xff]
    %v2372 = vld [vmem:[#allocation11 + $0x280] sm:$0xff]
    %v2373 = vld [vmem:[#allocation11 + $0x288] sm:$0xff]
    %v2374 = vld [vmem:[#allocation11 + $0x290] sm:$0xff]
    %v2375 = vld [vmem:[#allocation11 + $0x298] sm:$0xff]
    %v2376 = vld [vmem:[#allocation11 + $0x2a0] sm:$0xff]
    %v2377 = vld [vmem:[#allocation11 + $0x2a8] sm:$0xff]
    %v2378 = vld [vmem:[#allocation11 + $0x2b0] sm:$0xff]
    %v2379 = vld [vmem:[#allocation11 + $0x2b8] sm:$0xff]
    %v2380 = vld [vmem:[#allocation11 + $0x2c0] sm:$0xff]
    %v2381 = vld [vmem:[#allocation11 + $0x2c8] sm:$0xff]
    %v2382 = vld [vmem:[#allocation11 + $0x2d0] sm:$0xff]
    %v2383 = vld [vmem:[#allocation11 + $0x2d8] sm:$0xff]
    %v2384 = vld [vmem:[#allocation11 + $0x2e0] sm:$0xff]
    %v2385 = vld [vmem:[#allocation11 + $0x2e8] sm:$0xff]
    %v2386 = vld [vmem:[#allocation11 + $0x2f0] sm:$0xff]
    %v2387 = vld [vmem:[#allocation11 + $0x2f8] sm:$0xff]
    %v2388 = vld [vmem:[#allocation11 + $0x300] sm:$0xff]
    %v2389 = vld [vmem:[#allocation11 + $0x308] sm:$0xff]
    %v2390 = vld [vmem:[#allocation11 + $0x310] sm:$0xff]
    %v2391 = vld [vmem:[#allocation11 + $0x318] sm:$0xff]
    %v2392 = vld [vmem:[#allocation11 + $0x320] sm:$0xff]
    %v2393 = vld [vmem:[#allocation11 + $0x328] sm:$0xff]
    %v2394 = vld [vmem:[#allocation11 + $0x330] sm:$0xff]
    %v2395 = vld [vmem:[#allocation11 + $0x338] sm:$0xff]
    %v2396 = vld [vmem:[#allocation11 + $0x340] sm:$0xff]
    %v2397 = vld [vmem:[#allocation11 + $0x348] sm:$0xff]
    %v2398 = vld [vmem:[#allocation11 + $0x350] sm:$0xff]
    %v2399 = vld [vmem:[#allocation11 + $0x358] sm:$0xff]
    %v2400 = vld [vmem:[#allocation11 + $0x360] sm:$0xff]
    %v2401 = vld [vmem:[#allocation11 + $0x368] sm:$0xff]
    %v2402 = vld [vmem:[#allocation11 + $0x370] sm:$0xff]
    %v2403 = vld [vmem:[#allocation11 + $0x378] sm:$0xff]
    %v2404 = vld [vmem:[#allocation11 + $0x380] sm:$0xff]
    %v2405 = vld [vmem:[#allocation11 + $0x388] sm:$0xff]
    %v2406 = vld [vmem:[#allocation11 + $0x390] sm:$0xff]
    %v2407 = vld [vmem:[#allocation11 + $0x398] sm:$0xff]
    %v2408 = vld [vmem:[#allocation11 + $0x3a0] sm:$0xff]
    %v2409 = vld [vmem:[#allocation11 + $0x3a8] sm:$0xff]
    %v2410 = vld [vmem:[#allocation11 + $0x3b0] sm:$0xff]
    %v2411 = vld [vmem:[#allocation11 + $0x3b8] sm:$0xff]
    %v2412 = vld [vmem:[#allocation11 + $0x3c0] sm:$0xff]
    %v2413 = vld [vmem:[#allocation11 + $0x3c8] sm:$0xff]
    %v2414 = vld [vmem:[#allocation11 + $0x3d0] sm:$0xff]
    %v2415 = vld [vmem:[#allocation11 + $0x3d8] sm:$0xff]
    %v2416 = vld [vmem:[#allocation11 + $0x3e0] sm:$0xff]
    %v2417 = vld [vmem:[#allocation11 + $0x3e8] sm:$0xff]
    %v2418 = vld [vmem:[#allocation11 + $0x3f0] sm:$0xff]
    %v2419 = vld [vmem:[#allocation11 + $0x3f8] sm:$0xff]
    %v2420 = vld [vmem:[%s8] sm:$0xf]
    %v2422 = vlaneseq
    %v2423 = vshrl.u32 %v2422, 7
    %v2424 = vsub.s32 0, %v2423
    %v2425 = vrot.slane %v2420, %v2424
    %v2426 = vlaneseq
    %v2427 = vshrl.u32 %v2426, 7
    %v2428 = vsub.s32 1, %v2427
    %v2429 = vrot.slane %v2420, %v2428
    %v2430 = vlaneseq
    %v2431 = vshrl.u32 %v2430, 7
    %v2432 = vsub.s32 2, %v2431
    %v2433 = vrot.slane %v2420, %v2432
    %v2434 = vlaneseq
    %v2435 = vshrl.u32 %v2434, 7
    %v2436 = vsub.s32 3, %v2435
    %v2437 = vrot.slane %v2420, %v2436
    %v2444 = vunpack.c.l.b16 %v2290
    %v2445 = vunpack.c.h.b16 %v2290
    %v2446 = vunpack.c.l.b16 %v2291
    %v2447 = vunpack.c.h.b16 %v2291
    %v2448 = vpack.c.b16 %v2444, %v2444
    %v2449 = vpack.c.b16 %v2445, %v2445
    %v2450 = vpack.c.b16 %v2446, %v2446
    %v2451 = vpack.c.b16 %v2447, %v2447
    %v2584 = vunpack.c.l.b16 %v2292
    %v2585 = vunpack.c.h.b16 %v2292
    %v2586 = vunpack.c.l.b16 %v2293
    %v2587 = vunpack.c.h.b16 %v2293
    %v2588 = vunpack.c.l.b16 %v2294
    %v2589 = vunpack.c.h.b16 %v2294
    %v2590 = vunpack.c.l.b16 %v2295
    %v2591 = vunpack.c.h.b16 %v2295
    %v2592 = vunpack.c.l.b16 %v2296
    %v2593 = vunpack.c.h.b16 %v2296
    %v2594 = vunpack.c.l.b16 %v2297
    %v2595 = vunpack.c.h.b16 %v2297
    %v2596 = vunpack.c.l.b16 %v2298
    %v2597 = vunpack.c.h.b16 %v2298
    %v2598 = vunpack.c.l.b16 %v2299
    %v2599 = vunpack.c.h.b16 %v2299
    %v2600 = vunpack.c.l.b16 %v2300
    %v2601 = vunpack.c.h.b16 %v2300
    %v2602 = vunpack.c.l.b16 %v2301
    %v2603 = vunpack.c.h.b16 %v2301
    %v2604 = vunpack.c.l.b16 %v2302
    %v2605 = vunpack.c.h.b16 %v2302
    %v2606 = vunpack.c.l.b16 %v2303
    %v2607 = vunpack.c.h.b16 %v2303
    %v2608 = vunpack.c.l.b16 %v2304
    %v2609 = vunpack.c.h.b16 %v2304
    %v2610 = vunpack.c.l.b16 %v2305
    %v2611 = vunpack.c.h.b16 %v2305
    %v2612 = vunpack.c.l.b16 %v2306
    %v2613 = vunpack.c.h.b16 %v2306
    %v2614 = vunpack.c.l.b16 %v2307
    %v2615 = vunpack.c.h.b16 %v2307
    %v2616 = vunpack.c.l.b16 %v2308
    %v2617 = vunpack.c.h.b16 %v2308
    %v2618 = vunpack.c.l.b16 %v2309
    %v2619 = vunpack.c.h.b16 %v2309
    %v2620 = vunpack.c.l.b16 %v2310
    %v2621 = vunpack.c.h.b16 %v2310
    %v2622 = vunpack.c.l.b16 %v2311
    %v2623 = vunpack.c.h.b16 %v2311
    %v2624 = vunpack.c.l.b16 %v2312
    %v2625 = vunpack.c.h.b16 %v2312
    %v2626 = vunpack.c.l.b16 %v2313
    %v2627 = vunpack.c.h.b16 %v2313
    %v2628 = vunpack.c.l.b16 %v2314
    %v2629 = vunpack.c.h.b16 %v2314
    %v2630 = vunpack.c.l.b16 %v2315
    %v2631 = vunpack.c.h.b16 %v2315
    %v2632 = vunpack.c.l.b16 %v2316
    %v2633 = vunpack.c.h.b16 %v2316
    %v2634 = vunpack.c.l.b16 %v2317
    %v2635 = vunpack.c.h.b16 %v2317
    %v2636 = vunpack.c.l.b16 %v2318
    %v2637 = vunpack.c.h.b16 %v2318
    %v2638 = vunpack.c.l.b16 %v2319
    %v2639 = vunpack.c.h.b16 %v2319
    %v2640 = vunpack.c.l.b16 %v2320
    %v2641 = vunpack.c.h.b16 %v2320
    %v2642 = vunpack.c.l.b16 %v2321
    %v2643 = vunpack.c.h.b16 %v2321
    %v2644 = vunpack.c.l.b16 %v2322
    %v2645 = vunpack.c.h.b16 %v2322
    %v2646 = vunpack.c.l.b16 %v2323
    %v2647 = vunpack.c.h.b16 %v2323
    %v2648 = vunpack.c.l.b16 %v2324
    %v2649 = vunpack.c.h.b16 %v2324
    %v2650 = vunpack.c.l.b16 %v2325
    %v2651 = vunpack.c.h.b16 %v2325
    %v2652 = vunpack.c.l.b16 %v2326
    %v2653 = vunpack.c.h.b16 %v2326
    %v2654 = vunpack.c.l.b16 %v2327
    %v2655 = vunpack.c.h.b16 %v2327
    %v2656 = vunpack.c.l.b16 %v2328
    %v2657 = vunpack.c.h.b16 %v2328
    %v2658 = vunpack.c.l.b16 %v2329
    %v2659 = vunpack.c.h.b16 %v2329
    %v2660 = vunpack.c.l.b16 %v2330
    %v2661 = vunpack.c.h.b16 %v2330
    %v2662 = vunpack.c.l.b16 %v2331
    %v2663 = vunpack.c.h.b16 %v2331
    %v2664 = vunpack.c.l.b16 %v2332
    %v2665 = vunpack.c.h.b16 %v2332
    %v2666 = vunpack.c.l.b16 %v2333
    %v2667 = vunpack.c.h.b16 %v2333
    %v2668 = vunpack.c.l.b16 %v2334
    %v2669 = vunpack.c.h.b16 %v2334
    %v2670 = vunpack.c.l.b16 %v2335
    %v2671 = vunpack.c.h.b16 %v2335
    %v2672 = vunpack.c.l.b16 %v2336
    %v2673 = vunpack.c.h.b16 %v2336
    %v2674 = vunpack.c.l.b16 %v2337
    %v2675 = vunpack.c.h.b16 %v2337
    %v2676 = vunpack.c.l.b16 %v2338
    %v2677 = vunpack.c.h.b16 %v2338
    %v2678 = vunpack.c.l.b16 %v2339
    %v2679 = vunpack.c.h.b16 %v2339
    %v2680 = vunpack.c.l.b16 %v2340
    %v2681 = vunpack.c.h.b16 %v2340
    %v2682 = vunpack.c.l.b16 %v2341
    %v2683 = vunpack.c.h.b16 %v2341
    %v2684 = vunpack.c.l.b16 %v2342
    %v2685 = vunpack.c.h.b16 %v2342
    %v2686 = vunpack.c.l.b16 %v2343
    %v2687 = vunpack.c.h.b16 %v2343
    %v2688 = vunpack.c.l.b16 %v2344
    %v2689 = vunpack.c.h.b16 %v2344
    %v2690 = vunpack.c.l.b16 %v2345
    %v2691 = vunpack.c.h.b16 %v2345
    %v2692 = vunpack.c.l.b16 %v2346
    %v2693 = vunpack.c.h.b16 %v2346
    %v2694 = vunpack.c.l.b16 %v2347
    %v2695 = vunpack.c.h.b16 %v2347
    %v2696 = vunpack.c.l.b16 %v2348
    %v2697 = vunpack.c.h.b16 %v2348
    %v2698 = vunpack.c.l.b16 %v2349
    %v2699 = vunpack.c.h.b16 %v2349
    %v2700 = vunpack.c.l.b16 %v2350
    %v2701 = vunpack.c.h.b16 %v2350
    %v2702 = vunpack.c.l.b16 %v2351
    %v2703 = vunpack.c.h.b16 %v2351
    %v2704 = vunpack.c.l.b16 %v2352
    %v2705 = vunpack.c.h.b16 %v2352
    %v2706 = vunpack.c.l.b16 %v2353
    %v2707 = vunpack.c.h.b16 %v2353
    %v2708 = vunpack.c.l.b16 %v2354
    %v2709 = vunpack.c.h.b16 %v2354
    %v2710 = vunpack.c.l.b16 %v2355
    %v2711 = vunpack.c.h.b16 %v2355
    %v2712 = vunpack.c.l.b16 %v2356
    %v2713 = vunpack.c.h.b16 %v2356
    %v2714 = vunpack.c.l.b16 %v2357
    %v2715 = vunpack.c.h.b16 %v2357
    %v2716 = vunpack.c.l.b16 %v2358
    %v2717 = vunpack.c.h.b16 %v2358
    %v2718 = vunpack.c.l.b16 %v2359
    %v2719 = vunpack.c.h.b16 %v2359
    %v2720 = vunpack.c.l.b16 %v2360
    %v2721 = vunpack.c.h.b16 %v2360
    %v2722 = vunpack.c.l.b16 %v2361
    %v2723 = vunpack.c.h.b16 %v2361
    %v2724 = vunpack.c.l.b16 %v2362
    %v2725 = vunpack.c.h.b16 %v2362
    %v2726 = vunpack.c.l.b16 %v2363
    %v2727 = vunpack.c.h.b16 %v2363
    %v2728 = vunpack.c.l.b16 %v2364
    %v2729 = vunpack.c.h.b16 %v2364
    %v2730 = vunpack.c.l.b16 %v2365
    %v2731 = vunpack.c.h.b16 %v2365
    %v2732 = vunpack.c.l.b16 %v2366
    %v2733 = vunpack.c.h.b16 %v2366
    %v2734 = vunpack.c.l.b16 %v2367
    %v2735 = vunpack.c.h.b16 %v2367
    %v2736 = vunpack.c.l.b16 %v2368
    %v2737 = vunpack.c.h.b16 %v2368
    %v2738 = vunpack.c.l.b16 %v2369
    %v2739 = vunpack.c.h.b16 %v2369
    %v2740 = vunpack.c.l.b16 %v2370
    %v2741 = vunpack.c.h.b16 %v2370
    %v2742 = vunpack.c.l.b16 %v2371
    %v2743 = vunpack.c.h.b16 %v2371
    %v2744 = vunpack.c.l.b16 %v2372
    %v2745 = vunpack.c.h.b16 %v2372
    %v2746 = vunpack.c.l.b16 %v2373
    %v2747 = vunpack.c.h.b16 %v2373
    %v2748 = vunpack.c.l.b16 %v2374
    %v2749 = vunpack.c.h.b16 %v2374
    %v2750 = vunpack.c.l.b16 %v2375
    %v2751 = vunpack.c.h.b16 %v2375
    %v2752 = vunpack.c.l.b16 %v2376
    %v2753 = vunpack.c.h.b16 %v2376
    %v2754 = vunpack.c.l.b16 %v2377
    %v2755 = vunpack.c.h.b16 %v2377
    %v2756 = vunpack.c.l.b16 %v2378
    %v2757 = vunpack.c.h.b16 %v2378
    %v2758 = vunpack.c.l.b16 %v2379
    %v2759 = vunpack.c.h.b16 %v2379
    %v2760 = vunpack.c.l.b16 %v2380
    %v2761 = vunpack.c.h.b16 %v2380
    %v2762 = vunpack.c.l.b16 %v2381
    %v2763 = vunpack.c.h.b16 %v2381
    %v2764 = vunpack.c.l.b16 %v2382
    %v2765 = vunpack.c.h.b16 %v2382
    %v2766 = vunpack.c.l.b16 %v2383
    %v2767 = vunpack.c.h.b16 %v2383
    %v2768 = vunpack.c.l.b16 %v2384
    %v2769 = vunpack.c.h.b16 %v2384
    %v2770 = vunpack.c.l.b16 %v2385
    %v2771 = vunpack.c.h.b16 %v2385
    %v2772 = vunpack.c.l.b16 %v2386
    %v2773 = vunpack.c.h.b16 %v2386
    %v2774 = vunpack.c.l.b16 %v2387
    %v2775 = vunpack.c.h.b16 %v2387
    %v2776 = vunpack.c.l.b16 %v2388
    %v2777 = vunpack.c.h.b16 %v2388
    %v2778 = vunpack.c.l.b16 %v2389
    %v2779 = vunpack.c.h.b16 %v2389
    %v2780 = vunpack.c.l.b16 %v2390
    %v2781 = vunpack.c.h.b16 %v2390
    %v2782 = vunpack.c.l.b16 %v2391
    %v2783 = vunpack.c.h.b16 %v2391
    %v2784 = vunpack.c.l.b16 %v2392
    %v2785 = vunpack.c.h.b16 %v2392
    %v2786 = vunpack.c.l.b16 %v2393
    %v2787 = vunpack.c.h.b16 %v2393
    %v2788 = vunpack.c.l.b16 %v2394
    %v2789 = vunpack.c.h.b16 %v2394
    %v2790 = vunpack.c.l.b16 %v2395
    %v2791 = vunpack.c.h.b16 %v2395
    %v2792 = vunpack.c.l.b16 %v2396
    %v2793 = vunpack.c.h.b16 %v2396
    %v2794 = vunpack.c.l.b16 %v2397
    %v2795 = vunpack.c.h.b16 %v2397
    %v2796 = vunpack.c.l.b16 %v2398
    %v2797 = vunpack.c.h.b16 %v2398
    %v2798 = vunpack.c.l.b16 %v2399
    %v2799 = vunpack.c.h.b16 %v2399
    %v2800 = vunpack.c.l.b16 %v2400
    %v2801 = vunpack.c.h.b16 %v2400
    %v2802 = vunpack.c.l.b16 %v2401
    %v2803 = vunpack.c.h.b16 %v2401
    %v2804 = vunpack.c.l.b16 %v2402
    %v2805 = vunpack.c.h.b16 %v2402
    %v2806 = vunpack.c.l.b16 %v2403
    %v2807 = vunpack.c.h.b16 %v2403
    %v2808 = vunpack.c.l.b16 %v2404
    %v2809 = vunpack.c.h.b16 %v2404
    %v2810 = vunpack.c.l.b16 %v2405
    %v2811 = vunpack.c.h.b16 %v2405
    %v2812 = vunpack.c.l.b16 %v2406
    %v2813 = vunpack.c.h.b16 %v2406
    %v2814 = vunpack.c.l.b16 %v2407
    %v2815 = vunpack.c.h.b16 %v2407
    %v2816 = vunpack.c.l.b16 %v2408
    %v2817 = vunpack.c.h.b16 %v2408
    %v2818 = vunpack.c.l.b16 %v2409
    %v2819 = vunpack.c.h.b16 %v2409
    %v2820 = vunpack.c.l.b16 %v2410
    %v2821 = vunpack.c.h.b16 %v2410
    %v2822 = vunpack.c.l.b16 %v2411
    %v2823 = vunpack.c.h.b16 %v2411
    %v2824 = vunpack.c.l.b16 %v2412
    %v2825 = vunpack.c.h.b16 %v2412
    %v2826 = vunpack.c.l.b16 %v2413
    %v2827 = vunpack.c.h.b16 %v2413
    %v2828 = vunpack.c.l.b16 %v2414
    %v2829 = vunpack.c.h.b16 %v2414
    %v2830 = vunpack.c.l.b16 %v2415
    %v2831 = vunpack.c.h.b16 %v2415
    %v2832 = vunpack.c.l.b16 %v2416
    %v2833 = vunpack.c.h.b16 %v2416
    %v2834 = vunpack.c.l.b16 %v2417
    %v2835 = vunpack.c.h.b16 %v2417
    %v2836 = vunpack.c.l.b16 %v2418
    %v2837 = vunpack.c.h.b16 %v2418
    %v2838 = vunpack.c.l.b16 %v2419
    %v2839 = vunpack.c.h.b16 %v2419
    %v2840 = vpack.c.b16 %v2588, %v2584
    %v2841 = vpack.c.b16 %v2589, %v2585
    %v2842 = vpack.c.b16 %v2590, %v2586
    %v2843 = vpack.c.b16 %v2591, %v2587
    %v2844 = vpack.c.b16 %v2596, %v2592
    %v2845 = vpack.c.b16 %v2597, %v2593
    %v2846 = vpack.c.b16 %v2598, %v2594
    %v2847 = vpack.c.b16 %v2599, %v2595
    %v2848 = vpack.c.b16 %v2604, %v2600
    %v2849 = vpack.c.b16 %v2605, %v2601
    %v2850 = vpack.c.b16 %v2606, %v2602
    %v2851 = vpack.c.b16 %v2607, %v2603
    %v2852 = vpack.c.b16 %v2612, %v2608
    %v2853 = vpack.c.b16 %v2613, %v2609
    %v2854 = vpack.c.b16 %v2614, %v2610
    %v2855 = vpack.c.b16 %v2615, %v2611
    %v2856 = vpack.c.b16 %v2620, %v2616
    %v2857 = vpack.c.b16 %v2621, %v2617
    %v2858 = vpack.c.b16 %v2622, %v2618
    %v2859 = vpack.c.b16 %v2623, %v2619
    %v2860 = vpack.c.b16 %v2628, %v2624
    %v2861 = vpack.c.b16 %v2629, %v2625
    %v2862 = vpack.c.b16 %v2630, %v2626
    %v2863 = vpack.c.b16 %v2631, %v2627
    %v2864 = vpack.c.b16 %v2636, %v2632
    %v2865 = vpack.c.b16 %v2637, %v2633
    %v2866 = vpack.c.b16 %v2638, %v2634
    %v2867 = vpack.c.b16 %v2639, %v2635
    %v2868 = vpack.c.b16 %v2644, %v2640
    %v2869 = vpack.c.b16 %v2645, %v2641
    %v2870 = vpack.c.b16 %v2646, %v2642
    %v2871 = vpack.c.b16 %v2647, %v2643
    %v2872 = vpack.c.b16 %v2652, %v2648
    %v2873 = vpack.c.b16 %v2653, %v2649
    %v2874 = vpack.c.b16 %v2654, %v2650
    %v2875 = vpack.c.b16 %v2655, %v2651
    %v2876 = vpack.c.b16 %v2660, %v2656
    %v2877 = vpack.c.b16 %v2661, %v2657
    %v2878 = vpack.c.b16 %v2662, %v2658
    %v2879 = vpack.c.b16 %v2663, %v2659
    %v2880 = vpack.c.b16 %v2668, %v2664
    %v2881 = vpack.c.b16 %v2669, %v2665
    %v2882 = vpack.c.b16 %v2670, %v2666
    %v2883 = vpack.c.b16 %v2671, %v2667
    %v2884 = vpack.c.b16 %v2676, %v2672
    %v2885 = vpack.c.b16 %v2677, %v2673
    %v2886 = vpack.c.b16 %v2678, %v2674
    %v2887 = vpack.c.b16 %v2679, %v2675
    %v2888 = vpack.c.b16 %v2684, %v2680
    %v2889 = vpack.c.b16 %v2685, %v2681
    %v2890 = vpack.c.b16 %v2686, %v2682
    %v2891 = vpack.c.b16 %v2687, %v2683
    %v2892 = vpack.c.b16 %v2692, %v2688
    %v2893 = vpack.c.b16 %v2693, %v2689
    %v2894 = vpack.c.b16 %v2694, %v2690
    %v2895 = vpack.c.b16 %v2695, %v2691
    %v2896 = vpack.c.b16 %v2700, %v2696
    %v2897 = vpack.c.b16 %v2701, %v2697
    %v2898 = vpack.c.b16 %v2702, %v2698
    %v2899 = vpack.c.b16 %v2703, %v2699
    %v2900 = vpack.c.b16 %v2708, %v2704
    %v2901 = vpack.c.b16 %v2709, %v2705
    %v2902 = vpack.c.b16 %v2710, %v2706
    %v2903 = vpack.c.b16 %v2711, %v2707
    %v2904 = vpack.c.b16 %v2716, %v2712
    %v2905 = vpack.c.b16 %v2717, %v2713
    %v2906 = vpack.c.b16 %v2718, %v2714
    %v2907 = vpack.c.b16 %v2719, %v2715
    %v2908 = vpack.c.b16 %v2724, %v2720
    %v2909 = vpack.c.b16 %v2725, %v2721
    %v2910 = vpack.c.b16 %v2726, %v2722
    %v2911 = vpack.c.b16 %v2727, %v2723
    %v2912 = vpack.c.b16 %v2732, %v2728
    %v2913 = vpack.c.b16 %v2733, %v2729
    %v2914 = vpack.c.b16 %v2734, %v2730
    %v2915 = vpack.c.b16 %v2735, %v2731
    %v2916 = vpack.c.b16 %v2740, %v2736
    %v2917 = vpack.c.b16 %v2741, %v2737
    %v2918 = vpack.c.b16 %v2742, %v2738
    %v2919 = vpack.c.b16 %v2743, %v2739
    %v2920 = vpack.c.b16 %v2748, %v2744
    %v2921 = vpack.c.b16 %v2749, %v2745
    %v2922 = vpack.c.b16 %v2750, %v2746
    %v2923 = vpack.c.b16 %v2751, %v2747
    %v2924 = vpack.c.b16 %v2756, %v2752
    %v2925 = vpack.c.b16 %v2757, %v2753
    %v2926 = vpack.c.b16 %v2758, %v2754
    %v2927 = vpack.c.b16 %v2759, %v2755
    %v2928 = vpack.c.b16 %v2764, %v2760
    %v2929 = vpack.c.b16 %v2765, %v2761
    %v2930 = vpack.c.b16 %v2766, %v2762
    %v2931 = vpack.c.b16 %v2767, %v2763
    %v2932 = vpack.c.b16 %v2772, %v2768
    %v2933 = vpack.c.b16 %v2773, %v2769
    %v2934 = vpack.c.b16 %v2774, %v2770
    %v2935 = vpack.c.b16 %v2775, %v2771
    %v2936 = vpack.c.b16 %v2780, %v2776
    %v2937 = vpack.c.b16 %v2781, %v2777
    %v2938 = vpack.c.b16 %v2782, %v2778
    %v2939 = vpack.c.b16 %v2783, %v2779
    %v2940 = vpack.c.b16 %v2788, %v2784
    %v2941 = vpack.c.b16 %v2789, %v2785
    %v2942 = vpack.c.b16 %v2790, %v2786
    %v2943 = vpack.c.b16 %v2791, %v2787
    %v2944 = vpack.c.b16 %v2796, %v2792
    %v2945 = vpack.c.b16 %v2797, %v2793
    %v2946 = vpack.c.b16 %v2798, %v2794
    %v2947 = vpack.c.b16 %v2799, %v2795
    %v2948 = vpack.c.b16 %v2804, %v2800
    %v2949 = vpack.c.b16 %v2805, %v2801
    %v2950 = vpack.c.b16 %v2806, %v2802
    %v2951 = vpack.c.b16 %v2807, %v2803
    %v2952 = vpack.c.b16 %v2812, %v2808
    %v2953 = vpack.c.b16 %v2813, %v2809
    %v2954 = vpack.c.b16 %v2814, %v2810
    %v2955 = vpack.c.b16 %v2815, %v2811
    %v2956 = vpack.c.b16 %v2820, %v2816
    %v2957 = vpack.c.b16 %v2821, %v2817
    %v2958 = vpack.c.b16 %v2822, %v2818
    %v2959 = vpack.c.b16 %v2823, %v2819
    %v2960 = vpack.c.b16 %v2828, %v2824
    %v2961 = vpack.c.b16 %v2829, %v2825
    %v2962 = vpack.c.b16 %v2830, %v2826
    %v2963 = vpack.c.b16 %v2831, %v2827
    %v2964 = vpack.c.b16 %v2836, %v2832
    %v2965 = vpack.c.b16 %v2837, %v2833
    %v2966 = vpack.c.b16 %v2838, %v2834
    %v2967 = vpack.c.b16 %v2839, %v2835
    %3096 = vmatprep.subr.bf16.mxu0 %v2841
    %3097 = vmatpush1.bf16.msra.mxu0 %v2840
    %3098 = vmatprep.subr.bf16.mxu0 %v2845
    %3099 = vmatpush1.bf16.msra.mxu0 %v2844
    %3100 = vmatprep.subr.bf16.mxu0 %v2849
    %3101 = vmatpush1.bf16.msra.mxu0 %v2848
    %3102 = vmatprep.subr.bf16.mxu0 %v2853
    %3103 = vmatpush1.bf16.msra.mxu0 %v2852
    %3104 = vmatprep.subr.bf16.mxu0 %v2857
    %3105 = vmatpush1.bf16.msra.mxu0 %v2856
    %3106 = vmatprep.subr.bf16.mxu0 %v2861
    %3107 = vmatpush1.bf16.msra.mxu0 %v2860
    %3108 = vmatprep.subr.bf16.mxu0 %v2865
    %3109 = vmatpush1.bf16.msra.mxu0 %v2864
    %3110 = vmatprep.subr.bf16.mxu0 %v2869
    %3111 = vmatpush1.bf16.msra.mxu0 %v2868
    %3112 = vmatprep.subr.bf16.mxu0 %v2873
    %3113 = vmatpush1.bf16.msra.mxu0 %v2872
    %3114 = vmatprep.subr.bf16.mxu0 %v2877
    %3115 = vmatpush1.bf16.msra.mxu0 %v2876
    %3116 = vmatprep.subr.bf16.mxu0 %v2881
    %3117 = vmatpush1.bf16.msra.mxu0 %v2880
    %3118 = vmatprep.subr.bf16.mxu0 %v2885
    %3119 = vmatpush1.bf16.msra.mxu0 %v2884
    %3120 = vmatprep.subr.bf16.mxu0 %v2889
    %3121 = vmatpush1.bf16.msra.mxu0 %v2888
    %3122 = vmatprep.subr.bf16.mxu0 %v2893
    %3123 = vmatpush1.bf16.msra.mxu0 %v2892
    %3124 = vmatprep.subr.bf16.mxu0 %v2897
    %3125 = vmatpush1.bf16.msra.mxu0 %v2896
    %3126 = vmatprep.subr.bf16.mxu0 %v2901
    %3127 = vmatpush1.bf16.msra.mxu0 %v2900
    %3128 = vmatprep.mubr.bf16.mxu0 %v2449
    %3129 = vmatmul.mubr.bf16.gmra.mrb[0].mxu0 %v2448
    %v3130 = vpop.f32.mrb[0].mxu0
    %v3131 = vadd.f32 %v2425, %v3130
    %v3132 = vpop.f32.mrb[0].mxu0
    %v3133 = vadd.f32 %v2429, %v3132
    %v3134 = vpop.f32.mrb[0].mxu0
    %v3135 = vpop.f32.mrb[0].mxu0
    %3136 = vdwg.mxu0
    %3137 = vmatprep.subr.bf16.mxu0 %v2905
    %3138 = vmatpush1.bf16.msra.mxu0 %v2904
    %3139 = vmatprep.subr.bf16.mxu0 %v2909
    %3140 = vmatpush1.bf16.msra.mxu0 %v2908
    %3141 = vmatprep.subr.bf16.mxu0 %v2913
    %3142 = vmatpush1.bf16.msra.mxu0 %v2912
    %3143 = vmatprep.subr.bf16.mxu0 %v2917
    %3144 = vmatpush1.bf16.msra.mxu0 %v2916
    %3145 = vmatprep.subr.bf16.mxu0 %v2921
    %3146 = vmatpush1.bf16.msra.mxu0 %v2920
    %3147 = vmatprep.subr.bf16.mxu0 %v2925
    %3148 = vmatpush1.bf16.msra.mxu0 %v2924
    %3149 = vmatprep.subr.bf16.mxu0 %v2929
    %3150 = vmatpush1.bf16.msra.mxu0 %v2928
    %3151 = vmatprep.subr.bf16.mxu0 %v2933
    %3152 = vmatpush1.bf16.msra.mxu0 %v2932
    %3153 = vmatprep.subr.bf16.mxu0 %v2937
    %3154 = vmatpush1.bf16.msra.mxu0 %v2936
    %3155 = vmatprep.subr.bf16.mxu0 %v2941
    %3156 = vmatpush1.bf16.msra.mxu0 %v2940
    %3157 = vmatprep.subr.bf16.mxu0 %v2945
    %3158 = vmatpush1.bf16.msra.mxu0 %v2944
    %3159 = vmatprep.subr.bf16.mxu0 %v2949
    %3160 = vmatpush1.bf16.msra.mxu0 %v2948
    %3161 = vmatprep.subr.bf16.mxu0 %v2953
    %3162 = vmatpush1.bf16.msra.mxu0 %v2952
    %3163 = vmatprep.subr.bf16.mxu0 %v2957
    %3164 = vmatpush1.bf16.msra.mxu0 %v2956
    %3165 = vmatprep.subr.bf16.mxu0 %v2961
    %3166 = vmatpush1.bf16.msra.mxu0 %v2960
    %3167 = vmatprep.subr.bf16.mxu0 %v2965
    %3168 = vmatpush1.bf16.msra.mxu0 %v2964
    %3169 = vmatprep.mubr.bf16.mxu0 %v2451
    %3170 = vmatmul.mubr.bf16.gmra.mrb[0].mxu0 %v2450
    %v3171 = vpop.f32.mrb[0].mxu0
    %v3172 = vadd.f32 %v3131, %v3171
    %v3173 = vpop.f32.mrb[0].mxu0
    %v3174 = vadd.f32 %v3133, %v3173
    %v3175 = vpop.f32.mrb[0].mxu0
    %v3176 = vpop.f32.mrb[0].mxu0
    %3177 = vdwg.mxu0
    %3178 = vmatprep.subr.bf16.mxu0 %v2843
    %3179 = vmatpush1.bf16.msra.mxu0 %v2842
    %3180 = vmatprep.subr.bf16.mxu0 %v2847
    %3181 = vmatpush1.bf16.msra.mxu0 %v2846
    %3182 = vmatprep.subr.bf16.mxu0 %v2851
    %3183 = vmatpush1.bf16.msra.mxu0 %v2850
    %3184 = vmatprep.subr.bf16.mxu0 %v2855
    %3185 = vmatpush1.bf16.msra.mxu0 %v2854
    %3186 = vmatprep.subr.bf16.mxu0 %v2859
    %3187 = vmatpush1.bf16.msra.mxu0 %v2858
    %3188 = vmatprep.subr.bf16.mxu0 %v2863
    %3189 = vmatpush1.bf16.msra.mxu0 %v2862
    %3190 = vmatprep.subr.bf16.mxu0 %v2867
    %3191 = vmatpush1.bf16.msra.mxu0 %v2866
    %3192 = vmatprep.subr.bf16.mxu0 %v2871
    %3193 = vmatpush1.bf16.msra.mxu0 %v2870
    %3194 = vmatprep.subr.bf16.mxu0 %v2875
    %3195 = vmatpush1.bf16.msra.mxu0 %v2874
    %3196 = vmatprep.subr.bf16.mxu0 %v2879
    %3197 = vmatpush1.bf16.msra.mxu0 %v2878
    %3198 = vmatprep.subr.bf16.mxu0 %v2883
    %3199 = vmatpush1.bf16.msra.mxu0 %v2882
    %3200 = vmatprep.subr.bf16.mxu0 %v2887
    %3201 = vmatpush1.bf16.msra.mxu0 %v2886
    %3202 = vmatprep.subr.bf16.mxu0 %v2891
    %3203 = vmatpush1.bf16.msra.mxu0 %v2890
    %3204 = vmatprep.subr.bf16.mxu0 %v2895
    %3205 = vmatpush1.bf16.msra.mxu0 %v2894
    %3206 = vmatprep.subr.bf16.mxu0 %v2899
    %3207 = vmatpush1.bf16.msra.mxu0 %v2898
    %3208 = vmatprep.subr.bf16.mxu0 %v2903
    %3209 = vmatpush1.bf16.msra.mxu0 %v2902
    %3210 = vmatprep.mubr.bf16.mxu0 %v2449
    %3211 = vmatmul.mubr.bf16.gmra.mrb[0].mxu0 %v2448
    %v3212 = vpop.f32.mrb[0].mxu0
    %v3213 = vadd.f32 %v2433, %v3212
    %v3214 = vpop.f32.mrb[0].mxu0
    %v3215 = vadd.f32 %v2437, %v3214
    %v3216 = vpop.f32.mrb[0].mxu0
    %v3217 = vpop.f32.mrb[0].mxu0
    %3218 = vdwg.mxu0
    %3219 = vmatprep.subr.bf16.mxu0 %v2907
    %3220 = vmatpush1.bf16.msra.mxu0 %v2906
    %3221 = vmatprep.subr.bf16.mxu0 %v2911
    %3222 = vmatpush1.bf16.msra.mxu0 %v2910
    %3223 = vmatprep.subr.bf16.mxu0 %v2915
    %3224 = vmatpush1.bf16.msra.mxu0 %v2914
    %3225 = vmatprep.subr.bf16.mxu0 %v2919
    %3226 = vmatpush1.bf16.msra.mxu0 %v2918
    %3227 = vmatprep.subr.bf16.mxu0 %v2923
    %3228 = vmatpush1.bf16.msra.mxu0 %v2922
    %3229 = vmatprep.subr.bf16.mxu0 %v2927
    %3230 = vmatpush1.bf16.msra.mxu0 %v2926
    %3231 = vmatprep.subr.bf16.mxu0 %v2931
    %3232 = vmatpush1.bf16.msra.mxu0 %v2930
    %3233 = vmatprep.subr.bf16.mxu0 %v2935
    %3234 = vmatpush1.bf16.msra.mxu0 %v2934
    %3235 = vmatprep.subr.bf16.mxu0 %v2939
    %3236 = vmatpush1.bf16.msra.mxu0 %v2938
    %3237 = vmatprep.subr.bf16.mxu0 %v2943
    %3238 = vmatpush1.bf16.msra.mxu0 %v2942
    %3239 = vmatprep.subr.bf16.mxu0 %v2947
    %3240 = vmatpush1.bf16.msra.mxu0 %v2946
    %3241 = vmatprep.subr.bf16.mxu0 %v2951
    %3242 = vmatpush1.bf16.msra.mxu0 %v2950
    %3243 = vmatprep.subr.bf16.mxu0 %v2955
    %3244 = vmatpush1.bf16.msra.mxu0 %v2954
    %3245 = vmatprep.subr.bf16.mxu0 %v2959
    %3246 = vmatpush1.bf16.msra.mxu0 %v2958
    %3247 = vmatprep.subr.bf16.mxu0 %v2963
    %3248 = vmatpush1.bf16.msra.mxu0 %v2962
    %3249 = vmatprep.subr.bf16.mxu0 %v2967
    %3250 = vmatpush1.bf16.msra.mxu0 %v2966
    %3251 = vmatprep.mubr.bf16.mxu0 %v2451
    %3252 = vmatmul.mubr.bf16.gmra.mrb[0].mxu0 %v2450
    %v3253 = vpop.f32.mrb[0].mxu0
    %v3254 = vadd.f32 %v3213, %v3253
    %v3255 = vpop.f32.mrb[0].mxu0
    %v3256 = vadd.f32 %v3215, %v3255
    %v3257 = vpop.f32.mrb[0].mxu0
    %v3258 = vpop.f32.mrb[0].mxu0
    %3259 = vdwg.mxu0
    %v3260 = vmul.f32 %v3172, 0.01
    %v3261 = vmul.f32 %v3174, 0.01
    %v3262 = vmul.f32 %v3254, 0.01
    %v3263 = vmul.f32 %v3256, 0.01
    %v3264 = vmax.f32 %v3172, %v3260
    %v3265 = vmax.f32 %v3174, %v3261
    %v3266 = vmax.f32 %v3254, %v3262
    %v3267 = vmax.f32 %v3256, %v3263
    %v3268 = vpack.c.bf16 %v3264, %v3264
    %v3269 = vpack.c.bf16 %v3265, %v3265
    %v3270 = vpack.c.bf16 %v3266, %v3266
    %v3271 = vpack.c.bf16 %v3267, %v3267
    %v3276 = vunpack.c.l.b16 %v3268
    %v3277 = vunpack.c.l.b16 %v3269
    %v3278 = vunpack.c.l.b16 %v3270
    %v3279 = vunpack.c.l.b16 %v3271
    %v3280 = vpack.c.b16 %v3277, %v3276
    %v3281 = vpack.c.b16 %v3279, %v3278
    %3284 = vst [vmem:[#allocation2] sm:$0xff] %v3280
    %3285 = vst [vmem:[#allocation2 + $0x8] sm:$0xff] %v3281
    %v3286 = vld [vmem:[#allocation2] sm:$0xff]
    %v3287 = vld [vmem:[#allocation2 + $0x8] sm:$0xff]
    %v3288 = vld [vmem:[#allocation12] sm:$0xff]
    %v3289 = vld [vmem:[#allocation12 + $0x8] sm:$0xff]
    %v3290 = vld [vmem:[#allocation12 + $0x10] sm:$0xff]
    %v3291 = vld [vmem:[#allocation12 + $0x18] sm:$0xff]
    %v3292 = vld [vmem:[#allocation12 + $0x20] sm:$0xff]
    %v3293 = vld [vmem:[#allocation12 + $0x28] sm:$0xff]
    %v3294 = vld [vmem:[#allocation12 + $0x30] sm:$0xff]
    %v3295 = vld [vmem:[#allocation12 + $0x38] sm:$0xff]
    %v3296 = vld [vmem:[#allocation12 + $0x40] sm:$0xff]
    %v3297 = vld [vmem:[#allocation12 + $0x48] sm:$0xff]
    %v3298 = vld [vmem:[#allocation12 + $0x50] sm:$0xff]
    %v3299 = vld [vmem:[#allocation12 + $0x58] sm:$0xff]
    %v3300 = vld [vmem:[#allocation12 + $0x60] sm:$0xff]
    %v3301 = vld [vmem:[#allocation12 + $0x68] sm:$0xff]
    %v3302 = vld [vmem:[#allocation12 + $0x70] sm:$0xff]
    %v3303 = vld [vmem:[#allocation12 + $0x78] sm:$0xff]
    %v3304 = vld [vmem:[#allocation12 + $0x80] sm:$0xff]
    %v3305 = vld [vmem:[#allocation12 + $0x88] sm:$0xff]
    %v3306 = vld [vmem:[#allocation12 + $0x90] sm:$0xff]
    %v3307 = vld [vmem:[#allocation12 + $0x98] sm:$0xff]
    %v3308 = vld [vmem:[#allocation12 + $0xa0] sm:$0xff]
    %v3309 = vld [vmem:[#allocation12 + $0xa8] sm:$0xff]
    %v3310 = vld [vmem:[#allocation12 + $0xb0] sm:$0xff]
    %v3311 = vld [vmem:[#allocation12 + $0xb8] sm:$0xff]
    %v3312 = vld [vmem:[#allocation12 + $0xc0] sm:$0xff]
    %v3313 = vld [vmem:[#allocation12 + $0xc8] sm:$0xff]
    %v3314 = vld [vmem:[#allocation12 + $0xd0] sm:$0xff]
    %v3315 = vld [vmem:[#allocation12 + $0xd8] sm:$0xff]
    %v3316 = vld [vmem:[#allocation12 + $0xe0] sm:$0xff]
    %v3317 = vld [vmem:[#allocation12 + $0xe8] sm:$0xff]
    %v3318 = vld [vmem:[#allocation12 + $0xf0] sm:$0xff]
    %v3319 = vld [vmem:[#allocation12 + $0xf8] sm:$0xff]
    %v3320 = vld [vmem:[#allocation12 + $0x100] sm:$0xff]
    %v3321 = vld [vmem:[#allocation12 + $0x108] sm:$0xff]
    %v3322 = vld [vmem:[#allocation12 + $0x110] sm:$0xff]
    %v3323 = vld [vmem:[#allocation12 + $0x118] sm:$0xff]
    %v3324 = vld [vmem:[#allocation12 + $0x120] sm:$0xff]
    %v3325 = vld [vmem:[#allocation12 + $0x128] sm:$0xff]
    %v3326 = vld [vmem:[#allocation12 + $0x130] sm:$0xff]
    %v3327 = vld [vmem:[#allocation12 + $0x138] sm:$0xff]
    %v3328 = vld [vmem:[#allocation12 + $0x140] sm:$0xff]
    %v3329 = vld [vmem:[#allocation12 + $0x148] sm:$0xff]
    %v3330 = vld [vmem:[#allocation12 + $0x150] sm:$0xff]
    %v3331 = vld [vmem:[#allocation12 + $0x158] sm:$0xff]
    %v3332 = vld [vmem:[#allocation12 + $0x160] sm:$0xff]
    %v3333 = vld [vmem:[#allocation12 + $0x168] sm:$0xff]
    %v3334 = vld [vmem:[#allocation12 + $0x170] sm:$0xff]
    %v3335 = vld [vmem:[#allocation12 + $0x178] sm:$0xff]
    %v3336 = vld [vmem:[#allocation12 + $0x180] sm:$0xff]
    %v3337 = vld [vmem:[#allocation12 + $0x188] sm:$0xff]
    %v3338 = vld [vmem:[#allocation12 + $0x190] sm:$0xff]
    %v3339 = vld [vmem:[#allocation12 + $0x198] sm:$0xff]
    %v3340 = vld [vmem:[#allocation12 + $0x1a0] sm:$0xff]
    %v3341 = vld [vmem:[#allocation12 + $0x1a8] sm:$0xff]
    %v3342 = vld [vmem:[#allocation12 + $0x1b0] sm:$0xff]
    %v3343 = vld [vmem:[#allocation12 + $0x1b8] sm:$0xff]
    %v3344 = vld [vmem:[#allocation12 + $0x1c0] sm:$0xff]
    %v3345 = vld [vmem:[#allocation12 + $0x1c8] sm:$0xff]
    %v3346 = vld [vmem:[#allocation12 + $0x1d0] sm:$0xff]
    %v3347 = vld [vmem:[#allocation12 + $0x1d8] sm:$0xff]
    %v3348 = vld [vmem:[#allocation12 + $0x1e0] sm:$0xff]
    %v3349 = vld [vmem:[#allocation12 + $0x1e8] sm:$0xff]
    %v3350 = vld [vmem:[#allocation12 + $0x1f0] sm:$0xff]
    %v3351 = vld [vmem:[#allocation12 + $0x1f8] sm:$0xff]
    %v3352 = vld [vmem:[#allocation12 + $0x200] sm:$0xff]
    %v3353 = vld [vmem:[#allocation12 + $0x208] sm:$0xff]
    %v3354 = vld [vmem:[#allocation12 + $0x210] sm:$0xff]
    %v3355 = vld [vmem:[#allocation12 + $0x218] sm:$0xff]
    %v3356 = vld [vmem:[#allocation12 + $0x220] sm:$0xff]
    %v3357 = vld [vmem:[#allocation12 + $0x228] sm:$0xff]
    %v3358 = vld [vmem:[#allocation12 + $0x230] sm:$0xff]
    %v3359 = vld [vmem:[#allocation12 + $0x238] sm:$0xff]
    %v3360 = vld [vmem:[#allocation12 + $0x240] sm:$0xff]
    %v3361 = vld [vmem:[#allocation12 + $0x248] sm:$0xff]
    %v3362 = vld [vmem:[#allocation12 + $0x250] sm:$0xff]
    %v3363 = vld [vmem:[#allocation12 + $0x258] sm:$0xff]
    %v3364 = vld [vmem:[#allocation12 + $0x260] sm:$0xff]
    %v3365 = vld [vmem:[#allocation12 + $0x268] sm:$0xff]
    %v3366 = vld [vmem:[#allocation12 + $0x270] sm:$0xff]
    %v3367 = vld [vmem:[#allocation12 + $0x278] sm:$0xff]
    %v3368 = vld [vmem:[#allocation12 + $0x280] sm:$0xff]
    %v3369 = vld [vmem:[#allocation12 + $0x288] sm:$0xff]
    %v3370 = vld [vmem:[#allocation12 + $0x290] sm:$0xff]
    %v3371 = vld [vmem:[#allocation12 + $0x298] sm:$0xff]
    %v3372 = vld [vmem:[#allocation12 + $0x2a0] sm:$0xff]
    %v3373 = vld [vmem:[#allocation12 + $0x2a8] sm:$0xff]
    %v3374 = vld [vmem:[#allocation12 + $0x2b0] sm:$0xff]
    %v3375 = vld [vmem:[#allocation12 + $0x2b8] sm:$0xff]
    %v3376 = vld [vmem:[#allocation12 + $0x2c0] sm:$0xff]
    %v3377 = vld [vmem:[#allocation12 + $0x2c8] sm:$0xff]
    %v3378 = vld [vmem:[#allocation12 + $0x2d0] sm:$0xff]
    %v3379 = vld [vmem:[#allocation12 + $0x2d8] sm:$0xff]
    %v3380 = vld [vmem:[#allocation12 + $0x2e0] sm:$0xff]
    %v3381 = vld [vmem:[#allocation12 + $0x2e8] sm:$0xff]
    %v3382 = vld [vmem:[#allocation12 + $0x2f0] sm:$0xff]
    %v3383 = vld [vmem:[#allocation12 + $0x2f8] sm:$0xff]
    %v3384 = vld [vmem:[#allocation12 + $0x300] sm:$0xff]
    %v3385 = vld [vmem:[#allocation12 + $0x308] sm:$0xff]
    %v3386 = vld [vmem:[#allocation12 + $0x310] sm:$0xff]
    %v3387 = vld [vmem:[#allocation12 + $0x318] sm:$0xff]
    %v3388 = vld [vmem:[#allocation12 + $0x320] sm:$0xff]
    %v3389 = vld [vmem:[#allocation12 + $0x328] sm:$0xff]
    %v3390 = vld [vmem:[#allocation12 + $0x330] sm:$0xff]
    %v3391 = vld [vmem:[#allocation12 + $0x338] sm:$0xff]
    %v3392 = vld [vmem:[#allocation12 + $0x340] sm:$0xff]
    %v3393 = vld [vmem:[#allocation12 + $0x348] sm:$0xff]
    %v3394 = vld [vmem:[#allocation12 + $0x350] sm:$0xff]
    %v3395 = vld [vmem:[#allocation12 + $0x358] sm:$0xff]
    %v3396 = vld [vmem:[#allocation12 + $0x360] sm:$0xff]
    %v3397 = vld [vmem:[#allocation12 + $0x368] sm:$0xff]
    %v3398 = vld [vmem:[#allocation12 + $0x370] sm:$0xff]
    %v3399 = vld [vmem:[#allocation12 + $0x378] sm:$0xff]
    %v3400 = vld [vmem:[#allocation12 + $0x380] sm:$0xff]
    %v3401 = vld [vmem:[#allocation12 + $0x388] sm:$0xff]
    %v3402 = vld [vmem:[#allocation12 + $0x390] sm:$0xff]
    %v3403 = vld [vmem:[#allocation12 + $0x398] sm:$0xff]
    %v3404 = vld [vmem:[#allocation12 + $0x3a0] sm:$0xff]
    %v3405 = vld [vmem:[#allocation12 + $0x3a8] sm:$0xff]
    %v3406 = vld [vmem:[#allocation12 + $0x3b0] sm:$0xff]
    %v3407 = vld [vmem:[#allocation12 + $0x3b8] sm:$0xff]
    %v3408 = vld [vmem:[#allocation12 + $0x3c0] sm:$0xff]
    %v3409 = vld [vmem:[#allocation12 + $0x3c8] sm:$0xff]
    %v3410 = vld [vmem:[#allocation12 + $0x3d0] sm:$0xff]
    %v3411 = vld [vmem:[#allocation12 + $0x3d8] sm:$0xff]
    %v3412 = vld [vmem:[#allocation12 + $0x3e0] sm:$0xff]
    %v3413 = vld [vmem:[#allocation12 + $0x3e8] sm:$0xff]
    %v3414 = vld [vmem:[#allocation12 + $0x3f0] sm:$0xff]
    %v3415 = vld [vmem:[#allocation12 + $0x3f8] sm:$0xff]
    %v3416 = vld [vmem:[%s10] sm:$0xf]
    %v3418 = vlaneseq
    %v3419 = vshrl.u32 %v3418, 7
    %v3420 = vsub.s32 0, %v3419
    %v3421 = vrot.slane %v3416, %v3420
    %v3422 = vlaneseq
    %v3423 = vshrl.u32 %v3422, 7
    %v3424 = vsub.s32 1, %v3423
    %v3425 = vrot.slane %v3416, %v3424
    %v3426 = vlaneseq
    %v3427 = vshrl.u32 %v3426, 7
    %v3428 = vsub.s32 2, %v3427
    %v3429 = vrot.slane %v3416, %v3428
    %v3430 = vlaneseq
    %v3431 = vshrl.u32 %v3430, 7
    %v3432 = vsub.s32 3, %v3431
    %v3433 = vrot.slane %v3416, %v3432
    %v3440 = vunpack.c.l.b16 %v3286
    %v3441 = vunpack.c.h.b16 %v3286
    %v3442 = vunpack.c.l.b16 %v3287
    %v3443 = vunpack.c.h.b16 %v3287
    %v3444 = vpack.c.b16 %v3440, %v3440
    %v3445 = vpack.c.b16 %v3441, %v3441
    %v3446 = vpack.c.b16 %v3442, %v3442
    %v3447 = vpack.c.b16 %v3443, %v3443
    %v3580 = vunpack.c.l.b16 %v3288
    %v3581 = vunpack.c.h.b16 %v3288
    %v3582 = vunpack.c.l.b16 %v3289
    %v3583 = vunpack.c.h.b16 %v3289
    %v3584 = vunpack.c.l.b16 %v3290
    %v3585 = vunpack.c.h.b16 %v3290
    %v3586 = vunpack.c.l.b16 %v3291
    %v3587 = vunpack.c.h.b16 %v3291
    %v3588 = vunpack.c.l.b16 %v3292
    %v3589 = vunpack.c.h.b16 %v3292
    %v3590 = vunpack.c.l.b16 %v3293
    %v3591 = vunpack.c.h.b16 %v3293
    %v3592 = vunpack.c.l.b16 %v3294
    %v3593 = vunpack.c.h.b16 %v3294
    %v3594 = vunpack.c.l.b16 %v3295
    %v3595 = vunpack.c.h.b16 %v3295
    %v3596 = vunpack.c.l.b16 %v3296
    %v3597 = vunpack.c.h.b16 %v3296
    %v3598 = vunpack.c.l.b16 %v3297
    %v3599 = vunpack.c.h.b16 %v3297
    %v3600 = vunpack.c.l.b16 %v3298
    %v3601 = vunpack.c.h.b16 %v3298
    %v3602 = vunpack.c.l.b16 %v3299
    %v3603 = vunpack.c.h.b16 %v3299
    %v3604 = vunpack.c.l.b16 %v3300
    %v3605 = vunpack.c.h.b16 %v3300
    %v3606 = vunpack.c.l.b16 %v3301
    %v3607 = vunpack.c.h.b16 %v3301
    %v3608 = vunpack.c.l.b16 %v3302
    %v3609 = vunpack.c.h.b16 %v3302
    %v3610 = vunpack.c.l.b16 %v3303
    %v3611 = vunpack.c.h.b16 %v3303
    %v3612 = vunpack.c.l.b16 %v3304
    %v3613 = vunpack.c.h.b16 %v3304
    %v3614 = vunpack.c.l.b16 %v3305
    %v3615 = vunpack.c.h.b16 %v3305
    %v3616 = vunpack.c.l.b16 %v3306
    %v3617 = vunpack.c.h.b16 %v3306
    %v3618 = vunpack.c.l.b16 %v3307
    %v3619 = vunpack.c.h.b16 %v3307
    %v3620 = vunpack.c.l.b16 %v3308
    %v3621 = vunpack.c.h.b16 %v3308
    %v3622 = vunpack.c.l.b16 %v3309
    %v3623 = vunpack.c.h.b16 %v3309
    %v3624 = vunpack.c.l.b16 %v3310
    %v3625 = vunpack.c.h.b16 %v3310
    %v3626 = vunpack.c.l.b16 %v3311
    %v3627 = vunpack.c.h.b16 %v3311
    %v3628 = vunpack.c.l.b16 %v3312
    %v3629 = vunpack.c.h.b16 %v3312
    %v3630 = vunpack.c.l.b16 %v3313
    %v3631 = vunpack.c.h.b16 %v3313
    %v3632 = vunpack.c.l.b16 %v3314
    %v3633 = vunpack.c.h.b16 %v3314
    %v3634 = vunpack.c.l.b16 %v3315
    %v3635 = vunpack.c.h.b16 %v3315
    %v3636 = vunpack.c.l.b16 %v3316
    %v3637 = vunpack.c.h.b16 %v3316
    %v3638 = vunpack.c.l.b16 %v3317
    %v3639 = vunpack.c.h.b16 %v3317
    %v3640 = vunpack.c.l.b16 %v3318
    %v3641 = vunpack.c.h.b16 %v3318
    %v3642 = vunpack.c.l.b16 %v3319
    %v3643 = vunpack.c.h.b16 %v3319
    %v3644 = vunpack.c.l.b16 %v3320
    %v3645 = vunpack.c.h.b16 %v3320
    %v3646 = vunpack.c.l.b16 %v3321
    %v3647 = vunpack.c.h.b16 %v3321
    %v3648 = vunpack.c.l.b16 %v3322
    %v3649 = vunpack.c.h.b16 %v3322
    %v3650 = vunpack.c.l.b16 %v3323
    %v3651 = vunpack.c.h.b16 %v3323
    %v3652 = vunpack.c.l.b16 %v3324
    %v3653 = vunpack.c.h.b16 %v3324
    %v3654 = vunpack.c.l.b16 %v3325
    %v3655 = vunpack.c.h.b16 %v3325
    %v3656 = vunpack.c.l.b16 %v3326
    %v3657 = vunpack.c.h.b16 %v3326
    %v3658 = vunpack.c.l.b16 %v3327
    %v3659 = vunpack.c.h.b16 %v3327
    %v3660 = vunpack.c.l.b16 %v3328
    %v3661 = vunpack.c.h.b16 %v3328
    %v3662 = vunpack.c.l.b16 %v3329
    %v3663 = vunpack.c.h.b16 %v3329
    %v3664 = vunpack.c.l.b16 %v3330
    %v3665 = vunpack.c.h.b16 %v3330
    %v3666 = vunpack.c.l.b16 %v3331
    %v3667 = vunpack.c.h.b16 %v3331
    %v3668 = vunpack.c.l.b16 %v3332
    %v3669 = vunpack.c.h.b16 %v3332
    %v3670 = vunpack.c.l.b16 %v3333
    %v3671 = vunpack.c.h.b16 %v3333
    %v3672 = vunpack.c.l.b16 %v3334
    %v3673 = vunpack.c.h.b16 %v3334
    %v3674 = vunpack.c.l.b16 %v3335
    %v3675 = vunpack.c.h.b16 %v3335
    %v3676 = vunpack.c.l.b16 %v3336
    %v3677 = vunpack.c.h.b16 %v3336
    %v3678 = vunpack.c.l.b16 %v3337
    %v3679 = vunpack.c.h.b16 %v3337
    %v3680 = vunpack.c.l.b16 %v3338
    %v3681 = vunpack.c.h.b16 %v3338
    %v3682 = vunpack.c.l.b16 %v3339
    %v3683 = vunpack.c.h.b16 %v3339
    %v3684 = vunpack.c.l.b16 %v3340
    %v3685 = vunpack.c.h.b16 %v3340
    %v3686 = vunpack.c.l.b16 %v3341
    %v3687 = vunpack.c.h.b16 %v3341
    %v3688 = vunpack.c.l.b16 %v3342
    %v3689 = vunpack.c.h.b16 %v3342
    %v3690 = vunpack.c.l.b16 %v3343
    %v3691 = vunpack.c.h.b16 %v3343
    %v3692 = vunpack.c.l.b16 %v3344
    %v3693 = vunpack.c.h.b16 %v3344
    %v3694 = vunpack.c.l.b16 %v3345
    %v3695 = vunpack.c.h.b16 %v3345
    %v3696 = vunpack.c.l.b16 %v3346
    %v3697 = vunpack.c.h.b16 %v3346
    %v3698 = vunpack.c.l.b16 %v3347
    %v3699 = vunpack.c.h.b16 %v3347
    %v3700 = vunpack.c.l.b16 %v3348
    %v3701 = vunpack.c.h.b16 %v3348
    %v3702 = vunpack.c.l.b16 %v3349
    %v3703 = vunpack.c.h.b16 %v3349
    %v3704 = vunpack.c.l.b16 %v3350
    %v3705 = vunpack.c.h.b16 %v3350
    %v3706 = vunpack.c.l.b16 %v3351
    %v3707 = vunpack.c.h.b16 %v3351
    %v3708 = vunpack.c.l.b16 %v3352
    %v3709 = vunpack.c.h.b16 %v3352
    %v3710 = vunpack.c.l.b16 %v3353
    %v3711 = vunpack.c.h.b16 %v3353
    %v3712 = vunpack.c.l.b16 %v3354
    %v3713 = vunpack.c.h.b16 %v3354
    %v3714 = vunpack.c.l.b16 %v3355
    %v3715 = vunpack.c.h.b16 %v3355
    %v3716 = vunpack.c.l.b16 %v3356
    %v3717 = vunpack.c.h.b16 %v3356
    %v3718 = vunpack.c.l.b16 %v3357
    %v3719 = vunpack.c.h.b16 %v3357
    %v3720 = vunpack.c.l.b16 %v3358
    %v3721 = vunpack.c.h.b16 %v3358
    %v3722 = vunpack.c.l.b16 %v3359
    %v3723 = vunpack.c.h.b16 %v3359
    %v3724 = vunpack.c.l.b16 %v3360
    %v3725 = vunpack.c.h.b16 %v3360
    %v3726 = vunpack.c.l.b16 %v3361
    %v3727 = vunpack.c.h.b16 %v3361
    %v3728 = vunpack.c.l.b16 %v3362
    %v3729 = vunpack.c.h.b16 %v3362
    %v3730 = vunpack.c.l.b16 %v3363
    %v3731 = vunpack.c.h.b16 %v3363
    %v3732 = vunpack.c.l.b16 %v3364
    %v3733 = vunpack.c.h.b16 %v3364
    %v3734 = vunpack.c.l.b16 %v3365
    %v3735 = vunpack.c.h.b16 %v3365
    %v3736 = vunpack.c.l.b16 %v3366
    %v3737 = vunpack.c.h.b16 %v3366
    %v3738 = vunpack.c.l.b16 %v3367
    %v3739 = vunpack.c.h.b16 %v3367
    %v3740 = vunpack.c.l.b16 %v3368
    %v3741 = vunpack.c.h.b16 %v3368
    %v3742 = vunpack.c.l.b16 %v3369
    %v3743 = vunpack.c.h.b16 %v3369
    %v3744 = vunpack.c.l.b16 %v3370
    %v3745 = vunpack.c.h.b16 %v3370
    %v3746 = vunpack.c.l.b16 %v3371
    %v3747 = vunpack.c.h.b16 %v3371
    %v3748 = vunpack.c.l.b16 %v3372
    %v3749 = vunpack.c.h.b16 %v3372
    %v3750 = vunpack.c.l.b16 %v3373
    %v3751 = vunpack.c.h.b16 %v3373
    %v3752 = vunpack.c.l.b16 %v3374
    %v3753 = vunpack.c.h.b16 %v3374
    %v3754 = vunpack.c.l.b16 %v3375
    %v3755 = vunpack.c.h.b16 %v3375
    %v3756 = vunpack.c.l.b16 %v3376
    %v3757 = vunpack.c.h.b16 %v3376
    %v3758 = vunpack.c.l.b16 %v3377
    %v3759 = vunpack.c.h.b16 %v3377
    %v3760 = vunpack.c.l.b16 %v3378
    %v3761 = vunpack.c.h.b16 %v3378
    %v3762 = vunpack.c.l.b16 %v3379
    %v3763 = vunpack.c.h.b16 %v3379
    %v3764 = vunpack.c.l.b16 %v3380
    %v3765 = vunpack.c.h.b16 %v3380
    %v3766 = vunpack.c.l.b16 %v3381
    %v3767 = vunpack.c.h.b16 %v3381
    %v3768 = vunpack.c.l.b16 %v3382
    %v3769 = vunpack.c.h.b16 %v3382
    %v3770 = vunpack.c.l.b16 %v3383
    %v3771 = vunpack.c.h.b16 %v3383
    %v3772 = vunpack.c.l.b16 %v3384
    %v3773 = vunpack.c.h.b16 %v3384
    %v3774 = vunpack.c.l.b16 %v3385
    %v3775 = vunpack.c.h.b16 %v3385
    %v3776 = vunpack.c.l.b16 %v3386
    %v3777 = vunpack.c.h.b16 %v3386
    %v3778 = vunpack.c.l.b16 %v3387
    %v3779 = vunpack.c.h.b16 %v3387
    %v3780 = vunpack.c.l.b16 %v3388
    %v3781 = vunpack.c.h.b16 %v3388
    %v3782 = vunpack.c.l.b16 %v3389
    %v3783 = vunpack.c.h.b16 %v3389
    %v3784 = vunpack.c.l.b16 %v3390
    %v3785 = vunpack.c.h.b16 %v3390
    %v3786 = vunpack.c.l.b16 %v3391
    %v3787 = vunpack.c.h.b16 %v3391
    %v3788 = vunpack.c.l.b16 %v3392
    %v3789 = vunpack.c.h.b16 %v3392
    %v3790 = vunpack.c.l.b16 %v3393
    %v3791 = vunpack.c.h.b16 %v3393
    %v3792 = vunpack.c.l.b16 %v3394
    %v3793 = vunpack.c.h.b16 %v3394
    %v3794 = vunpack.c.l.b16 %v3395
    %v3795 = vunpack.c.h.b16 %v3395
    %v3796 = vunpack.c.l.b16 %v3396
    %v3797 = vunpack.c.h.b16 %v3396
    %v3798 = vunpack.c.l.b16 %v3397
    %v3799 = vunpack.c.h.b16 %v3397
    %v3800 = vunpack.c.l.b16 %v3398
    %v3801 = vunpack.c.h.b16 %v3398
    %v3802 = vunpack.c.l.b16 %v3399
    %v3803 = vunpack.c.h.b16 %v3399
    %v3804 = vunpack.c.l.b16 %v3400
    %v3805 = vunpack.c.h.b16 %v3400
    %v3806 = vunpack.c.l.b16 %v3401
    %v3807 = vunpack.c.h.b16 %v3401
    %v3808 = vunpack.c.l.b16 %v3402
    %v3809 = vunpack.c.h.b16 %v3402
    %v3810 = vunpack.c.l.b16 %v3403
    %v3811 = vunpack.c.h.b16 %v3403
    %v3812 = vunpack.c.l.b16 %v3404
    %v3813 = vunpack.c.h.b16 %v3404
    %v3814 = vunpack.c.l.b16 %v3405
    %v3815 = vunpack.c.h.b16 %v3405
    %v3816 = vunpack.c.l.b16 %v3406
    %v3817 = vunpack.c.h.b16 %v3406
    %v3818 = vunpack.c.l.b16 %v3407
    %v3819 = vunpack.c.h.b16 %v3407
    %v3820 = vunpack.c.l.b16 %v3408
    %v3821 = vunpack.c.h.b16 %v3408
    %v3822 = vunpack.c.l.b16 %v3409
    %v3823 = vunpack.c.h.b16 %v3409
    %v3824 = vunpack.c.l.b16 %v3410
    %v3825 = vunpack.c.h.b16 %v3410
    %v3826 = vunpack.c.l.b16 %v3411
    %v3827 = vunpack.c.h.b16 %v3411
    %v3828 = vunpack.c.l.b16 %v3412
    %v3829 = vunpack.c.h.b16 %v3412
    %v3830 = vunpack.c.l.b16 %v3413
    %v3831 = vunpack.c.h.b16 %v3413
    %v3832 = vunpack.c.l.b16 %v3414
    %v3833 = vunpack.c.h.b16 %v3414
    %v3834 = vunpack.c.l.b16 %v3415
    %v3835 = vunpack.c.h.b16 %v3415
    %v3836 = vpack.c.b16 %v3584, %v3580
    %v3837 = vpack.c.b16 %v3585, %v3581
    %v3838 = vpack.c.b16 %v3586, %v3582
    %v3839 = vpack.c.b16 %v3587, %v3583
    %v3840 = vpack.c.b16 %v3592, %v3588
    %v3841 = vpack.c.b16 %v3593, %v3589
    %v3842 = vpack.c.b16 %v3594, %v3590
    %v3843 = vpack.c.b16 %v3595, %v3591
    %v3844 = vpack.c.b16 %v3600, %v3596
    %v3845 = vpack.c.b16 %v3601, %v3597
    %v3846 = vpack.c.b16 %v3602, %v3598
    %v3847 = vpack.c.b16 %v3603, %v3599
    %v3848 = vpack.c.b16 %v3608, %v3604
    %v3849 = vpack.c.b16 %v3609, %v3605
    %v3850 = vpack.c.b16 %v3610, %v3606
    %v3851 = vpack.c.b16 %v3611, %v3607
    %v3852 = vpack.c.b16 %v3616, %v3612
    %v3853 = vpack.c.b16 %v3617, %v3613
    %v3854 = vpack.c.b16 %v3618, %v3614
    %v3855 = vpack.c.b16 %v3619, %v3615
    %v3856 = vpack.c.b16 %v3624, %v3620
    %v3857 = vpack.c.b16 %v3625, %v3621
    %v3858 = vpack.c.b16 %v3626, %v3622
    %v3859 = vpack.c.b16 %v3627, %v3623
    %v3860 = vpack.c.b16 %v3632, %v3628
    %v3861 = vpack.c.b16 %v3633, %v3629
    %v3862 = vpack.c.b16 %v3634, %v3630
    %v3863 = vpack.c.b16 %v3635, %v3631
    %v3864 = vpack.c.b16 %v3640, %v3636
    %v3865 = vpack.c.b16 %v3641, %v3637
    %v3866 = vpack.c.b16 %v3642, %v3638
    %v3867 = vpack.c.b16 %v3643, %v3639
    %v3868 = vpack.c.b16 %v3648, %v3644
    %v3869 = vpack.c.b16 %v3649, %v3645
    %v3870 = vpack.c.b16 %v3650, %v3646
    %v3871 = vpack.c.b16 %v3651, %v3647
    %v3872 = vpack.c.b16 %v3656, %v3652
    %v3873 = vpack.c.b16 %v3657, %v3653
    %v3874 = vpack.c.b16 %v3658, %v3654
    %v3875 = vpack.c.b16 %v3659, %v3655
    %v3876 = vpack.c.b16 %v3664, %v3660
    %v3877 = vpack.c.b16 %v3665, %v3661
    %v3878 = vpack.c.b16 %v3666, %v3662
    %v3879 = vpack.c.b16 %v3667, %v3663
    %v3880 = vpack.c.b16 %v3672, %v3668
    %v3881 = vpack.c.b16 %v3673, %v3669
    %v3882 = vpack.c.b16 %v3674, %v3670
    %v3883 = vpack.c.b16 %v3675, %v3671
    %v3884 = vpack.c.b16 %v3680, %v3676
    %v3885 = vpack.c.b16 %v3681, %v3677
    %v3886 = vpack.c.b16 %v3682, %v3678
    %v3887 = vpack.c.b16 %v3683, %v3679
    %v3888 = vpack.c.b16 %v3688, %v3684
    %v3889 = vpack.c.b16 %v3689, %v3685
    %v3890 = vpack.c.b16 %v3690, %v3686
    %v3891 = vpack.c.b16 %v3691, %v3687
    %v3892 = vpack.c.b16 %v3696, %v3692
    %v3893 = vpack.c.b16 %v3697, %v3693
    %v3894 = vpack.c.b16 %v3698, %v3694
    %v3895 = vpack.c.b16 %v3699, %v3695
    %v3896 = vpack.c.b16 %v3704, %v3700
    %v3897 = vpack.c.b16 %v3705, %v3701
    %v3898 = vpack.c.b16 %v3706, %v3702
    %v3899 = vpack.c.b16 %v3707, %v3703
    %v3900 = vpack.c.b16 %v3712, %v3708
    %v3901 = vpack.c.b16 %v3713, %v3709
    %v3902 = vpack.c.b16 %v3714, %v3710
    %v3903 = vpack.c.b16 %v3715, %v3711
    %v3904 = vpack.c.b16 %v3720, %v3716
    %v3905 = vpack.c.b16 %v3721, %v3717
    %v3906 = vpack.c.b16 %v3722, %v3718
    %v3907 = vpack.c.b16 %v3723, %v3719
    %v3908 = vpack.c.b16 %v3728, %v3724
    %v3909 = vpack.c.b16 %v3729, %v3725
    %v3910 = vpack.c.b16 %v3730, %v3726
    %v3911 = vpack.c.b16 %v3731, %v3727
    %v3912 = vpack.c.b16 %v3736, %v3732
    %v3913 = vpack.c.b16 %v3737, %v3733
    %v3914 = vpack.c.b16 %v3738, %v3734
    %v3915 = vpack.c.b16 %v3739, %v3735
    %v3916 = vpack.c.b16 %v3744, %v3740
    %v3917 = vpack.c.b16 %v3745, %v3741
    %v3918 = vpack.c.b16 %v3746, %v3742
    %v3919 = vpack.c.b16 %v3747, %v3743
    %v3920 = vpack.c.b16 %v3752, %v3748
    %v3921 = vpack.c.b16 %v3753, %v3749
    %v3922 = vpack.c.b16 %v3754, %v3750
    %v3923 = vpack.c.b16 %v3755, %v3751
    %v3924 = vpack.c.b16 %v3760, %v3756
    %v3925 = vpack.c.b16 %v3761, %v3757
    %v3926 = vpack.c.b16 %v3762, %v3758
    %v3927 = vpack.c.b16 %v3763, %v3759
    %v3928 = vpack.c.b16 %v3768, %v3764
    %v3929 = vpack.c.b16 %v3769, %v3765
    %v3930 = vpack.c.b16 %v3770, %v3766
    %v3931 = vpack.c.b16 %v3771, %v3767
    %v3932 = vpack.c.b16 %v3776, %v3772
    %v3933 = vpack.c.b16 %v3777, %v3773
    %v3934 = vpack.c.b16 %v3778, %v3774
    %v3935 = vpack.c.b16 %v3779, %v3775
    %v3936 = vpack.c.b16 %v3784, %v3780
    %v3937 = vpack.c.b16 %v3785, %v3781
    %v3938 = vpack.c.b16 %v3786, %v3782
    %v3939 = vpack.c.b16 %v3787, %v3783
    %v3940 = vpack.c.b16 %v3792, %v3788
    %v3941 = vpack.c.b16 %v3793, %v3789
    %v3942 = vpack.c.b16 %v3794, %v3790
    %v3943 = vpack.c.b16 %v3795, %v3791
    %v3944 = vpack.c.b16 %v3800, %v3796
    %v3945 = vpack.c.b16 %v3801, %v3797
    %v3946 = vpack.c.b16 %v3802, %v3798
    %v3947 = vpack.c.b16 %v3803, %v3799
    %v3948 = vpack.c.b16 %v3808, %v3804
    %v3949 = vpack.c.b16 %v3809, %v3805
    %v3950 = vpack.c.b16 %v3810, %v3806
    %v3951 = vpack.c.b16 %v3811, %v3807
    %v3952 = vpack.c.b16 %v3816, %v3812
    %v3953 = vpack.c.b16 %v3817, %v3813
    %v3954 = vpack.c.b16 %v3818, %v3814
    %v3955 = vpack.c.b16 %v3819, %v3815
    %v3956 = vpack.c.b16 %v3824, %v3820
    %v3957 = vpack.c.b16 %v3825, %v3821
    %v3958 = vpack.c.b16 %v3826, %v3822
    %v3959 = vpack.c.b16 %v3827, %v3823
    %v3960 = vpack.c.b16 %v3832, %v3828
    %v3961 = vpack.c.b16 %v3833, %v3829
    %v3962 = vpack.c.b16 %v3834, %v3830
    %v3963 = vpack.c.b16 %v3835, %v3831
    %4092 = vmatprep.subr.bf16.mxu0 %v3837
    %4093 = vmatpush1.bf16.msra.mxu0 %v3836
    %4094 = vmatprep.subr.bf16.mxu0 %v3841
    %4095 = vmatpush1.bf16.msra.mxu0 %v3840
    %4096 = vmatprep.subr.bf16.mxu0 %v3845
    %4097 = vmatpush1.bf16.msra.mxu0 %v3844
    %4098 = vmatprep.subr.bf16.mxu0 %v3849
    %4099 = vmatpush1.bf16.msra.mxu0 %v3848
    %4100 = vmatprep.subr.bf16.mxu0 %v3853
    %4101 = vmatpush1.bf16.msra.mxu0 %v3852
    %4102 = vmatprep.subr.bf16.mxu0 %v3857
    %4103 = vmatpush1.bf16.msra.mxu0 %v3856
    %4104 = vmatprep.subr.bf16.mxu0 %v3861
    %4105 = vmatpush1.bf16.msra.mxu0 %v3860
    %4106 = vmatprep.subr.bf16.mxu0 %v3865
    %4107 = vmatpush1.bf16.msra.mxu0 %v3864
    %4108 = vmatprep.subr.bf16.mxu0 %v3869
    %4109 = vmatpush1.bf16.msra.mxu0 %v3868
    %4110 = vmatprep.subr.bf16.mxu0 %v3873
    %4111 = vmatpush1.bf16.msra.mxu0 %v3872
    %4112 = vmatprep.subr.bf16.mxu0 %v3877
    %4113 = vmatpush1.bf16.msra.mxu0 %v3876
    %4114 = vmatprep.subr.bf16.mxu0 %v3881
    %4115 = vmatpush1.bf16.msra.mxu0 %v3880
    %4116 = vmatprep.subr.bf16.mxu0 %v3885
    %4117 = vmatpush1.bf16.msra.mxu0 %v3884
    %4118 = vmatprep.subr.bf16.mxu0 %v3889
    %4119 = vmatpush1.bf16.msra.mxu0 %v3888
    %4120 = vmatprep.subr.bf16.mxu0 %v3893
    %4121 = vmatpush1.bf16.msra.mxu0 %v3892
    %4122 = vmatprep.subr.bf16.mxu0 %v3897
    %4123 = vmatpush1.bf16.msra.mxu0 %v3896
    %4124 = vmatprep.mubr.bf16.mxu0 %v3445
    %4125 = vmatmul.mubr.bf16.gmra.mrb[0].mxu0 %v3444
    %v4126 = vpop.f32.mrb[0].mxu0
    %v4127 = vadd.f32 %v3421, %v4126
    %v4128 = vpop.f32.mrb[0].mxu0
    %v4129 = vadd.f32 %v3425, %v4128
    %v4130 = vpop.f32.mrb[0].mxu0
    %v4131 = vpop.f32.mrb[0].mxu0
    %4132 = vdwg.mxu0
    %4133 = vmatprep.subr.bf16.mxu0 %v3901
    %4134 = vmatpush1.bf16.msra.mxu0 %v3900
    %4135 = vmatprep.subr.bf16.mxu0 %v3905
    %4136 = vmatpush1.bf16.msra.mxu0 %v3904
    %4137 = vmatprep.subr.bf16.mxu0 %v3909
    %4138 = vmatpush1.bf16.msra.mxu0 %v3908
    %4139 = vmatprep.subr.bf16.mxu0 %v3913
    %4140 = vmatpush1.bf16.msra.mxu0 %v3912
    %4141 = vmatprep.subr.bf16.mxu0 %v3917
    %4142 = vmatpush1.bf16.msra.mxu0 %v3916
    %4143 = vmatprep.subr.bf16.mxu0 %v3921
    %4144 = vmatpush1.bf16.msra.mxu0 %v3920
    %4145 = vmatprep.subr.bf16.mxu0 %v3925
    %4146 = vmatpush1.bf16.msra.mxu0 %v3924
    %4147 = vmatprep.subr.bf16.mxu0 %v3929
    %4148 = vmatpush1.bf16.msra.mxu0 %v3928
    %4149 = vmatprep.subr.bf16.mxu0 %v3933
    %4150 = vmatpush1.bf16.msra.mxu0 %v3932
    %4151 = vmatprep.subr.bf16.mxu0 %v3937
    %4152 = vmatpush1.bf16.msra.mxu0 %v3936
    %4153 = vmatprep.subr.bf16.mxu0 %v3941
    %4154 = vmatpush1.bf16.msra.mxu0 %v3940
    %4155 = vmatprep.subr.bf16.mxu0 %v3945
    %4156 = vmatpush1.bf16.msra.mxu0 %v3944
    %4157 = vmatprep.subr.bf16.mxu0 %v3949
    %4158 = vmatpush1.bf16.msra.mxu0 %v3948
    %4159 = vmatprep.subr.bf16.mxu0 %v3953
    %4160 = vmatpush1.bf16.msra.mxu0 %v3952
    %4161 = vmatprep.subr.bf16.mxu0 %v3957
    %4162 = vmatpush1.bf16.msra.mxu0 %v3956
    %4163 = vmatprep.subr.bf16.mxu0 %v3961
    %4164 = vmatpush1.bf16.msra.mxu0 %v3960
    %4165 = vmatprep.mubr.bf16.mxu0 %v3447
    %4166 = vmatmul.mubr.bf16.gmra.mrb[0].mxu0 %v3446
    %v4167 = vpop.f32.mrb[0].mxu0
    %v4168 = vadd.f32 %v4127, %v4167
    %v4169 = vpop.f32.mrb[0].mxu0
    %v4170 = vadd.f32 %v4129, %v4169
    %v4171 = vpop.f32.mrb[0].mxu0
    %v4172 = vpop.f32.mrb[0].mxu0
    %4173 = vdwg.mxu0
    %4174 = vmatprep.subr.bf16.mxu0 %v3839
    %4175 = vmatpush1.bf16.msra.mxu0 %v3838
    %4176 = vmatprep.subr.bf16.mxu0 %v3843
    %4177 = vmatpush1.bf16.msra.mxu0 %v3842
    %4178 = vmatprep.subr.bf16.mxu0 %v3847
    %4179 = vmatpush1.bf16.msra.mxu0 %v3846
    %4180 = vmatprep.subr.bf16.mxu0 %v3851
    %4181 = vmatpush1.bf16.msra.mxu0 %v3850
    %4182 = vmatprep.subr.bf16.mxu0 %v3855
    %4183 = vmatpush1.bf16.msra.mxu0 %v3854
    %4184 = vmatprep.subr.bf16.mxu0 %v3859
    %4185 = vmatpush1.bf16.msra.mxu0 %v3858
    %4186 = vmatprep.subr.bf16.mxu0 %v3863
    %4187 = vmatpush1.bf16.msra.mxu0 %v3862
    %4188 = vmatprep.subr.bf16.mxu0 %v3867
    %4189 = vmatpush1.bf16.msra.mxu0 %v3866
    %4190 = vmatprep.subr.bf16.mxu0 %v3871
    %4191 = vmatpush1.bf16.msra.mxu0 %v3870
    %4192 = vmatprep.subr.bf16.mxu0 %v3875
    %4193 = vmatpush1.bf16.msra.mxu0 %v3874
    %4194 = vmatprep.subr.bf16.mxu0 %v3879
    %4195 = vmatpush1.bf16.msra.mxu0 %v3878
    %4196 = vmatprep.subr.bf16.mxu0 %v3883
    %4197 = vmatpush1.bf16.msra.mxu0 %v3882
    %4198 = vmatprep.subr.bf16.mxu0 %v3887
    %4199 = vmatpush1.bf16.msra.mxu0 %v3886
    %4200 = vmatprep.subr.bf16.mxu0 %v3891
    %4201 = vmatpush1.bf16.msra.mxu0 %v3890
    %4202 = vmatprep.subr.bf16.mxu0 %v3895
    %4203 = vmatpush1.bf16.msra.mxu0 %v3894
    %4204 = vmatprep.subr.bf16.mxu0 %v3899
    %4205 = vmatpush1.bf16.msra.mxu0 %v3898
    %4206 = vmatprep.mubr.bf16.mxu0 %v3445
    %4207 = vmatmul.mubr.bf16.gmra.mrb[0].mxu0 %v3444
    %v4208 = vpop.f32.mrb[0].mxu0
    %v4209 = vadd.f32 %v3429, %v4208
    %v4210 = vpop.f32.mrb[0].mxu0
    %v4211 = vadd.f32 %v3433, %v4210
    %v4212 = vpop.f32.mrb[0].mxu0
    %v4213 = vpop.f32.mrb[0].mxu0
    %4214 = vdwg.mxu0
    %4215 = vmatprep.subr.bf16.mxu0 %v3903
    %4216 = vmatpush1.bf16.msra.mxu0 %v3902
    %4217 = vmatprep.subr.bf16.mxu0 %v3907
    %4218 = vmatpush1.bf16.msra.mxu0 %v3906
    %4219 = vmatprep.subr.bf16.mxu0 %v3911
    %4220 = vmatpush1.bf16.msra.mxu0 %v3910
    %4221 = vmatprep.subr.bf16.mxu0 %v3915
    %4222 = vmatpush1.bf16.msra.mxu0 %v3914
    %4223 = vmatprep.subr.bf16.mxu0 %v3919
    %4224 = vmatpush1.bf16.msra.mxu0 %v3918
    %4225 = vmatprep.subr.bf16.mxu0 %v3923
    %4226 = vmatpush1.bf16.msra.mxu0 %v3922
    %4227 = vmatprep.subr.bf16.mxu0 %v3927
    %4228 = vmatpush1.bf16.msra.mxu0 %v3926
    %4229 = vmatprep.subr.bf16.mxu0 %v3931
    %4230 = vmatpush1.bf16.msra.mxu0 %v3930
    %4231 = vmatprep.subr.bf16.mxu0 %v3935
    %4232 = vmatpush1.bf16.msra.mxu0 %v3934
    %4233 = vmatprep.subr.bf16.mxu0 %v3939
    %4234 = vmatpush1.bf16.msra.mxu0 %v3938
    %4235 = vmatprep.subr.bf16.mxu0 %v3943
    %4236 = vmatpush1.bf16.msra.mxu0 %v3942
    %4237 = vmatprep.subr.bf16.mxu0 %v3947
    %4238 = vmatpush1.bf16.msra.mxu0 %v3946
    %4239 = vmatprep.subr.bf16.mxu0 %v3951
    %4240 = vmatpush1.bf16.msra.mxu0 %v3950
    %4241 = vmatprep.subr.bf16.mxu0 %v3955
    %4242 = vmatpush1.bf16.msra.mxu0 %v3954
    %4243 = vmatprep.subr.bf16.mxu0 %v3959
    %4244 = vmatpush1.bf16.msra.mxu0 %v3958
    %4245 = vmatprep.subr.bf16.mxu0 %v3963
    %4246 = vmatpush1.bf16.msra.mxu0 %v3962
    %4247 = vmatprep.mubr.bf16.mxu0 %v3447
    %4248 = vmatmul.mubr.bf16.gmra.mrb[0].mxu0 %v3446
    %v4249 = vpop.f32.mrb[0].mxu0
    %v4250 = vadd.f32 %v4209, %v4249
    %v4251 = vpop.f32.mrb[0].mxu0
    %v4252 = vadd.f32 %v4211, %v4251
    %v4253 = vpop.f32.mrb[0].mxu0
    %v4254 = vpop.f32.mrb[0].mxu0
    %4255 = vdwg.mxu0
    %v4256 = vmul.f32 %v4168, 0.01
    %v4257 = vmul.f32 %v4170, 0.01
    %v4258 = vmul.f32 %v4250, 0.01
    %v4259 = vmul.f32 %v4252, 0.01
    %v4260 = vmax.f32 %v4168, %v4256
    %v4261 = vmax.f32 %v4170, %v4257
    %v4262 = vmax.f32 %v4250, %v4258
    %v4263 = vmax.f32 %v4252, %v4259
    %v4264 = vpack.c.bf16 %v4260, %v4260
    %v4265 = vpack.c.bf16 %v4261, %v4261
    %v4266 = vpack.c.bf16 %v4262, %v4262
    %v4267 = vpack.c.bf16 %v4263, %v4263
    %v4272 = vunpack.c.l.b16 %v4264
    %v4273 = vunpack.c.l.b16 %v4265
    %v4274 = vunpack.c.l.b16 %v4266
    %v4275 = vunpack.c.l.b16 %v4267
    %v4276 = vpack.c.b16 %v4273, %v4272
    %v4277 = vpack.c.b16 %v4275, %v4274
    %4280 = vst [vmem:[#allocation2] sm:$0xff] %v4276
    %4281 = vst [vmem:[#allocation2 + $0x8] sm:$0xff] %v4277
    %v4282 = vld [vmem:[#allocation2] sm:$0xff]
    %v4283 = vld [vmem:[#allocation2 + $0x8] sm:$0xff]
    %v4284 = vld [vmem:[#allocation14] sm:$0xf]
    %v4285 = vld [vmem:[#allocation14 + $0x4] sm:$0xf]
    %v4286 = vld [vmem:[#allocation14 + $0x8] sm:$0xf]
    %v4287 = vld [vmem:[#allocation14 + $0xc] sm:$0xf]
    %v4288 = vld [vmem:[#allocation14 + $0x10] sm:$0xf]
    %v4289 = vld [vmem:[#allocation14 + $0x14] sm:$0xf]
    %v4290 = vld [vmem:[#allocation14 + $0x18] sm:$0xf]
    %v4291 = vld [vmem:[#allocation14 + $0x1c] sm:$0xf]
    %v4292 = vld [vmem:[#allocation14 + $0x20] sm:$0xf]
    %v4293 = vld [vmem:[#allocation14 + $0x24] sm:$0xf]
    %v4294 = vld [vmem:[#allocation14 + $0x28] sm:$0xf]
    %v4295 = vld [vmem:[#allocation14 + $0x2c] sm:$0xf]
    %v4296 = vld [vmem:[#allocation14 + $0x30] sm:$0xf]
    %v4297 = vld [vmem:[#allocation14 + $0x34] sm:$0xf]
    %v4298 = vld [vmem:[#allocation14 + $0x38] sm:$0xf]
    %v4299 = vld [vmem:[#allocation14 + $0x3c] sm:$0xf]
    %v4300 = vld [vmem:[#allocation14 + $0x40] sm:$0xf]
    %v4301 = vld [vmem:[#allocation14 + $0x44] sm:$0xf]
    %v4302 = vld [vmem:[#allocation14 + $0x48] sm:$0xf]
    %v4303 = vld [vmem:[#allocation14 + $0x4c] sm:$0xf]
    %v4304 = vld [vmem:[#allocation14 + $0x50] sm:$0xf]
    %v4305 = vld [vmem:[#allocation14 + $0x54] sm:$0xf]
    %v4306 = vld [vmem:[#allocation14 + $0x58] sm:$0xf]
    %v4307 = vld [vmem:[#allocation14 + $0x5c] sm:$0xf]
    %v4308 = vld [vmem:[#allocation14 + $0x60] sm:$0xf]
    %v4309 = vld [vmem:[#allocation14 + $0x64] sm:$0xf]
    %v4310 = vld [vmem:[#allocation14 + $0x68] sm:$0xf]
    %v4311 = vld [vmem:[#allocation14 + $0x6c] sm:$0xf]
    %v4312 = vld [vmem:[#allocation14 + $0x70] sm:$0xf]
    %v4313 = vld [vmem:[#allocation14 + $0x74] sm:$0xf]
    %v4314 = vld [vmem:[#allocation14 + $0x78] sm:$0xf]
    %v4315 = vld [vmem:[#allocation14 + $0x7c] sm:$0xf]
    %v4316 = vld [vmem:[#allocation14 + $0x80] sm:$0xf]
    %v4317 = vld [vmem:[#allocation14 + $0x84] sm:$0xf]
    %v4318 = vld [vmem:[#allocation14 + $0x88] sm:$0xf]
    %v4319 = vld [vmem:[#allocation14 + $0x8c] sm:$0xf]
    %v4320 = vld [vmem:[#allocation14 + $0x90] sm:$0xf]
    %v4321 = vld [vmem:[#allocation14 + $0x94] sm:$0xf]
    %v4322 = vld [vmem:[#allocation14 + $0x98] sm:$0xf]
    %v4323 = vld [vmem:[#allocation14 + $0x9c] sm:$0xf]
    %v4324 = vld [vmem:[#allocation14 + $0xa0] sm:$0xf]
    %v4325 = vld [vmem:[#allocation14 + $0xa4] sm:$0xf]
    %v4326 = vld [vmem:[#allocation14 + $0xa8] sm:$0xf]
    %v4327 = vld [vmem:[#allocation14 + $0xac] sm:$0xf]
    %v4328 = vld [vmem:[#allocation14 + $0xb0] sm:$0xf]
    %v4329 = vld [vmem:[#allocation14 + $0xb4] sm:$0xf]
    %v4330 = vld [vmem:[#allocation14 + $0xb8] sm:$0xf]
    %v4331 = vld [vmem:[#allocation14 + $0xbc] sm:$0xf]
    %v4332 = vld [vmem:[#allocation14 + $0xc0] sm:$0xf]
    %v4333 = vld [vmem:[#allocation14 + $0xc4] sm:$0xf]
    %v4334 = vld [vmem:[#allocation14 + $0xc8] sm:$0xf]
    %v4335 = vld [vmem:[#allocation14 + $0xcc] sm:$0xf]
    %v4336 = vld [vmem:[#allocation14 + $0xd0] sm:$0xf]
    %v4337 = vld [vmem:[#allocation14 + $0xd4] sm:$0xf]
    %v4338 = vld [vmem:[#allocation14 + $0xd8] sm:$0xf]
    %v4339 = vld [vmem:[#allocation14 + $0xdc] sm:$0xf]
    %v4340 = vld [vmem:[#allocation14 + $0xe0] sm:$0xf]
    %v4341 = vld [vmem:[#allocation14 + $0xe4] sm:$0xf]
    %v4342 = vld [vmem:[#allocation14 + $0xe8] sm:$0xf]
    %v4343 = vld [vmem:[#allocation14 + $0xec] sm:$0xf]
    %v4344 = vld [vmem:[#allocation14 + $0xf0] sm:$0xf]
    %v4345 = vld [vmem:[#allocation14 + $0xf4] sm:$0xf]
    %v4346 = vld [vmem:[#allocation14 + $0xf8] sm:$0xf]
    %v4347 = vld [vmem:[#allocation14 + $0xfc] sm:$0xf]
    %v4348 = vld [vmem:[%s12] sm:$0x1]
    %v4350 = vlaneseq
    %v4351 = vshrl.u32 %v4350, 7
    %v4352 = vsub.s32 0, %v4351
    %v4353 = vrot.slane %v4348, %v4352
    %v4357 = vunpack.c.l.b16 %v4282
    %v4358 = vunpack.c.h.b16 %v4282
    %v4359 = vunpack.c.l.b16 %v4283
    %v4360 = vunpack.c.h.b16 %v4283
    %v4361 = vpack.c.b16 %v4357, %v4357
    %v4362 = vpack.c.b16 %v4358, %v4358
    %v4363 = vpack.c.b16 %v4359, %v4359
    %v4364 = vpack.c.b16 %v4360, %v4360
    %v4433 = vunpack.c.l.b16 %v4284
    %v4434 = vunpack.c.l.b16 %v4285
    %v4435 = vunpack.c.l.b16 %v4286
    %v4436 = vunpack.c.l.b16 %v4287
    %v4437 = vunpack.c.l.b16 %v4288
    %v4438 = vunpack.c.l.b16 %v4289
    %v4439 = vunpack.c.l.b16 %v4290
    %v4440 = vunpack.c.l.b16 %v4291
    %v4441 = vunpack.c.l.b16 %v4292
    %v4442 = vunpack.c.l.b16 %v4293
    %v4443 = vunpack.c.l.b16 %v4294
    %v4444 = vunpack.c.l.b16 %v4295
    %v4445 = vunpack.c.l.b16 %v4296
    %v4446 = vunpack.c.l.b16 %v4297
    %v4447 = vunpack.c.l.b16 %v4298
    %v4448 = vunpack.c.l.b16 %v4299
    %v4449 = vunpack.c.l.b16 %v4300
    %v4450 = vunpack.c.l.b16 %v4301
    %v4451 = vunpack.c.l.b16 %v4302
    %v4452 = vunpack.c.l.b16 %v4303
    %v4453 = vunpack.c.l.b16 %v4304
    %v4454 = vunpack.c.l.b16 %v4305
    %v4455 = vunpack.c.l.b16 %v4306
    %v4456 = vunpack.c.l.b16 %v4307
    %v4457 = vunpack.c.l.b16 %v4308
    %v4458 = vunpack.c.l.b16 %v4309
    %v4459 = vunpack.c.l.b16 %v4310
    %v4460 = vunpack.c.l.b16 %v4311
    %v4461 = vunpack.c.l.b16 %v4312
    %v4462 = vunpack.c.l.b16 %v4313
    %v4463 = vunpack.c.l.b16 %v4314
    %v4464 = vunpack.c.l.b16 %v4315
    %v4465 = vunpack.c.l.b16 %v4316
    %v4466 = vunpack.c.l.b16 %v4317
    %v4467 = vunpack.c.l.b16 %v4318
    %v4468 = vunpack.c.l.b16 %v4319
    %v4469 = vunpack.c.l.b16 %v4320
    %v4470 = vunpack.c.l.b16 %v4321
    %v4471 = vunpack.c.l.b16 %v4322
    %v4472 = vunpack.c.l.b16 %v4323
    %v4473 = vunpack.c.l.b16 %v4324
    %v4474 = vunpack.c.l.b16 %v4325
    %v4475 = vunpack.c.l.b16 %v4326
    %v4476 = vunpack.c.l.b16 %v4327
    %v4477 = vunpack.c.l.b16 %v4328
    %v4478 = vunpack.c.l.b16 %v4329
    %v4479 = vunpack.c.l.b16 %v4330
    %v4480 = vunpack.c.l.b16 %v4331
    %v4481 = vunpack.c.l.b16 %v4332
    %v4482 = vunpack.c.l.b16 %v4333
    %v4483 = vunpack.c.l.b16 %v4334
    %v4484 = vunpack.c.l.b16 %v4335
    %v4485 = vunpack.c.l.b16 %v4336
    %v4486 = vunpack.c.l.b16 %v4337
    %v4487 = vunpack.c.l.b16 %v4338
    %v4488 = vunpack.c.l.b16 %v4339
    %v4489 = vunpack.c.l.b16 %v4340
    %v4490 = vunpack.c.l.b16 %v4341
    %v4491 = vunpack.c.l.b16 %v4342
    %v4492 = vunpack.c.l.b16 %v4343
    %v4493 = vunpack.c.l.b16 %v4344
    %v4494 = vunpack.c.l.b16 %v4345
    %v4495 = vunpack.c.l.b16 %v4346
    %v4496 = vunpack.c.l.b16 %v4347
    %v4497 = vpack.c.b16 %v4434, %v4433
    %v4498 = vpack.c.b16 %v4436, %v4435
    %v4499 = vpack.c.b16 %v4438, %v4437
    %v4500 = vpack.c.b16 %v4440, %v4439
    %v4501 = vpack.c.b16 %v4442, %v4441
    %v4502 = vpack.c.b16 %v4444, %v4443
    %v4503 = vpack.c.b16 %v4446, %v4445
    %v4504 = vpack.c.b16 %v4448, %v4447
    %v4505 = vpack.c.b16 %v4450, %v4449
    %v4506 = vpack.c.b16 %v4452, %v4451
    %v4507 = vpack.c.b16 %v4454, %v4453
    %v4508 = vpack.c.b16 %v4456, %v4455
    %v4509 = vpack.c.b16 %v4458, %v4457
    %v4510 = vpack.c.b16 %v4460, %v4459
    %v4511 = vpack.c.b16 %v4462, %v4461
    %v4512 = vpack.c.b16 %v4464, %v4463
    %v4513 = vpack.c.b16 %v4466, %v4465
    %v4514 = vpack.c.b16 %v4468, %v4467
    %v4515 = vpack.c.b16 %v4470, %v4469
    %v4516 = vpack.c.b16 %v4472, %v4471
    %v4517 = vpack.c.b16 %v4474, %v4473
    %v4518 = vpack.c.b16 %v4476, %v4475
    %v4519 = vpack.c.b16 %v4478, %v4477
    %v4520 = vpack.c.b16 %v4480, %v4479
    %v4521 = vpack.c.b16 %v4482, %v4481
    %v4522 = vpack.c.b16 %v4484, %v4483
    %v4523 = vpack.c.b16 %v4486, %v4485
    %v4524 = vpack.c.b16 %v4488, %v4487
    %v4525 = vpack.c.b16 %v4490, %v4489
    %v4526 = vpack.c.b16 %v4492, %v4491
    %v4527 = vpack.c.b16 %v4494, %v4493
    %v4528 = vpack.c.b16 %v4496, %v4495
    %4561 = vmatprep.subr.bf16.mxu0 0
    %4562 = vmatpush1.bf16.msra.mxu0 %v4497
    %4563 = vmatprep.subr.bf16.mxu0 0
    %4564 = vmatpush1.bf16.msra.mxu0 %v4498
    %4565 = vmatprep.subr.bf16.mxu0 0
    %4566 = vmatpush1.bf16.msra.mxu0 %v4499
    %4567 = vmatprep.subr.bf16.mxu0 0
    %4568 = vmatpush1.bf16.msra.mxu0 %v4500
    %4569 = vmatprep.subr.bf16.mxu0 0
    %4570 = vmatpush1.bf16.msra.mxu0 %v4501
    %4571 = vmatprep.subr.bf16.mxu0 0
    %4572 = vmatpush1.bf16.msra.mxu0 %v4502
    %4573 = vmatprep.subr.bf16.mxu0 0
    %4574 = vmatpush1.bf16.msra.mxu0 %v4503
    %4575 = vmatprep.subr.bf16.mxu0 0
    %4576 = vmatpush1.bf16.msra.mxu0 %v4504
    %4577 = vmatprep.subr.bf16.mxu0 0
    %4578 = vmatpush1.bf16.msra.mxu0 %v4505
    %4579 = vmatprep.subr.bf16.mxu0 0
    %4580 = vmatpush1.bf16.msra.mxu0 %v4506
    %4581 = vmatprep.subr.bf16.mxu0 0
    %4582 = vmatpush1.bf16.msra.mxu0 %v4507
    %4583 = vmatprep.subr.bf16.mxu0 0
    %4584 = vmatpush1.bf16.msra.mxu0 %v4508
    %4585 = vmatprep.subr.bf16.mxu0 0
    %4586 = vmatpush1.bf16.msra.mxu0 %v4509
    %4587 = vmatprep.subr.bf16.mxu0 0
    %4588 = vmatpush1.bf16.msra.mxu0 %v4510
    %4589 = vmatprep.subr.bf16.mxu0 0
    %4590 = vmatpush1.bf16.msra.mxu0 %v4511
    %4591 = vmatprep.subr.bf16.mxu0 0
    %4592 = vmatpush1.bf16.msra.mxu0 %v4512
    %4593 = vmatprep.mubr.bf16.mxu0 %v4362
    %4594 = vmatmul.mubr.bf16.gmra.mrb[0].mxu0 %v4361
    %v4595 = vpop.f32.mrb[0].mxu0
    %v4596 = vadd.f32 %v4353, %v4595
    %v4597 = vpop.f32.mrb[0].mxu0
    %v4598 = vpop.f32.mrb[0].mxu0
    %v4599 = vpop.f32.mrb[0].mxu0
    %4600 = vdwg.mxu0
    %4601 = vmatprep.subr.bf16.mxu0 0
    %4602 = vmatpush1.bf16.msra.mxu0 %v4513
    %4603 = vmatprep.subr.bf16.mxu0 0
    %4604 = vmatpush1.bf16.msra.mxu0 %v4514
    %4605 = vmatprep.subr.bf16.mxu0 0
    %4606 = vmatpush1.bf16.msra.mxu0 %v4515
    %4607 = vmatprep.subr.bf16.mxu0 0
    %4608 = vmatpush1.bf16.msra.mxu0 %v4516
    %4609 = vmatprep.subr.bf16.mxu0 0
    %4610 = vmatpush1.bf16.msra.mxu0 %v4517
    %4611 = vmatprep.subr.bf16.mxu0 0
    %4612 = vmatpush1.bf16.msra.mxu0 %v4518
    %4613 = vmatprep.subr.bf16.mxu0 0
    %4614 = vmatpush1.bf16.msra.mxu0 %v4519
    %4615 = vmatprep.subr.bf16.mxu0 0
    %4616 = vmatpush1.bf16.msra.mxu0 %v4520
    %4617 = vmatprep.subr.bf16.mxu0 0
    %4618 = vmatpush1.bf16.msra.mxu0 %v4521
    %4619 = vmatprep.subr.bf16.mxu0 0
    %4620 = vmatpush1.bf16.msra.mxu0 %v4522
    %4621 = vmatprep.subr.bf16.mxu0 0
    %4622 = vmatpush1.bf16.msra.mxu0 %v4523
    %4623 = vmatprep.subr.bf16.mxu0 0
    %4624 = vmatpush1.bf16.msra.mxu0 %v4524
    %4625 = vmatprep.subr.bf16.mxu0 0
    %4626 = vmatpush1.bf16.msra.mxu0 %v4525
    %4627 = vmatprep.subr.bf16.mxu0 0
    %4628 = vmatpush1.bf16.msra.mxu0 %v4526
    %4629 = vmatprep.subr.bf16.mxu0 0
    %4630 = vmatpush1.bf16.msra.mxu0 %v4527
    %4631 = vmatprep.subr.bf16.mxu0 0
    %4632 = vmatpush1.bf16.msra.mxu0 %v4528
    %4633 = vmatprep.mubr.bf16.mxu0 %v4364
    %4634 = vmatmul.mubr.bf16.gmra.mrb[0].mxu0 %v4363
    %v4635 = vpop.f32.mrb[0].mxu0
    %v4636 = vadd.f32 %v4596, %v4635
    %v4637 = vpop.f32.mrb[0].mxu0
    %v4638 = vpop.f32.mrb[0].mxu0
    %v4639 = vpop.f32.mrb[0].mxu0
    %4640 = vdwg.mxu0
    %v4641 = vlaneseq
    %v4642 = vand.u32 %v4641, 127
    %vm4643 = vcmp.lt.s32.totalorder %v4642, 3
    %v4644 = vmul.f32 %v4636, 1.442695
    %v4645 = vpow.pop %v4644
    %v4646 = vsel %vm4643, %v4645, %v4636
    %4647 = vst [vmem:[#allocation15] sm:$0xff] %v4646
    // Predicated region
    $region82: #{tpu_custom_call.1} parent=1 // pred_check
      _
    $region83: #{tpu_custom_call.1} parent=1 // pred_check_branch
      %4649 = sbr.rel (0) target = $region85
    $region84: #{tpu_custom_call.1} parent=1 // pred_region
      %s4651 = ssub.s32 128, 128
      %4652 = vsyncadd [#allocation5], %s4651
      %s4654 = sshll.u32 [#allocation15], 4
      %s4655 = int_to_ptr.vmem [resolvable:$true] %s4654
      %4657 = dma.vmem_to_hbm [thread:$0]  %s4655, 128, %s13, [#allocation5]
    $region85: #{tpu_custom_call.1} parent=1 // pred_fallthru
      _
    // Predicated region
    $region86: #{tpu_custom_call.1} parent=1 // pred_check
      _
    $region87: #{tpu_custom_call.1} parent=1 // pred_check_branch
      %4659 = sbr.rel (0) target = $region89
    $region88: #{tpu_custom_call.1} parent=1 // pred_region
      %4660 = dma.done [#allocation5], 128
    $region89: #{tpu_custom_call.1} parent=1 // pred_fallthru
      _
    %4661 = vsyncpa [#allocation4], 1
    %4662 = vsyncpa [#allocation7], 1
    %4663 = vsyncpa [#allocation10], 1
    %4664 = vsyncpa [#allocation13], 1
    %4665 = vsyncpa [#allocation5], 1

</llo_original>
